<compile_context>
chip_gen: v6e
topology: v6e:2x2x1
jax: 0.10.0
libtpu: 0.0.40
codegen_flags: <defaults>
</compile_context>

<pallas_src>
import jax
import jax.numpy as jnp
from jax.experimental import pallas as pl
from jax.experimental.pallas import tpu as pltpu


# ------------------------------- fused kernel ------------------------------ #
def _fused_kernel(x_ref, s0_ref, t0_ref,
                  w1_ref, b1_ref,
                  w2_ref, b2_ref,
                  wf1_ref, bf1_ref,
                  wf2_ref, bf2_ref,
                  bng_ref, bnb_ref,
                  wh1_ref, bh1_ref, wh2_ref, bh2_ref,
                  out_ref):
    f32, bf16 = jnp.float32, jnp.bfloat16
    L, B, _ = x_ref.shape
    C = 128
    K1 = w1_ref.shape[0]              # 7
    K2 = w2_ref.shape[0]              # 5
    H1, H2 = K1 // 2, K2 // 2         # halos: 3, 2
    L2, L4 = L // 2, L // 4
    R, R2 = L * B, L2 * B
    eps = 1e-5

    # ---- norm0 (batch stats precomputed in wrapper, folded) + relu0 --------
    h0 = jnp.maximum(x_ref[...] * s0_ref[...] + t0_ref[...], 0.0)   # (L, B, 1)

    # broadcast the single input channel across the 128 conv lanes
    h0 = jnp.broadcast_to(h0, (L, B, C)).reshape(R, C)    # rows ordered (l, b)

    # ---- conv1: Conv1d(1,128,k=7,pad=3) + relu1 (VPU, tile-aligned taps) ---
    # Only halo rows are zeroed; every tap slice starts at k*B (multiple of 8),
    # so no relayout copies.  (At much larger B*L this loop would move to the
    # MXU / a fori_loop accumulator.)
    halo1 = jnp.zeros((H1 * B, C), f32)
    hp = jnp.concatenate([halo1, h0, halo1], axis=0)      # ((L+6)*B, 128)
    w1 = w1_ref[...]                                      # (7, 128) f32
    acc1 = hp[0:R, :] * w1[0:1, :]
    for k in range(1, K1):                                # static unroll
        acc1 = acc1 + hp[k * B:k * B + R, :] * w1[k:k + 1, :]
    a1 = jnp.maximum(acc1 + b1_ref[...], 0.0)             # (L*B, 128)

    # ---- pool1: MaxPool1d(2,2) fused in-register ---------------------------
    a1 = a1.reshape(L2, 2 * B, C)
    p1 = jnp.maximum(a1[:, :B, :], a1[:, B:, :]).reshape(R2, C)

    # ---- conv2: Conv1d(128,128,k=5,pad=2) + relu2 (5 MXU matmuls) ----------
    halo2 = jnp.zeros((H2 * B, C), f32)
    pp = jnp.concatenate([halo2, p1, halo2], axis=0)      # ((L2+4)*B, 128)
    acc2 = jnp.dot(pp[0:R2, :].astype(bf16), w2_ref[0],
                   preferred_element_type=f32)
    for k in range(1, K2):                                # static unroll
        acc2 = acc2 + jnp.dot(pp[k * B:k * B + R2, :].astype(bf16), w2_ref[k],
                              preferred_element_type=f32)
    a2 = jnp.maximum(acc2 + b2_ref[...], 0.0)             # (L2*B, 128)

    # ---- pool2 fused in-register -------------------------------------------
    a2 = a2.reshape(L4, 2 * B, C)
    p2 = jnp.maximum(a2[:, :B, :], a2[:, B:, :])          # (L4, B, 128)

    # ---- Flatten (torch channel-major) + fc1 + relu3 -----------------------
    # Flatten order folded into wf1's permutation at init; each p2[j] is a
    # contiguous, tile-aligned (B, 128) operand (no strided gathers).
    accf = jnp.dot(p2[0].astype(bf16), wf1_ref[0], preferred_element_type=f32)
    for j in range(1, L4):
        accf = accf + jnp.dot(p2[j].astype(bf16), wf1_ref[j],
                              preferred_element_type=f32)
    f1 = jnp.maximum(accf + bf1_ref[...], 0.0)            # (B, 256)

    # ---- fc2 (128-padded lanes) + final BatchNorm (batch stats) ------------
    f2 = jnp.dot(f1.astype(bf16), wf2_ref[...],
                 preferred_element_type=f32) + bf2_ref[...]       # (B, 128)
    mu = jnp.mean(f2, axis=0, keepdims=True)
    var = jnp.mean(jnp.square(f2 - mu), axis=0, keepdims=True)    # biased var
    feats = (f2 - mu) * jax.lax.rsqrt(var + eps) * bng_ref[...] + bnb_ref[...]

    # ---- head: Linear -> ReLU -> Linear (lane-dense (B, 128) store) --------
    h1 = jnp.maximum(jnp.dot(feats.astype(bf16), wh1_ref[...],
                             preferred_element_type=f32) + bh1_ref[...], 0.0)
    out = jnp.dot(h1.astype(bf16), wh2_ref[...],
                  preferred_element_type=f32) + bh2_ref[...]
    out_ref[...] = out.astype(out_ref.dtype)


# ------------------------------- host wrapper ------------------------------ #
def _full_spec(shape):
    zero = (0,) * len(shape)
    return pl.BlockSpec(shape, lambda i, _z=zero: _z)


def _fused_forward_impl(x, p, wh1, bh1, wh2, bh2):
    B, L = x.shape
    assert B % 8 == 0, "batch must be a multiple of 8 (sublane tile alignment)"
    assert L % 4 == 0, "input_size must be divisible by 4 (two MaxPool(2,2))"
    eps = 1e-5

    # bn0 batch statistics: computed lane-dense on (B, L) here (per review) and
    # folded with gamma/beta into one per-position scale/shift.
    mu = jnp.mean(x, axis=0)
    var = jnp.mean(jnp.square(x - mu[None, :]), axis=0)     # biased variance
    rstd = jax.lax.rsqrt(var + eps)
    s0 = (p['bn0_g'] * rstd).reshape(L, 1, 1)
    t0 = (p['bn0_b'] - p['bn0_g'] * mu * rstd).reshape(L, 1, 1)
    x_t = x.T.reshape(L, B, 1)       # position-major rows for the conv stages

    args = (x_t, s0, t0,
            p['conv1_w'], p['conv1_b'],
            p['conv2_w'], p['conv2_b'],
            p['fc1_w'], p['fc1_b'],
            p['fc2_w'], p['fc2_b'],
            p['bn_g'], p['bn_b'],
            wh1, bh1, wh2, bh2)

    # Scoped-VMEM budget sized to actual usage with headroom; kept well below
    # v7x's 64 MiB physical VMEM.
    act_bytes = (L + 6) * B * 128 * 4
    param_bytes = sum(int(a.size) * a.dtype.itemsize for a in args)
    vmem_limit = int(min(48 * 1024 * 1024,
                         max(16 * 1024 * 1024,
                             16 * act_bytes + 4 * param_bytes + (8 << 20))))

    return pl.pallas_call(
        _fused_kernel,
        out_shape=jax.ShapeDtypeStruct((B, 128), jnp.float32),
        grid=(1,),
        in_specs=[_full_spec(a.shape) for a in args],
        out_specs=_full_spec((B, 128)),
        compiler_params=pltpu.CompilerParams(
            dimension_semantics=("arbitrary",),
            vmem_limit_bytes=vmem_limit),
    )(*args)


_fused_forward = jax.jit(_fused_forward_impl)


def cl_model_forward(x, p, mode='supervised'):
    d = p['dims']
    weights = {k: v for k, v in p.items() if k != 'dims'}
    if mode == 'supervised':
        out = _fused_forward(x, weights, p['cls1_w'], p['cls1_b'],
                             p['cls2_w'], p['cls2_b'])
        return out[:, :d['num_classes']]
    elif mode == 'self_supervised':
        out = _fused_forward(x, weights, p['proj1_w'], p['proj1_b'],
                             p['proj2_w'], p['proj2_b'])
        return out[:, :d['proj_size']]
    else:
        raise ValueError('Invalid mode: {}'.format(mode))


# -------------------------------- parameters ------------------------------- #
def _pad_cols(a, n):
    return jnp.pad(a, ((0, 0), (0, n - a.shape[1])))


def _pad_2d(a, r, c):
    return jnp.pad(a, ((0, r - a.shape[0]), (0, c - a.shape[1])))


def init_params(key, input_size, hidden_size, proj_size, num_classes):
    L = input_size
    assert L % 4 == 0, "input_size must be divisible by 4 (two MaxPool(2,2))"
    L4 = L // 4
    H = hidden_size
    assert H % 2 == 0 and H <= 128 and proj_size <= 128 and num_classes <= 128
    keys = jax.random.split(key, 16)

    def unif(k, shape, fan_in):
        bound = 1.0 / float(fan_in) ** 0.5
        return jax.random.uniform(k, shape, jnp.float32, -bound, bound)

    p = {}
    # Encoder: BatchNorm1d(input_size)
    p['bn0_g'] = jnp.ones((L,), jnp.float32)
    p['bn0_b'] = jnp.zeros((L,), jnp.float32)
    # conv1: w[k, cout] = torch_w[cout, 0, k]  (VPU taps, f32 - v5e safe)
    p['conv1_w'] = unif(keys[0], (7, 128), 7 * 1)
    p['conv1_b'] = unif(keys[1], (1, 128), 7 * 1)
    # conv2: w[k, cin, cout] = torch_w[cout, cin, k]  (bf16 for the MXU)
    p['conv2_w'] = unif(keys[2], (5, 128, 128), 5 * 128).astype(jnp.bfloat16)
    p['conv2_b'] = unif(keys[3], (1, 128), 5 * 128)
    # fc1: torch row order is channel-major (row = c*L4 + j); permute ONCE to
    # the kernel's position-major (j, c) operand order.
    fc1_t = unif(keys[4], (128 * L4, 256), 128 * L4)
    p['fc1_w'] = (fc1_t.reshape(128, L4, 256)
                       .transpose(1, 0, 2)                 # (L4, 128, 256)
                       .astype(jnp.bfloat16))
    p['fc1_b'] = unif(keys[5], (1, 256), 128 * L4)
    # fc2: Linear(256, H), zero-padded to 128 output lanes
    p['fc2_w'] = _pad_cols(unif(keys[6], (256, H), 256), 128).astype(jnp.bfloat16)
    p['fc2_b'] = _pad_cols(unif(keys[7], (1, H), 256), 128)
    # final BatchNorm1d(H): exact-zero padding keeps padded lanes at 0
    p['bn_g'] = _pad_cols(jnp.ones((1, H), jnp.float32), 128)
    p['bn_b'] = jnp.zeros((1, 128), jnp.float32)
    # ProjectionHead: Linear(H, H) -> ReLU -> Linear(H, proj_size), 128-padded
    p['proj1_w'] = _pad_2d(unif(keys[8], (H, H), H), 128, 128).astype(jnp.bfloat16)
    p['proj1_b'] = _pad_cols(unif(keys[9], (1, H), H), 128)
    p['proj2_w'] = _pad_2d(unif(keys[10], (H, proj_size), H), 128, 128).astype(jnp.bfloat16)
    p['proj2_b'] = _pad_cols(unif(keys[11], (1, proj_size), H), 128)
    # Classifier: Linear(H, H//2) -> ReLU -> Linear(H//2, num_classes), 128-padded
    p['cls1_w'] = _pad_2d(unif(keys[12], (H, H // 2), H), 128, 128).astype(jnp.bfloat16)
    p['cls1_b'] = _pad_cols(unif(keys[13], (1, H // 2), H), 128)
    p['cls2_w'] = _pad_2d(unif(keys[14], (H // 2, num_classes), H // 2), 128, 128).astype(jnp.bfloat16)
    p['cls2_b'] = _pad_cols(unif(keys[15], (1, num_classes), H // 2), 128)
    p['dims'] = dict(input_size=L, hidden_size=H,
                     proj_size=proj_size, num_classes=num_classes)
    return p


if __name__ == "__main__":
    input_size, hidden_size, proj_size, num_classes = 16, 32, 16, 5
    batch = 16   # multiple of 8: dense sublane tiles / MXU rows / output store

    key = jax.random.PRNGKey(0)
    kx, kp = jax.random.split(key)
    x = jax.random.normal(kx, (batch, input_size), dtype=jnp.float32)
    params = init_params(kp, input_size, hidden_size, proj_size, num_classes)

    logits = cl_model_forward(x, params, mode='supervised')
    projections = cl_model_forward(x, params, mode='self_supervised')
    jax.block_until_ready(logits)
    jax.block_until_ready(projections)

    assert logits.shape == (batch, num_classes)
    assert projections.shape == (batch, proj_size)
    print("KERNEL_OK")
</pallas_src>

<mosaic_0001>
module attributes {stable_mosaic.version = 11 : i64} {
  func.func @_fused_kernel(%arg0: i32, %arg1: memref<16x16x1xf32, #tpu.memory_space<vmem>>, %arg2: memref<16x1x1xf32, #tpu.memory_space<vmem>>, %arg3: memref<16x1x1xf32, #tpu.memory_space<vmem>>, %arg4: memref<7x128xf32, #tpu.memory_space<vmem>>, %arg5: memref<1x128xf32, #tpu.memory_space<vmem>>, %arg6: memref<5x128x128xbf16, #tpu.memory_space<vmem>>, %arg7: memref<1x128xf32, #tpu.memory_space<vmem>>, %arg8: memref<4x128x256xbf16, #tpu.memory_space<vmem>>, %arg9: memref<1x256xf32, #tpu.memory_space<vmem>>, %arg10: memref<256x128xbf16, #tpu.memory_space<vmem>>, %arg11: memref<1x128xf32, #tpu.memory_space<vmem>>, %arg12: memref<1x128xf32, #tpu.memory_space<vmem>>, %arg13: memref<1x128xf32, #tpu.memory_space<vmem>>, %arg14: memref<128x128xbf16, #tpu.memory_space<vmem>>, %arg15: memref<1x128xf32, #tpu.memory_space<vmem>>, %arg16: memref<128x128xbf16, #tpu.memory_space<vmem>>, %arg17: memref<1x128xf32, #tpu.memory_space<vmem>>, %arg18: memref<16x128xf32, #tpu.memory_space<vmem>>) attributes {dimension_semantics = [#tpu.dimension_semantics<arbitrary>], iteration_bounds = array<i64: 1>, scalar_prefetch = 0 : i64, scratch_operands = 0 : i64, tpu.core_type = #tpu.core_type<tc>, window_params = [{pipeline_mode = #tpu.pipeline_mode<synchronous>, transform_indices = @transform_0, window_bounds = array<i64: 16, 16, 1>}, {pipeline_mode = #tpu.pipeline_mode<synchronous>, transform_indices = @transform_1, window_bounds = array<i64: 16, 1, 1>}, {pipeline_mode = #tpu.pipeline_mode<synchronous>, transform_indices = @transform_2, window_bounds = array<i64: 16, 1, 1>}, {pipeline_mode = #tpu.pipeline_mode<synchronous>, transform_indices = @transform_3, window_bounds = array<i64: 7, 128>}, {pipeline_mode = #tpu.pipeline_mode<synchronous>, transform_indices = @transform_4, window_bounds = array<i64: 1, 128>}, {pipeline_mode = #tpu.pipeline_mode<synchronous>, transform_indices = @transform_5, window_bounds = array<i64: 5, 128, 128>}, {pipeline_mode = #tpu.pipeline_mode<synchronous>, transform_indices = @transform_6, window_bounds = array<i64: 1, 128>}, {pipeline_mode = #tpu.pipeline_mode<synchronous>, transform_indices = @transform_7, window_bounds = array<i64: 4, 128, 256>}, {pipeline_mode = #tpu.pipeline_mode<synchronous>, transform_indices = @transform_8, window_bounds = array<i64: 1, 256>}, {pipeline_mode = #tpu.pipeline_mode<synchronous>, transform_indices = @transform_9, window_bounds = array<i64: 256, 128>}, {pipeline_mode = #tpu.pipeline_mode<synchronous>, transform_indices = @transform_10, window_bounds = array<i64: 1, 128>}, {pipeline_mode = #tpu.pipeline_mode<synchronous>, transform_indices = @transform_11, window_bounds = array<i64: 1, 128>}, {pipeline_mode = #tpu.pipeline_mode<synchronous>, transform_indices = @transform_12, window_bounds = array<i64: 1, 128>}, {pipeline_mode = #tpu.pipeline_mode<synchronous>, transform_indices = @transform_13, window_bounds = array<i64: 128, 128>}, {pipeline_mode = #tpu.pipeline_mode<synchronous>, transform_indices = @transform_14, window_bounds = array<i64: 1, 128>}, {pipeline_mode = #tpu.pipeline_mode<synchronous>, transform_indices = @transform_15, window_bounds = array<i64: 128, 128>}, {pipeline_mode = #tpu.pipeline_mode<synchronous>, transform_indices = @transform_16, window_bounds = array<i64: 1, 128>}, {pipeline_mode = #tpu.pipeline_mode<synchronous>, transform_indices = @transform_17, window_bounds = array<i64: 16, 128>}]} {
    %c0 = arith.constant 0 : index
    %c0_0 = arith.constant 0 : index
    %c0_1 = arith.constant 0 : index
    %0 = vector.load %arg1[%c0, %c0_0, %c0_1] : memref<16x16x1xf32, #tpu.memory_space<vmem>>, vector<16x16x1xf32>
    %c0_2 = arith.constant 0 : index
    %c0_3 = arith.constant 0 : index
    %c0_4 = arith.constant 0 : index
    %1 = vector.load %arg2[%c0_2, %c0_3, %c0_4] : memref<16x1x1xf32, #tpu.memory_space<vmem>>, vector<16x1x1xf32>
    %2 = vector.broadcast %1 : vector<16x1x1xf32> to vector<16x16x1xf32>
    %3 = arith.mulf %0, %2 : vector<16x16x1xf32>
    %c0_5 = arith.constant 0 : index
    %c0_6 = arith.constant 0 : index
    %c0_7 = arith.constant 0 : index
    %4 = vector.load %arg3[%c0_5, %c0_6, %c0_7] : memref<16x1x1xf32, #tpu.memory_space<vmem>>, vector<16x1x1xf32>
    %5 = vector.broadcast %4 : vector<16x1x1xf32> to vector<16x16x1xf32>
    %6 = arith.addf %3, %5 : vector<16x16x1xf32>
    %cst = arith.constant 0.000000e+00 : f32
    %7 = vector.broadcast %cst : f32 to vector<16x16x1xf32>
    %8 = arith.maximumf %6, %7 : vector<16x16x1xf32>
    %9 = vector.shape_cast %8 : vector<16x16x1xf32> to vector<16x16x1xf32>
    %10 = vector.broadcast %9 : vector<16x16x1xf32> to vector<16x16x128xf32>
    %11 = vector.shape_cast %10 : vector<16x16x128xf32> to vector<256x128xf32>
    %cst_8 = arith.constant 0.000000e+00 : f32
    %12 = vector.broadcast %cst_8 : f32 to vector<48x128xf32>
    %13 = tpu.concatenate %12, %11, %12 in 0 : vector<48x128xf32>, vector<256x128xf32>, vector<48x128xf32> -> vector<352x128xf32>
    %c0_9 = arith.constant 0 : index
    %c0_10 = arith.constant 0 : index
    %14 = vector.load %arg4[%c0_9, %c0_10] : memref<7x128xf32, #tpu.memory_space<vmem>>, vector<7x128xf32>
    %15 = vector.extract_strided_slice %13 {offsets = [0, 0], sizes = [256, 128], strides = [1, 1]} : vector<352x128xf32> to vector<256x128xf32>
    %16 = vector.extract_strided_slice %14 {offsets = [0, 0], sizes = [1, 128], strides = [1, 1]} : vector<7x128xf32> to vector<1x128xf32>
    %17 = vector.broadcast %16 : vector<1x128xf32> to vector<256x128xf32>
    %18 = arith.mulf %15, %17 : vector<256x128xf32>
    %19 = vector.extract_strided_slice %13 {offsets = [16, 0], sizes = [256, 128], strides = [1, 1]} : vector<352x128xf32> to vector<256x128xf32>
    %20 = vector.extract_strided_slice %14 {offsets = [1, 0], sizes = [1, 128], strides = [1, 1]} : vector<7x128xf32> to vector<1x128xf32>
    %21 = vector.broadcast %20 : vector<1x128xf32> to vector<256x128xf32>
    %22 = arith.mulf %19, %21 : vector<256x128xf32>
    %23 = arith.addf %18, %22 : vector<256x128xf32>
    %24 = vector.extract_strided_slice %13 {offsets = [32, 0], sizes = [256, 128], strides = [1, 1]} : vector<352x128xf32> to vector<256x128xf32>
    %25 = vector.extract_strided_slice %14 {offsets = [2, 0], sizes = [1, 128], strides = [1, 1]} : vector<7x128xf32> to vector<1x128xf32>
    %26 = vector.broadcast %25 : vector<1x128xf32> to vector<256x128xf32>
    %27 = arith.mulf %24, %26 : vector<256x128xf32>
    %28 = arith.addf %23, %27 : vector<256x128xf32>
    %29 = vector.extract_strided_slice %13 {offsets = [48, 0], sizes = [256, 128], strides = [1, 1]} : vector<352x128xf32> to vector<256x128xf32>
    %30 = vector.extract_strided_slice %14 {offsets = [3, 0], sizes = [1, 128], strides = [1, 1]} : vector<7x128xf32> to vector<1x128xf32>
    %31 = vector.broadcast %30 : vector<1x128xf32> to vector<256x128xf32>
    %32 = arith.mulf %29, %31 : vector<256x128xf32>
    %33 = arith.addf %28, %32 : vector<256x128xf32>
    %34 = vector.extract_strided_slice %13 {offsets = [64, 0], sizes = [256, 128], strides = [1, 1]} : vector<352x128xf32> to vector<256x128xf32>
    %35 = vector.extract_strided_slice %14 {offsets = [4, 0], sizes = [1, 128], strides = [1, 1]} : vector<7x128xf32> to vector<1x128xf32>
    %36 = vector.broadcast %35 : vector<1x128xf32> to vector<256x128xf32>
    %37 = arith.mulf %34, %36 : vector<256x128xf32>
    %38 = arith.addf %33, %37 : vector<256x128xf32>
    %39 = vector.extract_strided_slice %13 {offsets = [80, 0], sizes = [256, 128], strides = [1, 1]} : vector<352x128xf32> to vector<256x128xf32>
    %40 = vector.extract_strided_slice %14 {offsets = [5, 0], sizes = [1, 128], strides = [1, 1]} : vector<7x128xf32> to vector<1x128xf32>
    %41 = vector.broadcast %40 : vector<1x128xf32> to vector<256x128xf32>
    %42 = arith.mulf %39, %41 : vector<256x128xf32>
    %43 = arith.addf %38, %42 : vector<256x128xf32>
    %44 = vector.extract_strided_slice %13 {offsets = [96, 0], sizes = [256, 128], strides = [1, 1]} : vector<352x128xf32> to vector<256x128xf32>
    %45 = vector.extract_strided_slice %14 {offsets = [6, 0], sizes = [1, 128], strides = [1, 1]} : vector<7x128xf32> to vector<1x128xf32>
    %46 = vector.broadcast %45 : vector<1x128xf32> to vector<256x128xf32>
    %47 = arith.mulf %44, %46 : vector<256x128xf32>
    %48 = arith.addf %43, %47 : vector<256x128xf32>
    %c0_11 = arith.constant 0 : index
    %c0_12 = arith.constant 0 : index
    %49 = vector.load %arg5[%c0_11, %c0_12] : memref<1x128xf32, #tpu.memory_space<vmem>>, vector<1x128xf32>
    %50 = vector.broadcast %49 : vector<1x128xf32> to vector<256x128xf32>
    %51 = arith.addf %48, %50 : vector<256x128xf32>
    %cst_13 = arith.constant 0.000000e+00 : f32
    %52 = vector.broadcast %cst_13 : f32 to vector<256x128xf32>
    %53 = arith.maximumf %51, %52 : vector<256x128xf32>
    %54 = vector.shape_cast %53 : vector<256x128xf32> to vector<8x32x128xf32>
    %55 = vector.extract_strided_slice %54 {offsets = [0, 0, 0], sizes = [8, 16, 128], strides = [1, 1, 1]} : vector<8x32x128xf32> to vector<8x16x128xf32>
    %56 = vector.extract_strided_slice %54 {offsets = [0, 16, 0], sizes = [8, 16, 128], strides = [1, 1, 1]} : vector<8x32x128xf32> to vector<8x16x128xf32>
    %57 = arith.maximumf %55, %56 : vector<8x16x128xf32>
    %58 = vector.shape_cast %57 : vector<8x16x128xf32> to vector<128x128xf32>
    %cst_14 = arith.constant 0.000000e+00 : f32
    %59 = vector.broadcast %cst_14 : f32 to vector<32x128xf32>
    %60 = tpu.concatenate %59, %58, %59 in 0 : vector<32x128xf32>, vector<128x128xf32>, vector<32x128xf32> -> vector<192x128xf32>
    %61 = vector.extract_strided_slice %60 {offsets = [0, 0], sizes = [128, 128], strides = [1, 1]} : vector<192x128xf32> to vector<128x128xf32>
    %62 = arith.truncf %61 : vector<128x128xf32> to vector<128x128xbf16>
    %c0_15 = arith.constant 0 : index
    %c0_16 = arith.constant 0 : index
    %c0_17 = arith.constant 0 : index
    %63 = vector.load %arg6[%c0_15, %c0_16, %c0_17] : memref<5x128x128xbf16, #tpu.memory_space<vmem>>, vector<1x128x128xbf16>
    %64 = vector.shape_cast %63 : vector<1x128x128xbf16> to vector<128x128xbf16>
    %cst_18 = arith.constant dense<0.000000e+00> : vector<128x128xf32>
    %65 = tpu.matmul %62, %64, %cst_18 {dimension_numbers = #tpu.dot_dimension_numbers<[1], [0], [0], [1], [0, 0, 1, 1], [], []>} : vector<128x128xbf16>, vector<128x128xbf16>, vector<128x128xf32> -> vector<128x128xf32>
    %66 = vector.extract_strided_slice %60 {offsets = [16, 0], sizes = [128, 128], strides = [1, 1]} : vector<192x128xf32> to vector<128x128xf32>
    %67 = arith.truncf %66 : vector<128x128xf32> to vector<128x128xbf16>
    %c1 = arith.constant 1 : index
    %c0_19 = arith.constant 0 : index
    %c0_20 = arith.constant 0 : index
    %68 = vector.load %arg6[%c1, %c0_19, %c0_20] : memref<5x128x128xbf16, #tpu.memory_space<vmem>>, vector<1x128x128xbf16>
    %69 = vector.shape_cast %68 : vector<1x128x128xbf16> to vector<128x128xbf16>
    %cst_21 = arith.constant dense<0.000000e+00> : vector<128x128xf32>
    %70 = tpu.matmul %67, %69, %cst_21 {dimension_numbers = #tpu.dot_dimension_numbers<[1], [0], [0], [1], [0, 0, 1, 1], [], []>} : vector<128x128xbf16>, vector<128x128xbf16>, vector<128x128xf32> -> vector<128x128xf32>
    %71 = arith.addf %65, %70 : vector<128x128xf32>
    %72 = vector.extract_strided_slice %60 {offsets = [32, 0], sizes = [128, 128], strides = [1, 1]} : vector<192x128xf32> to vector<128x128xf32>
    %73 = arith.truncf %72 : vector<128x128xf32> to vector<128x128xbf16>
    %c2 = arith.constant 2 : index
    %c0_22 = arith.constant 0 : index
    %c0_23 = arith.constant 0 : index
    %74 = vector.load %arg6[%c2, %c0_22, %c0_23] : memref<5x128x128xbf16, #tpu.memory_space<vmem>>, vector<1x128x128xbf16>
    %75 = vector.shape_cast %74 : vector<1x128x128xbf16> to vector<128x128xbf16>
    %cst_24 = arith.constant dense<0.000000e+00> : vector<128x128xf32>
    %76 = tpu.matmul %73, %75, %cst_24 {dimension_numbers = #tpu.dot_dimension_numbers<[1], [0], [0], [1], [0, 0, 1, 1], [], []>} : vector<128x128xbf16>, vector<128x128xbf16>, vector<128x128xf32> -> vector<128x128xf32>
    %77 = arith.addf %71, %76 : vector<128x128xf32>
    %78 = vector.extract_strided_slice %60 {offsets = [48, 0], sizes = [128, 128], strides = [1, 1]} : vector<192x128xf32> to vector<128x128xf32>
    %79 = arith.truncf %78 : vector<128x128xf32> to vector<128x128xbf16>
    %c3 = arith.constant 3 : index
    %c0_25 = arith.constant 0 : index
    %c0_26 = arith.constant 0 : index
    %80 = vector.load %arg6[%c3, %c0_25, %c0_26] : memref<5x128x128xbf16, #tpu.memory_space<vmem>>, vector<1x128x128xbf16>
    %81 = vector.shape_cast %80 : vector<1x128x128xbf16> to vector<128x128xbf16>
    %cst_27 = arith.constant dense<0.000000e+00> : vector<128x128xf32>
    %82 = tpu.matmul %79, %81, %cst_27 {dimension_numbers = #tpu.dot_dimension_numbers<[1], [0], [0], [1], [0, 0, 1, 1], [], []>} : vector<128x128xbf16>, vector<128x128xbf16>, vector<128x128xf32> -> vector<128x128xf32>
    %83 = arith.addf %77, %82 : vector<128x128xf32>
    %84 = vector.extract_strided_slice %60 {offsets = [64, 0], sizes = [128, 128], strides = [1, 1]} : vector<192x128xf32> to vector<128x128xf32>
    %85 = arith.truncf %84 : vector<128x128xf32> to vector<128x128xbf16>
    %c4 = arith.constant 4 : index
    %c0_28 = arith.constant 0 : index
    %c0_29 = arith.constant 0 : index
    %86 = vector.load %arg6[%c4, %c0_28, %c0_29] : memref<5x128x128xbf16, #tpu.memory_space<vmem>>, vector<1x128x128xbf16>
    %87 = vector.shape_cast %86 : vector<1x128x128xbf16> to vector<128x128xbf16>
    %cst_30 = arith.constant dense<0.000000e+00> : vector<128x128xf32>
    %88 = tpu.matmul %85, %87, %cst_30 {dimension_numbers = #tpu.dot_dimension_numbers<[1], [0], [0], [1], [0, 0, 1, 1], [], []>} : vector<128x128xbf16>, vector<128x128xbf16>, vector<128x128xf32> -> vector<128x128xf32>
    %89 = arith.addf %83, %88 : vector<128x128xf32>
    %c0_31 = arith.constant 0 : index
    %c0_32 = arith.constant 0 : index
    %90 = vector.load %arg7[%c0_31, %c0_32] : memref<1x128xf32, #tpu.memory_space<vmem>>, vector<1x128xf32>
    %91 = vector.broadcast %90 : vector<1x128xf32> to vector<128x128xf32>
    %92 = arith.addf %89, %91 : vector<128x128xf32>
    %cst_33 = arith.constant 0.000000e+00 : f32
    %93 = vector.broadcast %cst_33 : f32 to vector<128x128xf32>
    %94 = arith.maximumf %92, %93 : vector<128x128xf32>
    %95 = vector.shape_cast %94 : vector<128x128xf32> to vector<4x32x128xf32>
    %96 = vector.extract_strided_slice %95 {offsets = [0, 0, 0], sizes = [4, 16, 128], strides = [1, 1, 1]} : vector<4x32x128xf32> to vector<4x16x128xf32>
    %97 = vector.extract_strided_slice %95 {offsets = [0, 16, 0], sizes = [4, 16, 128], strides = [1, 1, 1]} : vector<4x32x128xf32> to vector<4x16x128xf32>
    %98 = arith.maximumf %96, %97 : vector<4x16x128xf32>
    %99 = vector.extract_strided_slice %98 {offsets = [0, 0, 0], sizes = [1, 16, 128], strides = [1, 1, 1]} : vector<4x16x128xf32> to vector<1x16x128xf32>
    %100 = vector.shape_cast %99 : vector<1x16x128xf32> to vector<16x128xf32>
    %101 = arith.truncf %100 : vector<16x128xf32> to vector<16x128xbf16>
    %c0_34 = arith.constant 0 : index
    %c0_35 = arith.constant 0 : index
    %c0_36 = arith.constant 0 : index
    %102 = vector.load %arg8[%c0_34, %c0_35, %c0_36] : memref<4x128x256xbf16, #tpu.memory_space<vmem>>, vector<1x128x256xbf16>
    %103 = vector.shape_cast %102 : vector<1x128x256xbf16> to vector<128x256xbf16>
    %cst_37 = arith.constant dense<0.000000e+00> : vector<16x256xf32>
    %104 = tpu.matmul %101, %103, %cst_37 {dimension_numbers = #tpu.dot_dimension_numbers<[1], [0], [0], [1], [0, 0, 1, 1], [], []>} : vector<16x128xbf16>, vector<128x256xbf16>, vector<16x256xf32> -> vector<16x256xf32>
    %105 = vector.extract_strided_slice %98 {offsets = [1, 0, 0], sizes = [1, 16, 128], strides = [1, 1, 1]} : vector<4x16x128xf32> to vector<1x16x128xf32>
    %106 = vector.shape_cast %105 : vector<1x16x128xf32> to vector<16x128xf32>
    %107 = arith.truncf %106 : vector<16x128xf32> to vector<16x128xbf16>
    %c1_38 = arith.constant 1 : index
    %c0_39 = arith.constant 0 : index
    %c0_40 = arith.constant 0 : index
    %108 = vector.load %arg8[%c1_38, %c0_39, %c0_40] : memref<4x128x256xbf16, #tpu.memory_space<vmem>>, vector<1x128x256xbf16>
    %109 = vector.shape_cast %108 : vector<1x128x256xbf16> to vector<128x256xbf16>
    %cst_41 = arith.constant dense<0.000000e+00> : vector<16x256xf32>
    %110 = tpu.matmul %107, %109, %cst_41 {dimension_numbers = #tpu.dot_dimension_numbers<[1], [0], [0], [1], [0, 0, 1, 1], [], []>} : vector<16x128xbf16>, vector<128x256xbf16>, vector<16x256xf32> -> vector<16x256xf32>
    %111 = arith.addf %104, %110 : vector<16x256xf32>
    %112 = vector.extract_strided_slice %98 {offsets = [2, 0, 0], sizes = [1, 16, 128], strides = [1, 1, 1]} : vector<4x16x128xf32> to vector<1x16x128xf32>
    %113 = vector.shape_cast %112 : vector<1x16x128xf32> to vector<16x128xf32>
    %114 = arith.truncf %113 : vector<16x128xf32> to vector<16x128xbf16>
    %c2_42 = arith.constant 2 : index
    %c0_43 = arith.constant 0 : index
    %c0_44 = arith.constant 0 : index
    %115 = vector.load %arg8[%c2_42, %c0_43, %c0_44] : memref<4x128x256xbf16, #tpu.memory_space<vmem>>, vector<1x128x256xbf16>
    %116 = vector.shape_cast %115 : vector<1x128x256xbf16> to vector<128x256xbf16>
    %cst_45 = arith.constant dense<0.000000e+00> : vector<16x256xf32>
    %117 = tpu.matmul %114, %116, %cst_45 {dimension_numbers = #tpu.dot_dimension_numbers<[1], [0], [0], [1], [0, 0, 1, 1], [], []>} : vector<16x128xbf16>, vector<128x256xbf16>, vector<16x256xf32> -> vector<16x256xf32>
    %118 = arith.addf %111, %117 : vector<16x256xf32>
    %119 = vector.extract_strided_slice %98 {offsets = [3, 0, 0], sizes = [1, 16, 128], strides = [1, 1, 1]} : vector<4x16x128xf32> to vector<1x16x128xf32>
    %120 = vector.shape_cast %119 : vector<1x16x128xf32> to vector<16x128xf32>
    %121 = arith.truncf %120 : vector<16x128xf32> to vector<16x128xbf16>
    %c3_46 = arith.constant 3 : index
    %c0_47 = arith.constant 0 : index
    %c0_48 = arith.constant 0 : index
    %122 = vector.load %arg8[%c3_46, %c0_47, %c0_48] : memref<4x128x256xbf16, #tpu.memory_space<vmem>>, vector<1x128x256xbf16>
    %123 = vector.shape_cast %122 : vector<1x128x256xbf16> to vector<128x256xbf16>
    %cst_49 = arith.constant dense<0.000000e+00> : vector<16x256xf32>
    %124 = tpu.matmul %121, %123, %cst_49 {dimension_numbers = #tpu.dot_dimension_numbers<[1], [0], [0], [1], [0, 0, 1, 1], [], []>} : vector<16x128xbf16>, vector<128x256xbf16>, vector<16x256xf32> -> vector<16x256xf32>
    %125 = arith.addf %118, %124 : vector<16x256xf32>
    %c0_50 = arith.constant 0 : index
    %c0_51 = arith.constant 0 : index
    %126 = vector.load %arg9[%c0_50, %c0_51] : memref<1x256xf32, #tpu.memory_space<vmem>>, vector<1x256xf32>
    %127 = vector.broadcast %126 : vector<1x256xf32> to vector<16x256xf32>
    %128 = arith.addf %125, %127 : vector<16x256xf32>
    %cst_52 = arith.constant 0.000000e+00 : f32
    %129 = vector.broadcast %cst_52 : f32 to vector<16x256xf32>
    %130 = arith.maximumf %128, %129 : vector<16x256xf32>
    %131 = arith.truncf %130 : vector<16x256xf32> to vector<16x256xbf16>
    %c0_53 = arith.constant 0 : index
    %c0_54 = arith.constant 0 : index
    %132 = vector.load %arg10[%c0_53, %c0_54] : memref<256x128xbf16, #tpu.memory_space<vmem>>, vector<256x128xbf16>
    %cst_55 = arith.constant dense<0.000000e+00> : vector<16x128xf32>
    %133 = tpu.matmul %131, %132, %cst_55 {dimension_numbers = #tpu.dot_dimension_numbers<[1], [0], [0], [1], [0, 0, 1, 1], [], []>} : vector<16x256xbf16>, vector<256x128xbf16>, vector<16x128xf32> -> vector<16x128xf32>
    %c0_56 = arith.constant 0 : index
    %c0_57 = arith.constant 0 : index
    %134 = vector.load %arg11[%c0_56, %c0_57] : memref<1x128xf32, #tpu.memory_space<vmem>>, vector<1x128xf32>
    %135 = vector.broadcast %134 : vector<1x128xf32> to vector<16x128xf32>
    %136 = arith.addf %133, %135 : vector<16x128xf32>
    %cst_58 = arith.constant dense<0.000000e+00> : vector<128xf32>
    %137 = vector.multi_reduction <add>, %136, %cst_58 [0] : vector<16x128xf32> to vector<128xf32>
    %138 = vector.shape_cast %137 : vector<128xf32> to vector<1x128xf32>
    %cst_59 = arith.constant 1.600000e+01 : f32
    %139 = vector.broadcast %cst_59 : f32 to vector<1x128xf32>
    %140 = arith.divf %138, %139 : vector<1x128xf32>
    %141 = vector.broadcast %140 : vector<1x128xf32> to vector<16x128xf32>
    %142 = arith.subf %136, %141 : vector<16x128xf32>
    %143 = arith.mulf %142, %142 : vector<16x128xf32>
    %cst_60 = arith.constant dense<0.000000e+00> : vector<128xf32>
    %144 = vector.multi_reduction <add>, %143, %cst_60 [0] : vector<16x128xf32> to vector<128xf32>
    %145 = vector.shape_cast %144 : vector<128xf32> to vector<1x128xf32>
    %cst_61 = arith.constant 1.600000e+01 : f32
    %146 = vector.broadcast %cst_61 : f32 to vector<1x128xf32>
    %147 = arith.divf %145, %146 : vector<1x128xf32>
    %148 = vector.broadcast %140 : vector<1x128xf32> to vector<16x128xf32>
    %149 = arith.subf %136, %148 : vector<16x128xf32>
    %cst_62 = arith.constant 9.99999974E-6 : f32
    %150 = vector.broadcast %cst_62 : f32 to vector<1x128xf32>
    %151 = arith.addf %147, %150 : vector<1x128xf32>
    %152 = math.rsqrt %151 : vector<1x128xf32>
    %153 = vector.broadcast %152 : vector<1x128xf32> to vector<16x128xf32>
    %154 = arith.mulf %149, %153 : vector<16x128xf32>
    %c0_63 = arith.constant 0 : index
    %c0_64 = arith.constant 0 : index
    %155 = vector.load %arg12[%c0_63, %c0_64] : memref<1x128xf32, #tpu.memory_space<vmem>>, vector<1x128xf32>
    %156 = vector.broadcast %155 : vector<1x128xf32> to vector<16x128xf32>
    %157 = arith.mulf %154, %156 : vector<16x128xf32>
    %c0_65 = arith.constant 0 : index
    %c0_66 = arith.constant 0 : index
    %158 = vector.load %arg13[%c0_65, %c0_66] : memref<1x128xf32, #tpu.memory_space<vmem>>, vector<1x128xf32>
    %159 = vector.broadcast %158 : vector<1x128xf32> to vector<16x128xf32>
    %160 = arith.addf %157, %159 : vector<16x128xf32>
    %161 = arith.truncf %160 : vector<16x128xf32> to vector<16x128xbf16>
    %c0_67 = arith.constant 0 : index
    %c0_68 = arith.constant 0 : index
    %162 = vector.load %arg14[%c0_67, %c0_68] : memref<128x128xbf16, #tpu.memory_space<vmem>>, vector<128x128xbf16>
    %cst_69 = arith.constant dense<0.000000e+00> : vector<16x128xf32>
    %163 = tpu.matmul %161, %162, %cst_69 {dimension_numbers = #tpu.dot_dimension_numbers<[1], [0], [0], [1], [0, 0, 1, 1], [], []>} : vector<16x128xbf16>, vector<128x128xbf16>, vector<16x128xf32> -> vector<16x128xf32>
    %c0_70 = arith.constant 0 : index
    %c0_71 = arith.constant 0 : index
    %164 = vector.load %arg15[%c0_70, %c0_71] : memref<1x128xf32, #tpu.memory_space<vmem>>, vector<1x128xf32>
    %165 = vector.broadcast %164 : vector<1x128xf32> to vector<16x128xf32>
    %166 = arith.addf %163, %165 : vector<16x128xf32>
    %cst_72 = arith.constant 0.000000e+00 : f32
    %167 = vector.broadcast %cst_72 : f32 to vector<16x128xf32>
    %168 = arith.maximumf %166, %167 : vector<16x128xf32>
    %169 = arith.truncf %168 : vector<16x128xf32> to vector<16x128xbf16>
    %c0_73 = arith.constant 0 : index
    %c0_74 = arith.constant 0 : index
    %170 = vector.load %arg16[%c0_73, %c0_74] : memref<128x128xbf16, #tpu.memory_space<vmem>>, vector<128x128xbf16>
    %cst_75 = arith.constant dense<0.000000e+00> : vector<16x128xf32>
    %171 = tpu.matmul %169, %170, %cst_75 {dimension_numbers = #tpu.dot_dimension_numbers<[1], [0], [0], [1], [0, 0, 1, 1], [], []>} : vector<16x128xbf16>, vector<128x128xbf16>, vector<16x128xf32> -> vector<16x128xf32>
    %c0_76 = arith.constant 0 : index
    %c0_77 = arith.constant 0 : index
    %172 = vector.load %arg17[%c0_76, %c0_77] : memref<1x128xf32, #tpu.memory_space<vmem>>, vector<1x128xf32>
    %173 = vector.broadcast %172 : vector<1x128xf32> to vector<16x128xf32>
    %174 = arith.addf %171, %173 : vector<16x128xf32>
    %c0_78 = arith.constant 0 : index
    %c0_79 = arith.constant 0 : index
    %175 = vector.load %arg18[%c0_78, %c0_79] : memref<16x128xf32, #tpu.memory_space<vmem>>, vector<16x128xf32>
    tpu.vector_store %arg18[%c0_78, %c0_79], %174 {strides = array<i32>} : memref<16x128xf32, #tpu.memory_space<vmem>>, vector<16x128xf32>,
    return
  }
  func.func @transform_0(%arg0: i32) -> (i32, i32, i32) {
    %c0_i32 = arith.constant 0 : i32
    %c0_i32_0 = arith.constant 0 : i32
    %c0_i32_1 = arith.constant 0 : i32
    %c0_i32_2 = arith.constant 0 : i32
    return %c0_i32, %c0_i32_0, %c0_i32_1 : i32, i32, i32
  }
  func.func @transform_1(%arg0: i32) -> (i32, i32, i32) {
    %c0_i32 = arith.constant 0 : i32
    %c0_i32_0 = arith.constant 0 : i32
    %c0_i32_1 = arith.constant 0 : i32
    %c0_i32_2 = arith.constant 0 : i32
    return %c0_i32, %c0_i32_0, %c0_i32_1 : i32, i32, i32
  }
  func.func @transform_2(%arg0: i32) -> (i32, i32, i32) {
    %c0_i32 = arith.constant 0 : i32
    %c0_i32_0 = arith.constant 0 : i32
    %c0_i32_1 = arith.constant 0 : i32
    %c0_i32_2 = arith.constant 0 : i32
    return %c0_i32, %c0_i32_0, %c0_i32_1 : i32, i32, i32
  }
  func.func @transform_3(%arg0: i32) -> (i32, i32) {
    %c0_i32 = arith.constant 0 : i32
    %c0_i32_0 = arith.constant 0 : i32
    %c0_i32_1 = arith.constant 0 : i32
    return %c0_i32, %c0_i32_0 : i32, i32
  }
  func.func @transform_4(%arg0: i32) -> (i32, i32) {
    %c0_i32 = arith.constant 0 : i32
    %c0_i32_0 = arith.constant 0 : i32
    %c0_i32_1 = arith.constant 0 : i32
    return %c0_i32, %c0_i32_0 : i32, i32
  }
  func.func @transform_5(%arg0: i32) -> (i32, i32, i32) {
    %c0_i32 = arith.constant 0 : i32
    %c0_i32_0 = arith.constant 0 : i32
    %c0_i32_1 = arith.constant 0 : i32
    %c0_i32_2 = arith.constant 0 : i32
    return %c0_i32, %c0_i32_0, %c0_i32_1 : i32, i32, i32
  }
  func.func @transform_6(%arg0: i32) -> (i32, i32) {
    %c0_i32 = arith.constant 0 : i32
    %c0_i32_0 = arith.constant 0 : i32
    %c0_i32_1 = arith.constant 0 : i32
    return %c0_i32, %c0_i32_0 : i32, i32
  }
  func.func @transform_7(%arg0: i32) -> (i32, i32, i32) {
    %c0_i32 = arith.constant 0 : i32
    %c0_i32_0 = arith.constant 0 : i32
    %c0_i32_1 = arith.constant 0 : i32
    %c0_i32_2 = arith.constant 0 : i32
    return %c0_i32, %c0_i32_0, %c0_i32_1 : i32, i32, i32
  }
  func.func @transform_8(%arg0: i32) -> (i32, i32) {
    %c0_i32 = arith.constant 0 : i32
    %c0_i32_0 = arith.constant 0 : i32
    %c0_i32_1 = arith.constant 0 : i32
    return %c0_i32, %c0_i32_0 : i32, i32
  }
  func.func @transform_9(%arg0: i32) -> (i32, i32) {
    %c0_i32 = arith.constant 0 : i32
    %c0_i32_0 = arith.constant 0 : i32
    %c0_i32_1 = arith.constant 0 : i32
    return %c0_i32, %c0_i32_0 : i32, i32
  }
  func.func @transform_10(%arg0: i32) -> (i32, i32) {
    %c0_i32 = arith.constant 0 : i32
    %c0_i32_0 = arith.constant 0 : i32
    %c0_i32_1 = arith.constant 0 : i32
    return %c0_i32, %c0_i32_0 : i32, i32
  }
  func.func @transform_11(%arg0: i32) -> (i32, i32) {
    %c0_i32 = arith.constant 0 : i32
    %c0_i32_0 = arith.constant 0 : i32
    %c0_i32_1 = arith.constant 0 : i32
    return %c0_i32, %c0_i32_0 : i32, i32
  }
  func.func @transform_12(%arg0: i32) -> (i32, i32) {
    %c0_i32 = arith.constant 0 : i32
    %c0_i32_0 = arith.constant 0 : i32
    %c0_i32_1 = arith.constant 0 : i32
    return %c0_i32, %c0_i32_0 : i32, i32
  }
  func.func @transform_13(%arg0: i32) -> (i32, i32) {
    %c0_i32 = arith.constant 0 : i32
    %c0_i32_0 = arith.constant 0 : i32
    %c0_i32_1 = arith.constant 0 : i32
    return %c0_i32, %c0_i32_0 : i32, i32
  }
  func.func @transform_14(%arg0: i32) -> (i32, i32) {
    %c0_i32 = arith.constant 0 : i32
    %c0_i32_0 = arith.constant 0 : i32
    %c0_i32_1 = arith.constant 0 : i32
    return %c0_i32, %c0_i32_0 : i32, i32
  }
  func.func @transform_15(%arg0: i32) -> (i32, i32) {
    %c0_i32 = arith.constant 0 : i32
    %c0_i32_0 = arith.constant 0 : i32
    %c0_i32_1 = arith.constant 0 : i32
    return %c0_i32, %c0_i32_0 : i32, i32
  }
  func.func @transform_16(%arg0: i32) -> (i32, i32) {
    %c0_i32 = arith.constant 0 : i32
    %c0_i32_0 = arith.constant 0 : i32
    %c0_i32_1 = arith.constant 0 : i32
    return %c0_i32, %c0_i32_0 : i32, i32
  }
  func.func @transform_17(%arg0: i32) -> (i32, i32) {
    %c0_i32 = arith.constant 0 : i32
    %c0_i32_0 = arith.constant 0 : i32
    %c0_i32_1 = arith.constant 0 : i32
    return %c0_i32, %c0_i32_0 : i32, i32
  }
}

</mosaic_0001>

<llo_original>
// kernel: _fused_forward_impl.1
$region0: #{_fused_forward_impl.1}
  #allocation0 [shape = 'u32[]', space=smem, size = 0x4, offset = 0x4, fixed_abs, tag = 'smem constant byte address 0x4 - core index']
  #allocation1 [shape = 'u32[144,128]{1,0:T(1,128)}', space=vmem, size = 0x12000, scoped, tag = 'internal scratch']
  %s0 = inlined_call_operand.vmem [shape: f32[16,16,1], index: 0, kind: input, shape index: {}]
  %s1 = inlined_call_operand.vmem [shape: f32[16,1,1], index: 1, kind: input, shape index: {}]
  %s2 = inlined_call_operand.vmem [shape: f32[16,1,1], index: 2, kind: input, shape index: {}]
  %s3 = inlined_call_operand.vmem [shape: f32[7,128], index: 3, kind: input, shape index: {}]
  %s4 = inlined_call_operand.vmem [shape: f32[1,128], index: 4, kind: input, shape index: {}]
  %s5 = inlined_call_operand.vmem [shape: bf16[5,128,128], index: 5, kind: input, shape index: {}]
  %s6 = inlined_call_operand.vmem [shape: f32[1,128], index: 6, kind: input, shape index: {}]
  %s7 = inlined_call_operand.hbm [shape: bf16[4,128,256], index: 7, kind: input, shape index: {}]
  %s8 = inlined_call_operand.vmem [shape: f32[1,256], index: 8, kind: input, shape index: {}]
  %s9 = inlined_call_operand.hbm [shape: bf16[256,128], index: 9, kind: input, shape index: {}]
  %s10 = inlined_call_operand.vmem [shape: f32[1,128], index: 10, kind: input, shape index: {}]
  %s11 = inlined_call_operand.vmem [shape: f32[1,128], index: 11, kind: input, shape index: {}]
  %s12 = inlined_call_operand.vmem [shape: f32[1,128], index: 12, kind: input, shape index: {}]
  %s13 = inlined_call_operand.vmem [shape: bf16[128,128], index: 13, kind: input, shape index: {}]
  %s14 = inlined_call_operand.vmem [shape: f32[1,128], index: 14, kind: input, shape index: {}]
  %s15 = inlined_call_operand.hbm [shape: bf16[128,128], index: 15, kind: input, shape index: {}]
  %s16 = inlined_call_operand.hbm [shape: f32[1,128], index: 16, kind: input, shape index: {}]
  %s17 = inlined_call_operand.hbm [shape: f32[16,128], index: 17, kind: output, shape index: {}]
  %s18 = sld [smem:[#allocation0]]
  $region94: #{_fused_forward_impl.1} parent=0
    _
  %s20 = ssub.s32 1, %s18
  %s21 = scalar_select 0, %s20, %s18
  $region1: #{_fused_forward_impl.1} parent=0
    #allocation2 [shape = 'u8[262144]{0}', space=vmem, size = 0x40000, scoped, tag = 'input window, operand 7, single buffered']
    #allocation3 [shape = 's32[1]{0}', space=sflag, size = 0x4, scoped, tag = 'scoped memory for _fused_forward_impl.1']
    #allocation4 [shape = 's32[1]{0}', space=sflag, size = 0x4, scoped, tag = 'scoped memory for _fused_forward_impl.1']
    #allocation5 [shape = 'u8[65536]{0}', space=vmem, size = 0x10000, scoped, tag = 'input window, operand 9, single buffered']
    #allocation6 [shape = 's32[1]{0}', space=sflag, size = 0x4, scoped, tag = 'scoped memory for _fused_forward_impl.1']
    #allocation7 [shape = 'u8[32768]{0}', space=vmem, size = 0x8000, scoped, tag = 'input window, operand 15, single buffered']
    #allocation8 [shape = 'u8[512]{0}', space=vmem, size = 0x400, scoped, tag = 'input window, operand 16, single buffered']
    #allocation9 [shape = 's32[1]{0}', space=sflag, size = 0x4, scoped, tag = 'scoped memory for _fused_forward_impl.1']
    #allocation10 [shape = 'u8[8192]{0}', space=vmem, size = 0x2000, scoped, tag = 'output window, operand 0, single buffered']
    %22 = vsyncpa [#allocation3], 0
    %23 = vsyncpa [#allocation6], 0
    %24 = vsyncpa [#allocation9], 0
    %25 = vsyncpa [#allocation4], 0
    // Predicated region
    $region2: #{_fused_forward_impl.1} parent=1 // pred_check
      _
    $region3: #{_fused_forward_impl.1} parent=1 // pred_check_branch
      %27 = sbr.rel (0) target = $region5
    $region4: #{_fused_forward_impl.1} parent=1 // pred_region
      _
    $region5: #{_fused_forward_impl.1} parent=1 // pred_fallthru
      _
    // Predicated region
    $region6: #{_fused_forward_impl.1} parent=1 // pred_check
      _
    $region7: #{_fused_forward_impl.1} parent=1 // pred_check_branch
      %29 = sbr.rel (0) target = $region9
    $region8: #{_fused_forward_impl.1} parent=1 // pred_region
      _
    $region9: #{_fused_forward_impl.1} parent=1 // pred_fallthru
      _
    // Predicated region
    $region10: #{_fused_forward_impl.1} parent=1 // pred_check
      _
    $region11: #{_fused_forward_impl.1} parent=1 // pred_check_branch
      %31 = sbr.rel (0) target = $region13
    $region12: #{_fused_forward_impl.1} parent=1 // pred_region
      _
    $region13: #{_fused_forward_impl.1} parent=1 // pred_fallthru
      _
    // Predicated region
    $region14: #{_fused_forward_impl.1} parent=1 // pred_check
      _
    $region15: #{_fused_forward_impl.1} parent=1 // pred_check_branch
      %33 = sbr.rel (0) target = $region17
    $region16: #{_fused_forward_impl.1} parent=1 // pred_region
      _
    $region17: #{_fused_forward_impl.1} parent=1 // pred_fallthru
      _
    // Predicated region
    $region18: #{_fused_forward_impl.1} parent=1 // pred_check
      _
    $region19: #{_fused_forward_impl.1} parent=1 // pred_check_branch
      %35 = sbr.rel (0) target = $region21
    $region20: #{_fused_forward_impl.1} parent=1 // pred_region
      _
    $region21: #{_fused_forward_impl.1} parent=1 // pred_fallthru
      _
    // Predicated region
    $region22: #{_fused_forward_impl.1} parent=1 // pred_check
      _
    $region23: #{_fused_forward_impl.1} parent=1 // pred_check_branch
      %37 = sbr.rel (0) target = $region25
    $region24: #{_fused_forward_impl.1} parent=1 // pred_region
      _
    $region25: #{_fused_forward_impl.1} parent=1 // pred_fallthru
      _
    // Predicated region
    $region26: #{_fused_forward_impl.1} parent=1 // pred_check
      _
    $region27: #{_fused_forward_impl.1} parent=1 // pred_check_branch
      %39 = sbr.rel (0) target = $region29
    $region28: #{_fused_forward_impl.1} parent=1 // pred_region
      _
    $region29: #{_fused_forward_impl.1} parent=1 // pred_fallthru
      _
    // Predicated region
    $region30: #{_fused_forward_impl.1} parent=1 // pred_check
      _
    $region31: #{_fused_forward_impl.1} parent=1 // pred_check_branch
      %41 = sbr.rel (0) target = $region33
    $region32: #{_fused_forward_impl.1} parent=1 // pred_region
      %s43 = ssub.s32 8192, 8192
      %44 = vsyncadd [#allocation3], %s43
      %s45 = sshll.u32 [#allocation2], 4
      %s46 = int_to_ptr.vmem [resolvable:$true] %s45
      %51 = dma.hbm_to_vmem [thread:$0]  %s7, 8192, %s46, [#allocation3], 128, 128, 8
    $region33: #{_fused_forward_impl.1} parent=1 // pred_fallthru
      _
    // Predicated region
    $region34: #{_fused_forward_impl.1} parent=1 // pred_check
      _
    $region35: #{_fused_forward_impl.1} parent=1 // pred_check_branch
      %53 = sbr.rel (0) target = $region37
    $region36: #{_fused_forward_impl.1} parent=1 // pred_region
      _
    $region37: #{_fused_forward_impl.1} parent=1 // pred_fallthru
      _
    // Predicated region
    $region38: #{_fused_forward_impl.1} parent=1 // pred_check
      _
    $region39: #{_fused_forward_impl.1} parent=1 // pred_check_branch
      %55 = sbr.rel (0) target = $region41
    $region40: #{_fused_forward_impl.1} parent=1 // pred_region
      %s57 = ssub.s32 2048, 2048
      %58 = vsyncadd [#allocation6], %s57
      %s59 = sshll.u32 [#allocation5], 4
      %s60 = int_to_ptr.vmem [resolvable:$true] %s59
      %65 = dma.hbm_to_vmem [thread:$0]  %s9, 2048, %s60, [#allocation6], 64, 64, 4
    $region41: #{_fused_forward_impl.1} parent=1 // pred_fallthru
      _
    // Predicated region
    $region42: #{_fused_forward_impl.1} parent=1 // pred_check
      _
    $region43: #{_fused_forward_impl.1} parent=1 // pred_check_branch
      %67 = sbr.rel (0) target = $region45
    $region44: #{_fused_forward_impl.1} parent=1 // pred_region
      _
    $region45: #{_fused_forward_impl.1} parent=1 // pred_fallthru
      _
    // Predicated region
    $region46: #{_fused_forward_impl.1} parent=1 // pred_check
      _
    $region47: #{_fused_forward_impl.1} parent=1 // pred_check_branch
      %69 = sbr.rel (0) target = $region49
    $region48: #{_fused_forward_impl.1} parent=1 // pred_region
      _
    $region49: #{_fused_forward_impl.1} parent=1 // pred_fallthru
      _
    // Predicated region
    $region50: #{_fused_forward_impl.1} parent=1 // pred_check
      _
    $region51: #{_fused_forward_impl.1} parent=1 // pred_check_branch
      %71 = sbr.rel (0) target = $region53
    $region52: #{_fused_forward_impl.1} parent=1 // pred_region
      _
    $region53: #{_fused_forward_impl.1} parent=1 // pred_fallthru
      _
    // Predicated region
    $region54: #{_fused_forward_impl.1} parent=1 // pred_check
      _
    $region55: #{_fused_forward_impl.1} parent=1 // pred_check_branch
      %73 = sbr.rel (0) target = $region57
    $region56: #{_fused_forward_impl.1} parent=1 // pred_region
      _
    $region57: #{_fused_forward_impl.1} parent=1 // pred_fallthru
      _
    // Predicated region
    $region58: #{_fused_forward_impl.1} parent=1 // pred_check
      _
    $region59: #{_fused_forward_impl.1} parent=1 // pred_check_branch
      %75 = sbr.rel (0) target = $region61
    $region60: #{_fused_forward_impl.1} parent=1 // pred_region
      _
    $region61: #{_fused_forward_impl.1} parent=1 // pred_fallthru
      _
    // Predicated region
    $region62: #{_fused_forward_impl.1} parent=1 // pred_check
      _
    $region63: #{_fused_forward_impl.1} parent=1 // pred_check_branch
      %77 = sbr.rel (0) target = $region65
    $region64: #{_fused_forward_impl.1} parent=1 // pred_region
      %s79 = ssub.s32 1024, 1024
      %80 = vsyncadd [#allocation6], %s79
      %s81 = sshll.u32 [#allocation7], 4
      %s82 = int_to_ptr.vmem [resolvable:$true] %s81
      %87 = dma.hbm_to_vmem [thread:$0]  %s15, 1024, %s82, [#allocation6], 64, 64, 4
    $region65: #{_fused_forward_impl.1} parent=1 // pred_fallthru
      _
    // Predicated region
    $region66: #{_fused_forward_impl.1} parent=1 // pred_check
      _
    $region67: #{_fused_forward_impl.1} parent=1 // pred_check_branch
      %89 = sbr.rel (0) target = $region69
    $region68: #{_fused_forward_impl.1} parent=1 // pred_region
      %s91 = ssub.s32 16, 16
      %92 = vsyncadd [#allocation9], %s91
      %s94 = sshll.u32 [#allocation8], 4
      %s95 = int_to_ptr.vmem [resolvable:$true] %s94
      %97 = dma.hbm_to_vmem [thread:$0]  %s16, 16, %s95, [#allocation9]
    $region69: #{_fused_forward_impl.1} parent=1 // pred_fallthru
      _
    // Predicated region
    $region70: #{_fused_forward_impl.1} parent=1 // pred_check
      _
    $region71: #{_fused_forward_impl.1} parent=1 // pred_check_branch
      %99 = sbr.rel (0) target = $region73
    $region72: #{_fused_forward_impl.1} parent=1 // pred_region
      %100 = dma.done [#allocation3], 8192
    $region73: #{_fused_forward_impl.1} parent=1 // pred_fallthru
      _
    // Predicated region
    $region74: #{_fused_forward_impl.1} parent=1 // pred_check
      _
    $region75: #{_fused_forward_impl.1} parent=1 // pred_check_branch
      %102 = sbr.rel (0) target = $region77
    $region76: #{_fused_forward_impl.1} parent=1 // pred_region
      %103 = dma.done [#allocation6], 2048
    $region77: #{_fused_forward_impl.1} parent=1 // pred_fallthru
      _
    // Predicated region
    $region78: #{_fused_forward_impl.1} parent=1 // pred_check
      _
    $region79: #{_fused_forward_impl.1} parent=1 // pred_check_branch
      %105 = sbr.rel (0) target = $region81
    $region80: #{_fused_forward_impl.1} parent=1 // pred_region
      %106 = dma.done [#allocation6], 1024
    $region81: #{_fused_forward_impl.1} parent=1 // pred_fallthru
      _
    // Predicated region
    $region82: #{_fused_forward_impl.1} parent=1 // pred_check
      _
    $region83: #{_fused_forward_impl.1} parent=1 // pred_check_branch
      %108 = sbr.rel (0) target = $region85
    $region84: #{_fused_forward_impl.1} parent=1 // pred_region
      %109 = dma.done [#allocation9], 16
    $region85: #{_fused_forward_impl.1} parent=1 // pred_fallthru
      _
    %v111 = vld [vmem:[%s0] sm:$0xff]
    %v112 = vld [vmem:[%s0 + $0x8] sm:$0xff]
    %v113 = vld [vmem:[%s0 + $0x10] sm:$0xff]
    %v114 = vld [vmem:[%s0 + $0x18] sm:$0xff]
    %v115 = vld [vmem:[%s0 + $0x20] sm:$0xff]
    %v116 = vld [vmem:[%s0 + $0x28] sm:$0xff]
    %v117 = vld [vmem:[%s0 + $0x30] sm:$0xff]
    %v118 = vld [vmem:[%s0 + $0x38] sm:$0xff]
    %v119 = vld [vmem:[%s0 + $0x40] sm:$0xff]
    %v120 = vld [vmem:[%s0 + $0x48] sm:$0xff]
    %v121 = vld [vmem:[%s0 + $0x50] sm:$0xff]
    %v122 = vld [vmem:[%s0 + $0x58] sm:$0xff]
    %v123 = vld [vmem:[%s0 + $0x60] sm:$0xff]
    %v124 = vld [vmem:[%s0 + $0x68] sm:$0xff]
    %v125 = vld [vmem:[%s0 + $0x70] sm:$0xff]
    %v126 = vld [vmem:[%s0 + $0x78] sm:$0xff]
    %v127 = vld [vmem:[%s0 + $0x80] sm:$0xff]
    %v128 = vld [vmem:[%s0 + $0x88] sm:$0xff]
    %v129 = vld [vmem:[%s0 + $0x90] sm:$0xff]
    %v130 = vld [vmem:[%s0 + $0x98] sm:$0xff]
    %v131 = vld [vmem:[%s0 + $0xa0] sm:$0xff]
    %v132 = vld [vmem:[%s0 + $0xa8] sm:$0xff]
    %v133 = vld [vmem:[%s0 + $0xb0] sm:$0xff]
    %v134 = vld [vmem:[%s0 + $0xb8] sm:$0xff]
    %v135 = vld [vmem:[%s0 + $0xc0] sm:$0xff]
    %v136 = vld [vmem:[%s0 + $0xc8] sm:$0xff]
    %v137 = vld [vmem:[%s0 + $0xd0] sm:$0xff]
    %v138 = vld [vmem:[%s0 + $0xd8] sm:$0xff]
    %v139 = vld [vmem:[%s0 + $0xe0] sm:$0xff]
    %v140 = vld [vmem:[%s0 + $0xe8] sm:$0xff]
    %v141 = vld [vmem:[%s0 + $0xf0] sm:$0xff]
    %v142 = vld [vmem:[%s0 + $0xf8] sm:$0xff]
    %v143 = vld [vmem:[%s1] sm:$0x1]
    %v144 = vld [vmem:[%s1 + $0x1] sm:$0x1]
    %v145 = vld [vmem:[%s1 + $0x2] sm:$0x1]
    %v146 = vld [vmem:[%s1 + $0x3] sm:$0x1]
    %v147 = vld [vmem:[%s1 + $0x4] sm:$0x1]
    %v148 = vld [vmem:[%s1 + $0x5] sm:$0x1]
    %v149 = vld [vmem:[%s1 + $0x6] sm:$0x1]
    %v150 = vld [vmem:[%s1 + $0x7] sm:$0x1]
    %v151 = vld [vmem:[%s1 + $0x8] sm:$0x1]
    %v152 = vld [vmem:[%s1 + $0x9] sm:$0x1]
    %v153 = vld [vmem:[%s1 + $0xa] sm:$0x1]
    %v154 = vld [vmem:[%s1 + $0xb] sm:$0x1]
    %v155 = vld [vmem:[%s1 + $0xc] sm:$0x1]
    %v156 = vld [vmem:[%s1 + $0xd] sm:$0x1]
    %v157 = vld [vmem:[%s1 + $0xe] sm:$0x1]
    %v158 = vld [vmem:[%s1 + $0xf] sm:$0x1]
    %v175 = vlaneseq
    %v176 = vshrl.u32 %v175, 7
    %v177 = vsub.s32 0, %v176
    %v178 = vrot.slane %v143, %v177
    %v179 = vlaneseq
    %v180 = vshrl.u32 %v179, 7
    %v181 = vsub.s32 0, %v180
    %v182 = vrot.slane %v144, %v181
    %v183 = vlaneseq
    %v184 = vshrl.u32 %v183, 7
    %v185 = vsub.s32 0, %v184
    %v186 = vrot.slane %v145, %v185
    %v187 = vlaneseq
    %v188 = vshrl.u32 %v187, 7
    %v189 = vsub.s32 0, %v188
    %v190 = vrot.slane %v146, %v189
    %v191 = vlaneseq
    %v192 = vshrl.u32 %v191, 7
    %v193 = vsub.s32 0, %v192
    %v194 = vrot.slane %v147, %v193
    %v195 = vlaneseq
    %v196 = vshrl.u32 %v195, 7
    %v197 = vsub.s32 0, %v196
    %v198 = vrot.slane %v148, %v197
    %v199 = vlaneseq
    %v200 = vshrl.u32 %v199, 7
    %v201 = vsub.s32 0, %v200
    %v202 = vrot.slane %v149, %v201
    %v203 = vlaneseq
    %v204 = vshrl.u32 %v203, 7
    %v205 = vsub.s32 0, %v204
    %v206 = vrot.slane %v150, %v205
    %v207 = vlaneseq
    %v208 = vshrl.u32 %v207, 7
    %v209 = vsub.s32 0, %v208
    %v210 = vrot.slane %v151, %v209
    %v211 = vlaneseq
    %v212 = vshrl.u32 %v211, 7
    %v213 = vsub.s32 0, %v212
    %v214 = vrot.slane %v152, %v213
    %v215 = vlaneseq
    %v216 = vshrl.u32 %v215, 7
    %v217 = vsub.s32 0, %v216
    %v218 = vrot.slane %v153, %v217
    %v219 = vlaneseq
    %v220 = vshrl.u32 %v219, 7
    %v221 = vsub.s32 0, %v220
    %v222 = vrot.slane %v154, %v221
    %v223 = vlaneseq
    %v224 = vshrl.u32 %v223, 7
    %v225 = vsub.s32 0, %v224
    %v226 = vrot.slane %v155, %v225
    %v227 = vlaneseq
    %v228 = vshrl.u32 %v227, 7
    %v229 = vsub.s32 0, %v228
    %v230 = vrot.slane %v156, %v229
    %v231 = vlaneseq
    %v232 = vshrl.u32 %v231, 7
    %v233 = vsub.s32 0, %v232
    %v234 = vrot.slane %v157, %v233
    %v235 = vlaneseq
    %v236 = vshrl.u32 %v235, 7
    %v237 = vsub.s32 0, %v236
    %v238 = vrot.slane %v158, %v237
    %v255 = vmul.f32 %v111, %v178
    %v256 = vmul.f32 %v112, %v178
    %v257 = vmul.f32 %v113, %v182
    %v258 = vmul.f32 %v114, %v182
    %v259 = vmul.f32 %v115, %v186
    %v260 = vmul.f32 %v116, %v186
    %v261 = vmul.f32 %v117, %v190
    %v262 = vmul.f32 %v118, %v190
    %v263 = vmul.f32 %v119, %v194
    %v264 = vmul.f32 %v120, %v194
    %v265 = vmul.f32 %v121, %v198
    %v266 = vmul.f32 %v122, %v198
    %v267 = vmul.f32 %v123, %v202
    %v268 = vmul.f32 %v124, %v202
    %v269 = vmul.f32 %v125, %v206
    %v270 = vmul.f32 %v126, %v206
    %v271 = vmul.f32 %v127, %v210
    %v272 = vmul.f32 %v128, %v210
    %v273 = vmul.f32 %v129, %v214
    %v274 = vmul.f32 %v130, %v214
    %v275 = vmul.f32 %v131, %v218
    %v276 = vmul.f32 %v132, %v218
    %v277 = vmul.f32 %v133, %v222
    %v278 = vmul.f32 %v134, %v222
    %v279 = vmul.f32 %v135, %v226
    %v280 = vmul.f32 %v136, %v226
    %v281 = vmul.f32 %v137, %v230
    %v282 = vmul.f32 %v138, %v230
    %v283 = vmul.f32 %v139, %v234
    %v284 = vmul.f32 %v140, %v234
    %v285 = vmul.f32 %v141, %v238
    %v286 = vmul.f32 %v142, %v238
    %v287 = vld [vmem:[%s2] sm:$0x1]
    %v288 = vld [vmem:[%s2 + $0x1] sm:$0x1]
    %v289 = vld [vmem:[%s2 + $0x2] sm:$0x1]
    %v290 = vld [vmem:[%s2 + $0x3] sm:$0x1]
    %v291 = vld [vmem:[%s2 + $0x4] sm:$0x1]
    %v292 = vld [vmem:[%s2 + $0x5] sm:$0x1]
    %v293 = vld [vmem:[%s2 + $0x6] sm:$0x1]
    %v294 = vld [vmem:[%s2 + $0x7] sm:$0x1]
    %v295 = vld [vmem:[%s2 + $0x8] sm:$0x1]
    %v296 = vld [vmem:[%s2 + $0x9] sm:$0x1]
    %v297 = vld [vmem:[%s2 + $0xa] sm:$0x1]
    %v298 = vld [vmem:[%s2 + $0xb] sm:$0x1]
    %v299 = vld [vmem:[%s2 + $0xc] sm:$0x1]
    %v300 = vld [vmem:[%s2 + $0xd] sm:$0x1]
    %v301 = vld [vmem:[%s2 + $0xe] sm:$0x1]
    %v302 = vld [vmem:[%s2 + $0xf] sm:$0x1]
    %v319 = vlaneseq
    %v320 = vshrl.u32 %v319, 7
    %v321 = vsub.s32 0, %v320
    %v322 = vrot.slane %v287, %v321
    %v323 = vlaneseq
    %v324 = vshrl.u32 %v323, 7
    %v325 = vsub.s32 0, %v324
    %v326 = vrot.slane %v288, %v325
    %v327 = vlaneseq
    %v328 = vshrl.u32 %v327, 7
    %v329 = vsub.s32 0, %v328
    %v330 = vrot.slane %v289, %v329
    %v331 = vlaneseq
    %v332 = vshrl.u32 %v331, 7
    %v333 = vsub.s32 0, %v332
    %v334 = vrot.slane %v290, %v333
    %v335 = vlaneseq
    %v336 = vshrl.u32 %v335, 7
    %v337 = vsub.s32 0, %v336
    %v338 = vrot.slane %v291, %v337
    %v339 = vlaneseq
    %v340 = vshrl.u32 %v339, 7
    %v341 = vsub.s32 0, %v340
    %v342 = vrot.slane %v292, %v341
    %v343 = vlaneseq
    %v344 = vshrl.u32 %v343, 7
    %v345 = vsub.s32 0, %v344
    %v346 = vrot.slane %v293, %v345
    %v347 = vlaneseq
    %v348 = vshrl.u32 %v347, 7
    %v349 = vsub.s32 0, %v348
    %v350 = vrot.slane %v294, %v349
    %v351 = vlaneseq
    %v352 = vshrl.u32 %v351, 7
    %v353 = vsub.s32 0, %v352
    %v354 = vrot.slane %v295, %v353
    %v355 = vlaneseq
    %v356 = vshrl.u32 %v355, 7
    %v357 = vsub.s32 0, %v356
    %v358 = vrot.slane %v296, %v357
    %v359 = vlaneseq
    %v360 = vshrl.u32 %v359, 7
    %v361 = vsub.s32 0, %v360
    %v362 = vrot.slane %v297, %v361
    %v363 = vlaneseq
    %v364 = vshrl.u32 %v363, 7
    %v365 = vsub.s32 0, %v364
    %v366 = vrot.slane %v298, %v365
    %v367 = vlaneseq
    %v368 = vshrl.u32 %v367, 7
    %v369 = vsub.s32 0, %v368
    %v370 = vrot.slane %v299, %v369
    %v371 = vlaneseq
    %v372 = vshrl.u32 %v371, 7
    %v373 = vsub.s32 0, %v372
    %v374 = vrot.slane %v300, %v373
    %v375 = vlaneseq
    %v376 = vshrl.u32 %v375, 7
    %v377 = vsub.s32 0, %v376
    %v378 = vrot.slane %v301, %v377
    %v379 = vlaneseq
    %v380 = vshrl.u32 %v379, 7
    %v381 = vsub.s32 0, %v380
    %v382 = vrot.slane %v302, %v381
    %v399 = vadd.f32 %v255, %v322
    %v400 = vadd.f32 %v256, %v322
    %v401 = vadd.f32 %v257, %v326
    %v402 = vadd.f32 %v258, %v326
    %v403 = vadd.f32 %v259, %v330
    %v404 = vadd.f32 %v260, %v330
    %v405 = vadd.f32 %v261, %v334
    %v406 = vadd.f32 %v262, %v334
    %v407 = vadd.f32 %v263, %v338
    %v408 = vadd.f32 %v264, %v338
    %v409 = vadd.f32 %v265, %v342
    %v410 = vadd.f32 %v266, %v342
    %v411 = vadd.f32 %v267, %v346
    %v412 = vadd.f32 %v268, %v346
    %v413 = vadd.f32 %v269, %v350
    %v414 = vadd.f32 %v270, %v350
    %v415 = vadd.f32 %v271, %v354
    %v416 = vadd.f32 %v272, %v354
    %v417 = vadd.f32 %v273, %v358
    %v418 = vadd.f32 %v274, %v358
    %v419 = vadd.f32 %v275, %v362
    %v420 = vadd.f32 %v276, %v362
    %v421 = vadd.f32 %v277, %v366
    %v422 = vadd.f32 %v278, %v366
    %v423 = vadd.f32 %v279, %v370
    %v424 = vadd.f32 %v280, %v370
    %v425 = vadd.f32 %v281, %v374
    %v426 = vadd.f32 %v282, %v374
    %v427 = vadd.f32 %v283, %v378
    %v428 = vadd.f32 %v284, %v378
    %v429 = vadd.f32 %v285, %v382
    %v430 = vadd.f32 %v286, %v382
    %v431 = vmax.f32 %v399, 0.0
    %v432 = vmax.f32 %v400, 0.0
    %v433 = vmax.f32 %v401, 0.0
    %v434 = vmax.f32 %v402, 0.0
    %v435 = vmax.f32 %v403, 0.0
    %v436 = vmax.f32 %v404, 0.0
    %v437 = vmax.f32 %v405, 0.0
    %v438 = vmax.f32 %v406, 0.0
    %v439 = vmax.f32 %v407, 0.0
    %v440 = vmax.f32 %v408, 0.0
    %v441 = vmax.f32 %v409, 0.0
    %v442 = vmax.f32 %v410, 0.0
    %v443 = vmax.f32 %v411, 0.0
    %v444 = vmax.f32 %v412, 0.0
    %v445 = vmax.f32 %v413, 0.0
    %v446 = vmax.f32 %v414, 0.0
    %v447 = vmax.f32 %v415, 0.0
    %v448 = vmax.f32 %v416, 0.0
    %v449 = vmax.f32 %v417, 0.0
    %v450 = vmax.f32 %v418, 0.0
    %v451 = vmax.f32 %v419, 0.0
    %v452 = vmax.f32 %v420, 0.0
    %v453 = vmax.f32 %v421, 0.0
    %v454 = vmax.f32 %v422, 0.0
    %v455 = vmax.f32 %v423, 0.0
    %v456 = vmax.f32 %v424, 0.0
    %v457 = vmax.f32 %v425, 0.0
    %v458 = vmax.f32 %v426, 0.0
    %v459 = vmax.f32 %v427, 0.0
    %v460 = vmax.f32 %v428, 0.0
    %v461 = vmax.f32 %v429, 0.0
    %v462 = vmax.f32 %v430, 0.0
    %464 = vset.pattern.permute.xlu0 0
    %465 = vperm.xlu0 %464, %v431
    %v466 = vpop.permute.xlu0 %465
    %469 = vset.pattern.permute.xlu0 0
    %470 = vperm.xlu0 %469, %v432
    %v471 = vpop.permute.xlu0 %470
    %474 = vset.pattern.permute.xlu0 0
    %475 = vperm.xlu0 %474, %v433
    %v476 = vpop.permute.xlu0 %475
    %479 = vset.pattern.permute.xlu0 0
    %480 = vperm.xlu0 %479, %v434
    %v481 = vpop.permute.xlu0 %480
    %484 = vset.pattern.permute.xlu0 0
    %485 = vperm.xlu0 %484, %v435
    %v486 = vpop.permute.xlu0 %485
    %489 = vset.pattern.permute.xlu0 0
    %490 = vperm.xlu0 %489, %v436
    %v491 = vpop.permute.xlu0 %490
    %494 = vset.pattern.permute.xlu0 0
    %495 = vperm.xlu0 %494, %v437
    %v496 = vpop.permute.xlu0 %495
    %499 = vset.pattern.permute.xlu0 0
    %500 = vperm.xlu0 %499, %v438
    %v501 = vpop.permute.xlu0 %500
    %504 = vset.pattern.permute.xlu0 0
    %505 = vperm.xlu0 %504, %v439
    %v506 = vpop.permute.xlu0 %505
    %509 = vset.pattern.permute.xlu0 0
    %510 = vperm.xlu0 %509, %v440
    %v511 = vpop.permute.xlu0 %510
    %514 = vset.pattern.permute.xlu0 0
    %515 = vperm.xlu0 %514, %v441
    %v516 = vpop.permute.xlu0 %515
    %519 = vset.pattern.permute.xlu0 0
    %520 = vperm.xlu0 %519, %v442
    %v521 = vpop.permute.xlu0 %520
    %524 = vset.pattern.permute.xlu0 0
    %525 = vperm.xlu0 %524, %v443
    %v526 = vpop.permute.xlu0 %525
    %529 = vset.pattern.permute.xlu0 0
    %530 = vperm.xlu0 %529, %v444
    %v531 = vpop.permute.xlu0 %530
    %534 = vset.pattern.permute.xlu0 0
    %535 = vperm.xlu0 %534, %v445
    %v536 = vpop.permute.xlu0 %535
    %539 = vset.pattern.permute.xlu0 0
    %540 = vperm.xlu0 %539, %v446
    %v541 = vpop.permute.xlu0 %540
    %544 = vset.pattern.permute.xlu0 0
    %545 = vperm.xlu0 %544, %v447
    %v546 = vpop.permute.xlu0 %545
    %549 = vset.pattern.permute.xlu0 0
    %550 = vperm.xlu0 %549, %v448
    %v551 = vpop.permute.xlu0 %550
    %554 = vset.pattern.permute.xlu0 0
    %555 = vperm.xlu0 %554, %v449
    %v556 = vpop.permute.xlu0 %555
    %559 = vset.pattern.permute.xlu0 0
    %560 = vperm.xlu0 %559, %v450
    %v561 = vpop.permute.xlu0 %560
    %564 = vset.pattern.permute.xlu0 0
    %565 = vperm.xlu0 %564, %v451
    %v566 = vpop.permute.xlu0 %565
    %569 = vset.pattern.permute.xlu0 0
    %570 = vperm.xlu0 %569, %v452
    %v571 = vpop.permute.xlu0 %570
    %574 = vset.pattern.permute.xlu0 0
    %575 = vperm.xlu0 %574, %v453
    %v576 = vpop.permute.xlu0 %575
    %579 = vset.pattern.permute.xlu0 0
    %580 = vperm.xlu0 %579, %v454
    %v581 = vpop.permute.xlu0 %580
    %584 = vset.pattern.permute.xlu0 0
    %585 = vperm.xlu0 %584, %v455
    %v586 = vpop.permute.xlu0 %585
    %589 = vset.pattern.permute.xlu0 0
    %590 = vperm.xlu0 %589, %v456
    %v591 = vpop.permute.xlu0 %590
    %594 = vset.pattern.permute.xlu0 0
    %595 = vperm.xlu0 %594, %v457
    %v596 = vpop.permute.xlu0 %595
    %599 = vset.pattern.permute.xlu0 0
    %600 = vperm.xlu0 %599, %v458
    %v601 = vpop.permute.xlu0 %600
    %604 = vset.pattern.permute.xlu0 0
    %605 = vperm.xlu0 %604, %v459
    %v606 = vpop.permute.xlu0 %605
    %609 = vset.pattern.permute.xlu0 0
    %610 = vperm.xlu0 %609, %v460
    %v611 = vpop.permute.xlu0 %610
    %614 = vset.pattern.permute.xlu0 0
    %615 = vperm.xlu0 %614, %v461
    %v616 = vpop.permute.xlu0 %615
    %619 = vset.pattern.permute.xlu0 0
    %620 = vperm.xlu0 %619, %v462
    %v621 = vpop.permute.xlu0 %620
    %v623 = vld [vmem:[%s3] sm:$0x7f]
    %v624 = vlaneseq
    %v625 = vshrl.u32 %v624, 7
    %v626 = vsub.s32 0, %v625
    %v627 = vrot.slane %v623, %v626
    %v628 = vmul.f32 %v627, 0.0
    %v629 = vmul.f32 %v466, %v627
    %v630 = vmul.f32 %v471, %v627
    %v631 = vmul.f32 %v476, %v627
    %v632 = vmul.f32 %v481, %v627
    %v633 = vmul.f32 %v486, %v627
    %v634 = vmul.f32 %v491, %v627
    %v635 = vmul.f32 %v496, %v627
    %v636 = vmul.f32 %v501, %v627
    %v637 = vmul.f32 %v506, %v627
    %v638 = vmul.f32 %v511, %v627
    %v639 = vmul.f32 %v516, %v627
    %v640 = vmul.f32 %v521, %v627
    %v641 = vmul.f32 %v526, %v627
    %v642 = vmul.f32 %v531, %v627
    %v643 = vmul.f32 %v536, %v627
    %v644 = vmul.f32 %v541, %v627
    %v645 = vmul.f32 %v546, %v627
    %v646 = vmul.f32 %v551, %v627
    %v647 = vmul.f32 %v556, %v627
    %v648 = vmul.f32 %v561, %v627
    %v649 = vmul.f32 %v566, %v627
    %v650 = vmul.f32 %v571, %v627
    %v651 = vmul.f32 %v576, %v627
    %v652 = vmul.f32 %v581, %v627
    %v653 = vmul.f32 %v586, %v627
    %v654 = vmul.f32 %v591, %v627
    %v655 = vlaneseq
    %v656 = vshrl.u32 %v655, 7
    %v657 = vsub.s32 1, %v656
    %v658 = vrot.slane %v623, %v657
    %v659 = vmul.f32 %v658, 0.0
    %v660 = vmul.f32 %v466, %v658
    %v661 = vmul.f32 %v471, %v658
    %v662 = vmul.f32 %v476, %v658
    %v663 = vmul.f32 %v481, %v658
    %v664 = vmul.f32 %v486, %v658
    %v665 = vmul.f32 %v491, %v658
    %v666 = vmul.f32 %v496, %v658
    %v667 = vmul.f32 %v501, %v658
    %v668 = vmul.f32 %v506, %v658
    %v669 = vmul.f32 %v511, %v658
    %v670 = vmul.f32 %v516, %v658
    %v671 = vmul.f32 %v521, %v658
    %v672 = vmul.f32 %v526, %v658
    %v673 = vmul.f32 %v531, %v658
    %v674 = vmul.f32 %v536, %v658
    %v675 = vmul.f32 %v541, %v658
    %v676 = vmul.f32 %v546, %v658
    %v677 = vmul.f32 %v551, %v658
    %v678 = vmul.f32 %v556, %v658
    %v679 = vmul.f32 %v561, %v658
    %v680 = vmul.f32 %v566, %v658
    %v681 = vmul.f32 %v571, %v658
    %v682 = vmul.f32 %v576, %v658
    %v683 = vmul.f32 %v581, %v658
    %v684 = vmul.f32 %v586, %v658
    %v685 = vmul.f32 %v591, %v658
    %v686 = vmul.f32 %v596, %v658
    %v687 = vmul.f32 %v601, %v658
    %v688 = vadd.f32 %v628, %v659
    %v689 = vadd.f32 %v628, %v660
    %v690 = vadd.f32 %v628, %v661
    %v691 = vadd.f32 %v629, %v662
    %v692 = vadd.f32 %v630, %v663
    %v693 = vadd.f32 %v631, %v664
    %v694 = vadd.f32 %v632, %v665
    %v695 = vadd.f32 %v633, %v666
    %v696 = vadd.f32 %v634, %v667
    %v697 = vadd.f32 %v635, %v668
    %v698 = vadd.f32 %v636, %v669
    %v699 = vadd.f32 %v637, %v670
    %v700 = vadd.f32 %v638, %v671
    %v701 = vadd.f32 %v639, %v672
    %v702 = vadd.f32 %v640, %v673
    %v703 = vadd.f32 %v641, %v674
    %v704 = vadd.f32 %v642, %v675
    %v705 = vadd.f32 %v643, %v676
    %v706 = vadd.f32 %v644, %v677
    %v707 = vadd.f32 %v645, %v678
    %v708 = vadd.f32 %v646, %v679
    %v709 = vadd.f32 %v647, %v680
    %v710 = vadd.f32 %v648, %v681
    %v711 = vadd.f32 %v649, %v682
    %v712 = vadd.f32 %v650, %v683
    %v713 = vadd.f32 %v651, %v684
    %v714 = vadd.f32 %v652, %v685
    %v715 = vadd.f32 %v653, %v686
    %v716 = vadd.f32 %v654, %v687
    %v717 = vlaneseq
    %v718 = vshrl.u32 %v717, 7
    %v719 = vsub.s32 2, %v718
    %v720 = vrot.slane %v623, %v719
    %v721 = vmul.f32 %v720, 0.0
    %v722 = vmul.f32 %v466, %v720
    %v723 = vmul.f32 %v471, %v720
    %v724 = vmul.f32 %v476, %v720
    %v725 = vmul.f32 %v481, %v720
    %v726 = vmul.f32 %v486, %v720
    %v727 = vmul.f32 %v491, %v720
    %v728 = vmul.f32 %v496, %v720
    %v729 = vmul.f32 %v501, %v720
    %v730 = vmul.f32 %v506, %v720
    %v731 = vmul.f32 %v511, %v720
    %v732 = vmul.f32 %v516, %v720
    %v733 = vmul.f32 %v521, %v720
    %v734 = vmul.f32 %v526, %v720
    %v735 = vmul.f32 %v531, %v720
    %v736 = vmul.f32 %v536, %v720
    %v737 = vmul.f32 %v541, %v720
    %v738 = vmul.f32 %v546, %v720
    %v739 = vmul.f32 %v551, %v720
    %v740 = vmul.f32 %v556, %v720
    %v741 = vmul.f32 %v561, %v720
    %v742 = vmul.f32 %v566, %v720
    %v743 = vmul.f32 %v571, %v720
    %v744 = vmul.f32 %v576, %v720
    %v745 = vmul.f32 %v581, %v720
    %v746 = vmul.f32 %v586, %v720
    %v747 = vmul.f32 %v591, %v720
    %v748 = vmul.f32 %v596, %v720
    %v749 = vmul.f32 %v601, %v720
    %v750 = vmul.f32 %v606, %v720
    %v751 = vmul.f32 %v611, %v720
    %v752 = vadd.f32 %v688, %v721
    %v753 = vadd.f32 %v688, %v722
    %v754 = vadd.f32 %v688, %v723
    %v755 = vadd.f32 %v689, %v724
    %v756 = vadd.f32 %v690, %v725
    %v757 = vadd.f32 %v691, %v726
    %v758 = vadd.f32 %v692, %v727
    %v759 = vadd.f32 %v693, %v728
    %v760 = vadd.f32 %v694, %v729
    %v761 = vadd.f32 %v695, %v730
    %v762 = vadd.f32 %v696, %v731
    %v763 = vadd.f32 %v697, %v732
    %v764 = vadd.f32 %v698, %v733
    %v765 = vadd.f32 %v699, %v734
    %v766 = vadd.f32 %v700, %v735
    %v767 = vadd.f32 %v701, %v736
    %v768 = vadd.f32 %v702, %v737
    %v769 = vadd.f32 %v703, %v738
    %v770 = vadd.f32 %v704, %v739
    %v771 = vadd.f32 %v705, %v740
    %v772 = vadd.f32 %v706, %v741
    %v773 = vadd.f32 %v707, %v742
    %v774 = vadd.f32 %v708, %v743
    %v775 = vadd.f32 %v709, %v744
    %v776 = vadd.f32 %v710, %v745
    %v777 = vadd.f32 %v711, %v746
    %v778 = vadd.f32 %v712, %v747
    %v779 = vadd.f32 %v713, %v748
    %v780 = vadd.f32 %v714, %v749
    %v781 = vadd.f32 %v715, %v750
    %v782 = vadd.f32 %v716, %v751
    %v783 = vlaneseq
    %v784 = vshrl.u32 %v783, 7
    %v785 = vsub.s32 3, %v784
    %v786 = vrot.slane %v623, %v785
    %v787 = vmul.f32 %v466, %v786
    %v788 = vmul.f32 %v471, %v786
    %v789 = vmul.f32 %v476, %v786
    %v790 = vmul.f32 %v481, %v786
    %v791 = vmul.f32 %v486, %v786
    %v792 = vmul.f32 %v491, %v786
    %v793 = vmul.f32 %v496, %v786
    %v794 = vmul.f32 %v501, %v786
    %v795 = vmul.f32 %v506, %v786
    %v796 = vmul.f32 %v511, %v786
    %v797 = vmul.f32 %v516, %v786
    %v798 = vmul.f32 %v521, %v786
    %v799 = vmul.f32 %v526, %v786
    %v800 = vmul.f32 %v531, %v786
    %v801 = vmul.f32 %v536, %v786
    %v802 = vmul.f32 %v541, %v786
    %v803 = vmul.f32 %v546, %v786
    %v804 = vmul.f32 %v551, %v786
    %v805 = vmul.f32 %v556, %v786
    %v806 = vmul.f32 %v561, %v786
    %v807 = vmul.f32 %v566, %v786
    %v808 = vmul.f32 %v571, %v786
    %v809 = vmul.f32 %v576, %v786
    %v810 = vmul.f32 %v581, %v786
    %v811 = vmul.f32 %v586, %v786
    %v812 = vmul.f32 %v591, %v786
    %v813 = vmul.f32 %v596, %v786
    %v814 = vmul.f32 %v601, %v786
    %v815 = vmul.f32 %v606, %v786
    %v816 = vmul.f32 %v611, %v786
    %v817 = vmul.f32 %v616, %v786
    %v818 = vmul.f32 %v621, %v786
    %v819 = vadd.f32 %v752, %v787
    %v820 = vadd.f32 %v752, %v788
    %v821 = vadd.f32 %v753, %v789
    %v822 = vadd.f32 %v754, %v790
    %v823 = vadd.f32 %v755, %v791
    %v824 = vadd.f32 %v756, %v792
    %v825 = vadd.f32 %v757, %v793
    %v826 = vadd.f32 %v758, %v794
    %v827 = vadd.f32 %v759, %v795
    %v828 = vadd.f32 %v760, %v796
    %v829 = vadd.f32 %v761, %v797
    %v830 = vadd.f32 %v762, %v798
    %v831 = vadd.f32 %v763, %v799
    %v832 = vadd.f32 %v764, %v800
    %v833 = vadd.f32 %v765, %v801
    %v834 = vadd.f32 %v766, %v802
    %v835 = vadd.f32 %v767, %v803
    %v836 = vadd.f32 %v768, %v804
    %v837 = vadd.f32 %v769, %v805
    %v838 = vadd.f32 %v770, %v806
    %v839 = vadd.f32 %v771, %v807
    %v840 = vadd.f32 %v772, %v808
    %v841 = vadd.f32 %v773, %v809
    %v842 = vadd.f32 %v774, %v810
    %v843 = vadd.f32 %v775, %v811
    %v844 = vadd.f32 %v776, %v812
    %v845 = vadd.f32 %v777, %v813
    %v846 = vadd.f32 %v778, %v814
    %v847 = vadd.f32 %v779, %v815
    %v848 = vadd.f32 %v780, %v816
    %v849 = vadd.f32 %v781, %v817
    %v850 = vadd.f32 %v782, %v818
    %v851 = vlaneseq
    %v852 = vshrl.u32 %v851, 7
    %v853 = vsub.s32 4, %v852
    %v854 = vrot.slane %v623, %v853
    %v855 = vmul.f32 %v476, %v854
    %v856 = vmul.f32 %v481, %v854
    %v857 = vmul.f32 %v486, %v854
    %v858 = vmul.f32 %v491, %v854
    %v859 = vmul.f32 %v496, %v854
    %v860 = vmul.f32 %v501, %v854
    %v861 = vmul.f32 %v506, %v854
    %v862 = vmul.f32 %v511, %v854
    %v863 = vmul.f32 %v516, %v854
    %v864 = vmul.f32 %v521, %v854
    %v865 = vmul.f32 %v526, %v854
    %v866 = vmul.f32 %v531, %v854
    %v867 = vmul.f32 %v536, %v854
    %v868 = vmul.f32 %v541, %v854
    %v869 = vmul.f32 %v546, %v854
    %v870 = vmul.f32 %v551, %v854
    %v871 = vmul.f32 %v556, %v854
    %v872 = vmul.f32 %v561, %v854
    %v873 = vmul.f32 %v566, %v854
    %v874 = vmul.f32 %v571, %v854
    %v875 = vmul.f32 %v576, %v854
    %v876 = vmul.f32 %v581, %v854
    %v877 = vmul.f32 %v586, %v854
    %v878 = vmul.f32 %v591, %v854
    %v879 = vmul.f32 %v596, %v854
    %v880 = vmul.f32 %v601, %v854
    %v881 = vmul.f32 %v606, %v854
    %v882 = vmul.f32 %v611, %v854
    %v883 = vmul.f32 %v616, %v854
    %v884 = vmul.f32 %v621, %v854
    %v885 = vmul.f32 %v854, 0.0
    %v886 = vadd.f32 %v819, %v855
    %v887 = vadd.f32 %v820, %v856
    %v888 = vadd.f32 %v821, %v857
    %v889 = vadd.f32 %v822, %v858
    %v890 = vadd.f32 %v823, %v859
    %v891 = vadd.f32 %v824, %v860
    %v892 = vadd.f32 %v825, %v861
    %v893 = vadd.f32 %v826, %v862
    %v894 = vadd.f32 %v827, %v863
    %v895 = vadd.f32 %v828, %v864
    %v896 = vadd.f32 %v829, %v865
    %v897 = vadd.f32 %v830, %v866
    %v898 = vadd.f32 %v831, %v867
    %v899 = vadd.f32 %v832, %v868
    %v900 = vadd.f32 %v833, %v869
    %v901 = vadd.f32 %v834, %v870
    %v902 = vadd.f32 %v835, %v871
    %v903 = vadd.f32 %v836, %v872
    %v904 = vadd.f32 %v837, %v873
    %v905 = vadd.f32 %v838, %v874
    %v906 = vadd.f32 %v839, %v875
    %v907 = vadd.f32 %v840, %v876
    %v908 = vadd.f32 %v841, %v877
    %v909 = vadd.f32 %v842, %v878
    %v910 = vadd.f32 %v843, %v879
    %v911 = vadd.f32 %v844, %v880
    %v912 = vadd.f32 %v845, %v881
    %v913 = vadd.f32 %v846, %v882
    %v914 = vadd.f32 %v847, %v883
    %v915 = vadd.f32 %v848, %v884
    %v916 = vadd.f32 %v849, %v885
    %v917 = vadd.f32 %v850, %v885
    %v918 = vlaneseq
    %v919 = vshrl.u32 %v918, 7
    %v920 = vsub.s32 5, %v919
    %v921 = vrot.slane %v623, %v920
    %v922 = vmul.f32 %v486, %v921
    %v923 = vmul.f32 %v491, %v921
    %v924 = vmul.f32 %v496, %v921
    %v925 = vmul.f32 %v501, %v921
    %v926 = vmul.f32 %v506, %v921
    %v927 = vmul.f32 %v511, %v921
    %v928 = vmul.f32 %v516, %v921
    %v929 = vmul.f32 %v521, %v921
    %v930 = vmul.f32 %v526, %v921
    %v931 = vmul.f32 %v531, %v921
    %v932 = vmul.f32 %v536, %v921
    %v933 = vmul.f32 %v541, %v921
    %v934 = vmul.f32 %v546, %v921
    %v935 = vmul.f32 %v551, %v921
    %v936 = vmul.f32 %v556, %v921
    %v937 = vmul.f32 %v561, %v921
    %v938 = vmul.f32 %v566, %v921
    %v939 = vmul.f32 %v571, %v921
    %v940 = vmul.f32 %v576, %v921
    %v941 = vmul.f32 %v581, %v921
    %v942 = vmul.f32 %v586, %v921
    %v943 = vmul.f32 %v591, %v921
    %v944 = vmul.f32 %v596, %v921
    %v945 = vmul.f32 %v601, %v921
    %v946 = vmul.f32 %v606, %v921
    %v947 = vmul.f32 %v611, %v921
    %v948 = vmul.f32 %v616, %v921
    %v949 = vmul.f32 %v621, %v921
    %v950 = vmul.f32 %v921, 0.0
    %v951 = vadd.f32 %v886, %v922
    %v952 = vadd.f32 %v887, %v923
    %v953 = vadd.f32 %v888, %v924
    %v954 = vadd.f32 %v889, %v925
    %v955 = vadd.f32 %v890, %v926
    %v956 = vadd.f32 %v891, %v927
    %v957 = vadd.f32 %v892, %v928
    %v958 = vadd.f32 %v893, %v929
    %v959 = vadd.f32 %v894, %v930
    %v960 = vadd.f32 %v895, %v931
    %v961 = vadd.f32 %v896, %v932
    %v962 = vadd.f32 %v897, %v933
    %v963 = vadd.f32 %v898, %v934
    %v964 = vadd.f32 %v899, %v935
    %v965 = vadd.f32 %v900, %v936
    %v966 = vadd.f32 %v901, %v937
    %v967 = vadd.f32 %v902, %v938
    %v968 = vadd.f32 %v903, %v939
    %v969 = vadd.f32 %v904, %v940
    %v970 = vadd.f32 %v905, %v941
    %v971 = vadd.f32 %v906, %v942
    %v972 = vadd.f32 %v907, %v943
    %v973 = vadd.f32 %v908, %v944
    %v974 = vadd.f32 %v909, %v945
    %v975 = vadd.f32 %v910, %v946
    %v976 = vadd.f32 %v911, %v947
    %v977 = vadd.f32 %v912, %v948
    %v978 = vadd.f32 %v913, %v949
    %v979 = vadd.f32 %v914, %v950
    %v980 = vadd.f32 %v915, %v950
    %v981 = vadd.f32 %v916, %v950
    %v982 = vadd.f32 %v917, %v950
    %v983 = vlaneseq
    %v984 = vshrl.u32 %v983, 7
    %v985 = vsub.s32 6, %v984
    %v986 = vrot.slane %v623, %v985
    %v987 = vmul.f32 %v496, %v986
    %v988 = vmul.f32 %v501, %v986
    %v989 = vmul.f32 %v506, %v986
    %v990 = vmul.f32 %v511, %v986
    %v991 = vmul.f32 %v516, %v986
    %v992 = vmul.f32 %v521, %v986
    %v993 = vmul.f32 %v526, %v986
    %v994 = vmul.f32 %v531, %v986
    %v995 = vmul.f32 %v536, %v986
    %v996 = vmul.f32 %v541, %v986
    %v997 = vmul.f32 %v546, %v986
    %v998 = vmul.f32 %v551, %v986
    %v999 = vmul.f32 %v556, %v986
    %v1000 = vmul.f32 %v561, %v986
    %v1001 = vmul.f32 %v566, %v986
    %v1002 = vmul.f32 %v571, %v986
    %v1003 = vmul.f32 %v576, %v986
    %v1004 = vmul.f32 %v581, %v986
    %v1005 = vmul.f32 %v586, %v986
    %v1006 = vmul.f32 %v591, %v986
    %v1007 = vmul.f32 %v596, %v986
    %v1008 = vmul.f32 %v601, %v986
    %v1009 = vmul.f32 %v606, %v986
    %v1010 = vmul.f32 %v611, %v986
    %v1011 = vmul.f32 %v616, %v986
    %v1012 = vmul.f32 %v621, %v986
    %v1013 = vmul.f32 %v986, 0.0
    %v1014 = vadd.f32 %v951, %v987
    %v1015 = vadd.f32 %v952, %v988
    %v1016 = vadd.f32 %v953, %v989
    %v1017 = vadd.f32 %v954, %v990
    %v1018 = vadd.f32 %v955, %v991
    %v1019 = vadd.f32 %v956, %v992
    %v1020 = vadd.f32 %v957, %v993
    %v1021 = vadd.f32 %v958, %v994
    %v1022 = vadd.f32 %v959, %v995
    %v1023 = vadd.f32 %v960, %v996
    %v1024 = vadd.f32 %v961, %v997
    %v1025 = vadd.f32 %v962, %v998
    %v1026 = vadd.f32 %v963, %v999
    %v1027 = vadd.f32 %v964, %v1000
    %v1028 = vadd.f32 %v965, %v1001
    %v1029 = vadd.f32 %v966, %v1002
    %v1030 = vadd.f32 %v967, %v1003
    %v1031 = vadd.f32 %v968, %v1004
    %v1032 = vadd.f32 %v969, %v1005
    %v1033 = vadd.f32 %v970, %v1006
    %v1034 = vadd.f32 %v971, %v1007
    %v1035 = vadd.f32 %v972, %v1008
    %v1036 = vadd.f32 %v973, %v1009
    %v1037 = vadd.f32 %v974, %v1010
    %v1038 = vadd.f32 %v975, %v1011
    %v1039 = vadd.f32 %v976, %v1012
    %v1040 = vadd.f32 %v977, %v1013
    %v1041 = vadd.f32 %v978, %v1013
    %v1042 = vadd.f32 %v979, %v1013
    %v1043 = vadd.f32 %v980, %v1013
    %v1044 = vadd.f32 %v981, %v1013
    %v1045 = vadd.f32 %v982, %v1013
    %v1046 = vld [vmem:[%s4] sm:$0x1]
    %v1048 = vlaneseq
    %v1049 = vshrl.u32 %v1048, 7
    %v1050 = vsub.s32 0, %v1049
    %v1051 = vrot.slane %v1046, %v1050
    %v1053 = vadd.f32 %v1014, %v1051
    %v1054 = vadd.f32 %v1015, %v1051
    %v1055 = vadd.f32 %v1016, %v1051
    %v1056 = vadd.f32 %v1017, %v1051
    %v1057 = vadd.f32 %v1018, %v1051
    %v1058 = vadd.f32 %v1019, %v1051
    %v1059 = vadd.f32 %v1020, %v1051
    %v1060 = vadd.f32 %v1021, %v1051
    %v1061 = vadd.f32 %v1022, %v1051
    %v1062 = vadd.f32 %v1023, %v1051
    %v1063 = vadd.f32 %v1024, %v1051
    %v1064 = vadd.f32 %v1025, %v1051
    %v1065 = vadd.f32 %v1026, %v1051
    %v1066 = vadd.f32 %v1027, %v1051
    %v1067 = vadd.f32 %v1028, %v1051
    %v1068 = vadd.f32 %v1029, %v1051
    %v1069 = vadd.f32 %v1030, %v1051
    %v1070 = vadd.f32 %v1031, %v1051
    %v1071 = vadd.f32 %v1032, %v1051
    %v1072 = vadd.f32 %v1033, %v1051
    %v1073 = vadd.f32 %v1034, %v1051
    %v1074 = vadd.f32 %v1035, %v1051
    %v1075 = vadd.f32 %v1036, %v1051
    %v1076 = vadd.f32 %v1037, %v1051
    %v1077 = vadd.f32 %v1038, %v1051
    %v1078 = vadd.f32 %v1039, %v1051
    %v1079 = vadd.f32 %v1040, %v1051
    %v1080 = vadd.f32 %v1041, %v1051
    %v1081 = vadd.f32 %v1042, %v1051
    %v1082 = vadd.f32 %v1043, %v1051
    %v1083 = vadd.f32 %v1044, %v1051
    %v1084 = vadd.f32 %v1045, %v1051
    %v1085 = vmax.f32 %v1053, 0.0
    %v1086 = vmax.f32 %v1054, 0.0
    %v1087 = vmax.f32 %v1055, 0.0
    %v1088 = vmax.f32 %v1056, 0.0
    %v1089 = vmax.f32 %v1057, 0.0
    %v1090 = vmax.f32 %v1058, 0.0
    %v1091 = vmax.f32 %v1059, 0.0
    %v1092 = vmax.f32 %v1060, 0.0
    %v1093 = vmax.f32 %v1061, 0.0
    %v1094 = vmax.f32 %v1062, 0.0
    %v1095 = vmax.f32 %v1063, 0.0
    %v1096 = vmax.f32 %v1064, 0.0
    %v1097 = vmax.f32 %v1065, 0.0
    %v1098 = vmax.f32 %v1066, 0.0
    %v1099 = vmax.f32 %v1067, 0.0
    %v1100 = vmax.f32 %v1068, 0.0
    %v1101 = vmax.f32 %v1069, 0.0
    %v1102 = vmax.f32 %v1070, 0.0
    %v1103 = vmax.f32 %v1071, 0.0
    %v1104 = vmax.f32 %v1072, 0.0
    %v1105 = vmax.f32 %v1073, 0.0
    %v1106 = vmax.f32 %v1074, 0.0
    %v1107 = vmax.f32 %v1075, 0.0
    %v1108 = vmax.f32 %v1076, 0.0
    %v1109 = vmax.f32 %v1077, 0.0
    %v1110 = vmax.f32 %v1078, 0.0
    %v1111 = vmax.f32 %v1079, 0.0
    %v1112 = vmax.f32 %v1080, 0.0
    %v1113 = vmax.f32 %v1081, 0.0
    %v1114 = vmax.f32 %v1082, 0.0
    %v1115 = vmax.f32 %v1083, 0.0
    %v1116 = vmax.f32 %v1084, 0.0
    %v1117 = vmax.f32 %v1085, %v1087
    %v1118 = vmax.f32 %v1086, %v1088
    %v1119 = vmax.f32 %v1089, %v1091
    %v1120 = vmax.f32 %v1090, %v1092
    %v1121 = vmax.f32 %v1093, %v1095
    %v1122 = vmax.f32 %v1094, %v1096
    %v1123 = vmax.f32 %v1097, %v1099
    %v1124 = vmax.f32 %v1098, %v1100
    %v1125 = vmax.f32 %v1101, %v1103
    %v1126 = vmax.f32 %v1102, %v1104
    %v1127 = vmax.f32 %v1105, %v1107
    %v1128 = vmax.f32 %v1106, %v1108
    %v1129 = vmax.f32 %v1109, %v1111
    %v1130 = vmax.f32 %v1110, %v1112
    %v1131 = vmax.f32 %v1113, %v1115
    %v1132 = vmax.f32 %v1114, %v1116
    %v1133 = vpack.c.bf16 0.0, 0.0
    %v1134 = vpack.c.bf16 %v1118, %v1117
    %v1135 = vpack.c.bf16 %v1120, %v1119
    %v1136 = vpack.c.bf16 %v1122, %v1121
    %v1137 = vpack.c.bf16 %v1124, %v1123
    %v1138 = vpack.c.bf16 %v1126, %v1125
    %v1139 = vpack.c.bf16 %v1128, %v1127
    %v1140 = vld [vmem:[%s5] sm:$0xf]
    %v1141 = vld [vmem:[%s5 + $0x4] sm:$0xf]
    %v1142 = vld [vmem:[%s5 + $0x8] sm:$0xf]
    %v1143 = vld [vmem:[%s5 + $0xc] sm:$0xf]
    %v1144 = vld [vmem:[%s5 + $0x10] sm:$0xf]
    %v1145 = vld [vmem:[%s5 + $0x14] sm:$0xf]
    %v1146 = vld [vmem:[%s5 + $0x18] sm:$0xf]
    %v1147 = vld [vmem:[%s5 + $0x1c] sm:$0xf]
    %v1148 = vld [vmem:[%s5 + $0x20] sm:$0xf]
    %v1149 = vld [vmem:[%s5 + $0x24] sm:$0xf]
    %v1150 = vld [vmem:[%s5 + $0x28] sm:$0xf]
    %v1151 = vld [vmem:[%s5 + $0x2c] sm:$0xf]
    %v1152 = vld [vmem:[%s5 + $0x30] sm:$0xf]
    %v1153 = vld [vmem:[%s5 + $0x34] sm:$0xf]
    %v1154 = vld [vmem:[%s5 + $0x38] sm:$0xf]
    %v1155 = vld [vmem:[%s5 + $0x3c] sm:$0xf]
    %v1156 = vpack.c.bf16 %v1130, %v1129
    %s1157 = scalar_lea.vmem %s5, 64
    %v1158 = vld [vmem:[%s1157] sm:$0xf]
    %v1159 = vld [vmem:[%s1157 + $0x4] sm:$0xf]
    %v1160 = vld [vmem:[%s1157 + $0x8] sm:$0xf]
    %v1161 = vld [vmem:[%s1157 + $0xc] sm:$0xf]
    %v1162 = vld [vmem:[%s1157 + $0x10] sm:$0xf]
    %v1163 = vld [vmem:[%s1157 + $0x14] sm:$0xf]
    %v1164 = vld [vmem:[%s1157 + $0x18] sm:$0xf]
    %v1165 = vld [vmem:[%s1157 + $0x1c] sm:$0xf]
    %v1166 = vld [vmem:[%s1157 + $0x20] sm:$0xf]
    %v1167 = vld [vmem:[%s1157 + $0x24] sm:$0xf]
    %v1168 = vld [vmem:[%s1157 + $0x28] sm:$0xf]
    %v1169 = vld [vmem:[%s1157 + $0x2c] sm:$0xf]
    %v1170 = vld [vmem:[%s1157 + $0x30] sm:$0xf]
    %v1171 = vld [vmem:[%s1157 + $0x34] sm:$0xf]
    %v1172 = vld [vmem:[%s1157 + $0x38] sm:$0xf]
    %v1173 = vld [vmem:[%s1157 + $0x3c] sm:$0xf]
    %v1190 = vunpack.c.l.b16 %v1158
    %v1191 = vunpack.c.l.b16 %v1159
    %v1192 = vunpack.c.l.b16 %v1160
    %v1193 = vunpack.c.l.b16 %v1161
    %v1194 = vunpack.c.l.b16 %v1162
    %v1195 = vunpack.c.l.b16 %v1163
    %v1196 = vunpack.c.l.b16 %v1164
    %v1197 = vunpack.c.l.b16 %v1165
    %v1198 = vunpack.c.l.b16 %v1166
    %v1199 = vunpack.c.l.b16 %v1167
    %v1200 = vunpack.c.l.b16 %v1168
    %v1201 = vunpack.c.l.b16 %v1169
    %v1202 = vunpack.c.l.b16 %v1170
    %v1203 = vunpack.c.l.b16 %v1171
    %v1204 = vunpack.c.l.b16 %v1172
    %v1205 = vunpack.c.l.b16 %v1173
    %v1206 = vpack.c.b16 %v1191, %v1190
    %v1207 = vpack.c.b16 %v1193, %v1192
    %v1208 = vpack.c.b16 %v1195, %v1194
    %v1209 = vpack.c.b16 %v1197, %v1196
    %v1210 = vpack.c.b16 %v1199, %v1198
    %v1211 = vpack.c.b16 %v1201, %v1200
    %v1212 = vpack.c.b16 %v1203, %v1202
    %v1213 = vpack.c.b16 %v1205, %v1204
    %1222 = vmatprep.subr.bf16.mxu0 0
    %1223 = vmatpush1.bf16.msra.mxu0 %v1213
    %1224 = vmatprep.subr.bf16.mxu0 0
    %1225 = vmatpush1.bf16.msra.mxu0 %v1212
    %1226 = vmatprep.subr.bf16.mxu0 0
    %1227 = vmatpush1.bf16.msra.mxu0 %v1211
    %1228 = vmatprep.subr.bf16.mxu0 0
    %1229 = vmatpush1.bf16.msra.mxu0 %v1210
    %1230 = vmatprep.subr.bf16.mxu0 0
    %1231 = vmatpush1.bf16.msra.mxu0 %v1209
    %1232 = vmatprep.subr.bf16.mxu0 0
    %1233 = vmatpush1.bf16.msra.mxu0 %v1208
    %1234 = vmatprep.subr.bf16.mxu0 0
    %1235 = vmatpush1.bf16.msra.mxu0 %v1207
    %1236 = vmatprep.subr.bf16.mxu0 0
    %1237 = vmatpush1.bf16.msra.mxu0 %v1206
    %1238 = vmatprep.subr.bf16.mxu0 0
    %1239 = vmatpush2.bf16.msra.mxu0 0
    %1240 = vmatprep.subr.bf16.mxu0 0
    %1241 = vmatpush2.bf16.msra.mxu0 0
    %1242 = vmatprep.subr.bf16.mxu0 0
    %1243 = vmatpush2.bf16.msra.mxu0 0
    %1244 = vmatprep.subr.bf16.mxu0 0
    %1245 = vmatpush2.bf16.msra.mxu0 0
    %1246 = vmatprep.subr.bf16.mxu0 0
    %1247 = vmatpush2.bf16.msra.mxu0 0
    %1248 = vmatprep.subr.bf16.mxu0 0
    %1249 = vmatpush2.bf16.msra.mxu0 0
    %1250 = vmatprep.subr.bf16.mxu0 0
    %1251 = vmatpush2.bf16.msra.mxu0 0
    %1252 = vmatprep.subr.bf16.mxu0 0
    %1253 = vmatpush2.bf16.msra.mxu0 0
    %1254 = vmatprep.mubr.bf16.mxu0 0
    %1255 = vmatmul.mubr.bf16.gmra.mxu0 %v1133
    %v1256 = vpop.f32.mrf.mxu0
    %v1257 = vadd.f32 0.0, %v1256
    %v1258 = vpop.f32.mrf.mxu0
    %v1259 = vpop.f32.mrf.mxu0
    %v1260 = vadd.f32 0.0, %v1259
    %v1261 = vpop.f32.mrf.mxu0
    %1262 = vmatprep.mubr.bf16.mxu0 0
    %1263 = vmatmul.mubr.bf16.gmra.mxu0 %v1134
    %v1264 = vpop.f32.mrf.mxu0
    %v1265 = vadd.f32 0.0, %v1264
    %v1266 = vpop.f32.mrf.mxu0
    %v1267 = vpop.f32.mrf.mxu0
    %v1268 = vadd.f32 0.0, %v1267
    %v1269 = vpop.f32.mrf.mxu0
    %1270 = vmatprep.mubr.bf16.mxu0 0
    %1271 = vmatmul.mubr.bf16.gmra.mxu0 %v1135
    %v1272 = vpop.f32.mrf.mxu0
    %v1273 = vadd.f32 0.0, %v1272
    %v1274 = vpop.f32.mrf.mxu0
    %v1275 = vpop.f32.mrf.mxu0
    %v1276 = vadd.f32 0.0, %v1275
    %v1277 = vpop.f32.mrf.mxu0
    %1278 = vmatprep.mubr.bf16.mxu0 0
    %1279 = vmatmul.mubr.bf16.gmra.mxu0 %v1136
    %v1280 = vpop.f32.mrf.mxu0
    %v1281 = vadd.f32 0.0, %v1280
    %v1282 = vpop.f32.mrf.mxu0
    %v1283 = vpop.f32.mrf.mxu0
    %v1284 = vadd.f32 0.0, %v1283
    %v1285 = vpop.f32.mrf.mxu0
    %1286 = vmatprep.mubr.bf16.mxu0 0
    %1287 = vmatmul.mubr.bf16.gmra.mxu0 %v1137
    %v1288 = vpop.f32.mrf.mxu0
    %v1289 = vadd.f32 0.0, %v1288
    %v1290 = vpop.f32.mrf.mxu0
    %v1291 = vpop.f32.mrf.mxu0
    %v1292 = vadd.f32 0.0, %v1291
    %v1293 = vpop.f32.mrf.mxu0
    %1294 = vmatprep.mubr.bf16.mxu0 0
    %1295 = vmatmul.mubr.bf16.gmra.mxu0 %v1138
    %v1296 = vpop.f32.mrf.mxu0
    %v1297 = vadd.f32 0.0, %v1296
    %v1298 = vpop.f32.mrf.mxu0
    %v1299 = vpop.f32.mrf.mxu0
    %v1300 = vadd.f32 0.0, %v1299
    %v1301 = vpop.f32.mrf.mxu0
    %1302 = vmatprep.mubr.bf16.mxu0 0
    %1303 = vmatmul.mubr.bf16.gmra.mxu0 %v1139
    %v1304 = vpop.f32.mrf.mxu0
    %v1305 = vadd.f32 0.0, %v1304
    %v1306 = vpop.f32.mrf.mxu0
    %v1307 = vpop.f32.mrf.mxu0
    %v1308 = vadd.f32 0.0, %v1307
    %v1309 = vpop.f32.mrf.mxu0
    %1310 = vmatprep.mubr.bf16.mxu0 0
    %1311 = vmatmul.mubr.bf16.gmra.mxu0 %v1156
    %v1312 = vpop.f32.mrf.mxu0
    %v1313 = vadd.f32 0.0, %v1312
    %v1314 = vpop.f32.mrf.mxu0
    %v1315 = vpop.f32.mrf.mxu0
    %v1316 = vadd.f32 0.0, %v1315
    %v1317 = vpop.f32.mrf.mxu0
    %1318 = vdwg.mxu0
    %v1335 = vunpack.c.l.b16 %v1140
    %v1336 = vunpack.c.l.b16 %v1141
    %v1337 = vunpack.c.l.b16 %v1142
    %v1338 = vunpack.c.l.b16 %v1143
    %v1339 = vunpack.c.l.b16 %v1144
    %v1340 = vunpack.c.l.b16 %v1145
    %v1341 = vunpack.c.l.b16 %v1146
    %v1342 = vunpack.c.l.b16 %v1147
    %v1343 = vunpack.c.l.b16 %v1148
    %v1344 = vunpack.c.l.b16 %v1149
    %v1345 = vunpack.c.l.b16 %v1150
    %v1346 = vunpack.c.l.b16 %v1151
    %v1347 = vunpack.c.l.b16 %v1152
    %v1348 = vunpack.c.l.b16 %v1153
    %v1349 = vunpack.c.l.b16 %v1154
    %v1350 = vunpack.c.l.b16 %v1155
    %v1351 = vpack.c.b16 %v1336, %v1335
    %v1352 = vpack.c.b16 %v1338, %v1337
    %v1353 = vpack.c.b16 %v1340, %v1339
    %v1354 = vpack.c.b16 %v1342, %v1341
    %v1355 = vpack.c.b16 %v1344, %v1343
    %v1356 = vpack.c.b16 %v1346, %v1345
    %v1357 = vpack.c.b16 %v1348, %v1347
    %v1358 = vpack.c.b16 %v1350, %v1349
    %1367 = vmatprep.subr.bf16.mxu0 0
    %1368 = vmatpush1.bf16.msra.mxu0 %v1358
    %1369 = vmatprep.subr.bf16.mxu0 0
    %1370 = vmatpush1.bf16.msra.mxu0 %v1357
    %1371 = vmatprep.subr.bf16.mxu0 0
    %1372 = vmatpush1.bf16.msra.mxu0 %v1356
    %1373 = vmatprep.subr.bf16.mxu0 0
    %1374 = vmatpush1.bf16.msra.mxu0 %v1355
    %1375 = vmatprep.subr.bf16.mxu0 0
    %1376 = vmatpush1.bf16.msra.mxu0 %v1354
    %1377 = vmatprep.subr.bf16.mxu0 0
    %1378 = vmatpush1.bf16.msra.mxu0 %v1353
    %1379 = vmatprep.subr.bf16.mxu0 0
    %1380 = vmatpush1.bf16.msra.mxu0 %v1352
    %1381 = vmatprep.subr.bf16.mxu0 0
    %1382 = vmatpush1.bf16.msra.mxu0 %v1351
    %1383 = vmatprep.subr.bf16.mxu0 0
    %1384 = vmatpush2.bf16.msra.mxu0 0
    %1385 = vmatprep.subr.bf16.mxu0 0
    %1386 = vmatpush2.bf16.msra.mxu0 0
    %1387 = vmatprep.subr.bf16.mxu0 0
    %1388 = vmatpush2.bf16.msra.mxu0 0
    %1389 = vmatprep.subr.bf16.mxu0 0
    %1390 = vmatpush2.bf16.msra.mxu0 0
    %1391 = vmatprep.subr.bf16.mxu0 0
    %1392 = vmatpush2.bf16.msra.mxu0 0
    %1393 = vmatprep.subr.bf16.mxu0 0
    %1394 = vmatpush2.bf16.msra.mxu0 0
    %1395 = vmatprep.subr.bf16.mxu0 0
    %1396 = vmatpush2.bf16.msra.mxu0 0
    %1397 = vmatprep.subr.bf16.mxu0 0
    %1398 = vmatpush2.bf16.msra.mxu0 0
    %1399 = vmatprep.mubr.bf16.mxu0 0
    %1400 = vmatmul.mubr.bf16.gmra.mxu0 %v1133
    %v1401 = vpop.f32.mrf.mxu0
    %v1402 = vadd.f32 %v1257, %v1401
    %v1403 = vpop.f32.mrf.mxu0
    %v1404 = vpop.f32.mrf.mxu0
    %v1405 = vadd.f32 %v1260, %v1404
    %v1406 = vpop.f32.mrf.mxu0
    %1407 = vmatprep.mubr.bf16.mxu0 0
    %1408 = vmatmul.mubr.bf16.gmra.mxu0 %v1133
    %v1409 = vpop.f32.mrf.mxu0
    %v1410 = vadd.f32 %v1265, %v1409
    %v1411 = vpop.f32.mrf.mxu0
    %v1412 = vpop.f32.mrf.mxu0
    %v1413 = vadd.f32 %v1268, %v1412
    %v1414 = vpop.f32.mrf.mxu0
    %1415 = vmatprep.mubr.bf16.mxu0 0
    %1416 = vmatmul.mubr.bf16.gmra.mxu0 %v1134
    %v1417 = vpop.f32.mrf.mxu0
    %v1418 = vadd.f32 %v1273, %v1417
    %v1419 = vpop.f32.mrf.mxu0
    %v1420 = vpop.f32.mrf.mxu0
    %v1421 = vadd.f32 %v1276, %v1420
    %v1422 = vpop.f32.mrf.mxu0
    %1423 = vmatprep.mubr.bf16.mxu0 0
    %1424 = vmatmul.mubr.bf16.gmra.mxu0 %v1135
    %v1425 = vpop.f32.mrf.mxu0
    %v1426 = vadd.f32 %v1281, %v1425
    %v1427 = vpop.f32.mrf.mxu0
    %v1428 = vpop.f32.mrf.mxu0
    %v1429 = vadd.f32 %v1284, %v1428
    %v1430 = vpop.f32.mrf.mxu0
    %1431 = vmatprep.mubr.bf16.mxu0 0
    %1432 = vmatmul.mubr.bf16.gmra.mxu0 %v1136
    %v1433 = vpop.f32.mrf.mxu0
    %v1434 = vadd.f32 %v1289, %v1433
    %v1435 = vpop.f32.mrf.mxu0
    %v1436 = vpop.f32.mrf.mxu0
    %v1437 = vadd.f32 %v1292, %v1436
    %v1438 = vpop.f32.mrf.mxu0
    %1439 = vmatprep.mubr.bf16.mxu0 0
    %1440 = vmatmul.mubr.bf16.gmra.mxu0 %v1137
    %v1441 = vpop.f32.mrf.mxu0
    %v1442 = vadd.f32 %v1297, %v1441
    %v1443 = vpop.f32.mrf.mxu0
    %v1444 = vpop.f32.mrf.mxu0
    %v1445 = vadd.f32 %v1300, %v1444
    %v1446 = vpop.f32.mrf.mxu0
    %1447 = vmatprep.mubr.bf16.mxu0 0
    %1448 = vmatmul.mubr.bf16.gmra.mxu0 %v1138
    %v1449 = vpop.f32.mrf.mxu0
    %v1450 = vadd.f32 %v1305, %v1449
    %v1451 = vpop.f32.mrf.mxu0
    %v1452 = vpop.f32.mrf.mxu0
    %v1453 = vadd.f32 %v1308, %v1452
    %v1454 = vpop.f32.mrf.mxu0
    %1455 = vmatprep.mubr.bf16.mxu0 0
    %1456 = vmatmul.mubr.bf16.gmra.mxu0 %v1139
    %v1457 = vpop.f32.mrf.mxu0
    %v1458 = vadd.f32 %v1313, %v1457
    %v1459 = vpop.f32.mrf.mxu0
    %v1460 = vpop.f32.mrf.mxu0
    %v1461 = vadd.f32 %v1316, %v1460
    %v1462 = vpop.f32.mrf.mxu0
    %1463 = vdwg.mxu0
    %v1464 = vpack.c.bf16 %v1132, %v1131
    %s1465 = scalar_lea.vmem %s5, 128
    %v1466 = vld [vmem:[%s1465] sm:$0xf]
    %v1467 = vld [vmem:[%s1465 + $0x4] sm:$0xf]
    %v1468 = vld [vmem:[%s1465 + $0x8] sm:$0xf]
    %v1469 = vld [vmem:[%s1465 + $0xc] sm:$0xf]
    %v1470 = vld [vmem:[%s1465 + $0x10] sm:$0xf]
    %v1471 = vld [vmem:[%s1465 + $0x14] sm:$0xf]
    %v1472 = vld [vmem:[%s1465 + $0x18] sm:$0xf]
    %v1473 = vld [vmem:[%s1465 + $0x1c] sm:$0xf]
    %v1474 = vld [vmem:[%s1465 + $0x20] sm:$0xf]
    %v1475 = vld [vmem:[%s1465 + $0x24] sm:$0xf]
    %v1476 = vld [vmem:[%s1465 + $0x28] sm:$0xf]
    %v1477 = vld [vmem:[%s1465 + $0x2c] sm:$0xf]
    %v1478 = vld [vmem:[%s1465 + $0x30] sm:$0xf]
    %v1479 = vld [vmem:[%s1465 + $0x34] sm:$0xf]
    %v1480 = vld [vmem:[%s1465 + $0x38] sm:$0xf]
    %v1481 = vld [vmem:[%s1465 + $0x3c] sm:$0xf]
    %v1498 = vunpack.c.l.b16 %v1466
    %v1499 = vunpack.c.l.b16 %v1467
    %v1500 = vunpack.c.l.b16 %v1468
    %v1501 = vunpack.c.l.b16 %v1469
    %v1502 = vunpack.c.l.b16 %v1470
    %v1503 = vunpack.c.l.b16 %v1471
    %v1504 = vunpack.c.l.b16 %v1472
    %v1505 = vunpack.c.l.b16 %v1473
    %v1506 = vunpack.c.l.b16 %v1474
    %v1507 = vunpack.c.l.b16 %v1475
    %v1508 = vunpack.c.l.b16 %v1476
    %v1509 = vunpack.c.l.b16 %v1477
    %v1510 = vunpack.c.l.b16 %v1478
    %v1511 = vunpack.c.l.b16 %v1479
    %v1512 = vunpack.c.l.b16 %v1480
    %v1513 = vunpack.c.l.b16 %v1481
    %v1514 = vpack.c.b16 %v1499, %v1498
    %v1515 = vpack.c.b16 %v1501, %v1500
    %v1516 = vpack.c.b16 %v1503, %v1502
    %v1517 = vpack.c.b16 %v1505, %v1504
    %v1518 = vpack.c.b16 %v1507, %v1506
    %v1519 = vpack.c.b16 %v1509, %v1508
    %v1520 = vpack.c.b16 %v1511, %v1510
    %v1521 = vpack.c.b16 %v1513, %v1512
    %1530 = vmatprep.subr.bf16.mxu0 0
    %1531 = vmatpush1.bf16.msra.mxu0 %v1521
    %1532 = vmatprep.subr.bf16.mxu0 0
    %1533 = vmatpush1.bf16.msra.mxu0 %v1520
    %1534 = vmatprep.subr.bf16.mxu0 0
    %1535 = vmatpush1.bf16.msra.mxu0 %v1519
    %1536 = vmatprep.subr.bf16.mxu0 0
    %1537 = vmatpush1.bf16.msra.mxu0 %v1518
    %1538 = vmatprep.subr.bf16.mxu0 0
    %1539 = vmatpush1.bf16.msra.mxu0 %v1517
    %1540 = vmatprep.subr.bf16.mxu0 0
    %1541 = vmatpush1.bf16.msra.mxu0 %v1516
    %1542 = vmatprep.subr.bf16.mxu0 0
    %1543 = vmatpush1.bf16.msra.mxu0 %v1515
    %1544 = vmatprep.subr.bf16.mxu0 0
    %1545 = vmatpush1.bf16.msra.mxu0 %v1514
    %1546 = vmatprep.subr.bf16.mxu0 0
    %1547 = vmatpush2.bf16.msra.mxu0 0
    %1548 = vmatprep.subr.bf16.mxu0 0
    %1549 = vmatpush2.bf16.msra.mxu0 0
    %1550 = vmatprep.subr.bf16.mxu0 0
    %1551 = vmatpush2.bf16.msra.mxu0 0
    %1552 = vmatprep.subr.bf16.mxu0 0
    %1553 = vmatpush2.bf16.msra.mxu0 0
    %1554 = vmatprep.subr.bf16.mxu0 0
    %1555 = vmatpush2.bf16.msra.mxu0 0
    %1556 = vmatprep.subr.bf16.mxu0 0
    %1557 = vmatpush2.bf16.msra.mxu0 0
    %1558 = vmatprep.subr.bf16.mxu0 0
    %1559 = vmatpush2.bf16.msra.mxu0 0
    %1560 = vmatprep.subr.bf16.mxu0 0
    %1561 = vmatpush2.bf16.msra.mxu0 0
    %1562 = vmatprep.mubr.bf16.mxu0 0
    %1563 = vmatmul.mubr.bf16.gmra.mxu0 %v1134
    %v1564 = vpop.f32.mrf.mxu0
    %v1565 = vadd.f32 0.0, %v1564
    %v1566 = vpop.f32.mrf.mxu0
    %v1567 = vpop.f32.mrf.mxu0
    %v1568 = vadd.f32 0.0, %v1567
    %v1569 = vpop.f32.mrf.mxu0
    %1570 = vmatprep.mubr.bf16.mxu0 0
    %1571 = vmatmul.mubr.bf16.gmra.mxu0 %v1135
    %v1572 = vpop.f32.mrf.mxu0
    %v1573 = vadd.f32 0.0, %v1572
    %v1574 = vpop.f32.mrf.mxu0
    %v1575 = vpop.f32.mrf.mxu0
    %v1576 = vadd.f32 0.0, %v1575
    %v1577 = vpop.f32.mrf.mxu0
    %1578 = vmatprep.mubr.bf16.mxu0 0
    %1579 = vmatmul.mubr.bf16.gmra.mxu0 %v1136
    %v1580 = vpop.f32.mrf.mxu0
    %v1581 = vadd.f32 0.0, %v1580
    %v1582 = vpop.f32.mrf.mxu0
    %v1583 = vpop.f32.mrf.mxu0
    %v1584 = vadd.f32 0.0, %v1583
    %v1585 = vpop.f32.mrf.mxu0
    %1586 = vmatprep.mubr.bf16.mxu0 0
    %1587 = vmatmul.mubr.bf16.gmra.mxu0 %v1137
    %v1588 = vpop.f32.mrf.mxu0
    %v1589 = vadd.f32 0.0, %v1588
    %v1590 = vpop.f32.mrf.mxu0
    %v1591 = vpop.f32.mrf.mxu0
    %v1592 = vadd.f32 0.0, %v1591
    %v1593 = vpop.f32.mrf.mxu0
    %1594 = vmatprep.mubr.bf16.mxu0 0
    %1595 = vmatmul.mubr.bf16.gmra.mxu0 %v1138
    %v1596 = vpop.f32.mrf.mxu0
    %v1597 = vadd.f32 0.0, %v1596
    %v1598 = vpop.f32.mrf.mxu0
    %v1599 = vpop.f32.mrf.mxu0
    %v1600 = vadd.f32 0.0, %v1599
    %v1601 = vpop.f32.mrf.mxu0
    %1602 = vmatprep.mubr.bf16.mxu0 0
    %1603 = vmatmul.mubr.bf16.gmra.mxu0 %v1139
    %v1604 = vpop.f32.mrf.mxu0
    %v1605 = vadd.f32 0.0, %v1604
    %v1606 = vpop.f32.mrf.mxu0
    %v1607 = vpop.f32.mrf.mxu0
    %v1608 = vadd.f32 0.0, %v1607
    %v1609 = vpop.f32.mrf.mxu0
    %1610 = vmatprep.mubr.bf16.mxu0 0
    %1611 = vmatmul.mubr.bf16.gmra.mxu0 %v1156
    %v1612 = vpop.f32.mrf.mxu0
    %v1613 = vadd.f32 0.0, %v1612
    %v1614 = vpop.f32.mrf.mxu0
    %v1615 = vpop.f32.mrf.mxu0
    %v1616 = vadd.f32 0.0, %v1615
    %v1617 = vpop.f32.mrf.mxu0
    %1618 = vmatprep.mubr.bf16.mxu0 0
    %1619 = vmatmul.mubr.bf16.gmra.mxu0 %v1464
    %v1620 = vpop.f32.mrf.mxu0
    %v1621 = vadd.f32 0.0, %v1620
    %v1622 = vpop.f32.mrf.mxu0
    %v1623 = vpop.f32.mrf.mxu0
    %v1624 = vadd.f32 0.0, %v1623
    %v1625 = vpop.f32.mrf.mxu0
    %1626 = vdwg.mxu0
    %v1627 = vadd.f32 %v1402, %v1565
    %v1628 = vadd.f32 %v1405, %v1568
    %v1629 = vadd.f32 %v1410, %v1573
    %v1630 = vadd.f32 %v1413, %v1576
    %v1631 = vadd.f32 %v1418, %v1581
    %v1632 = vadd.f32 %v1421, %v1584
    %v1633 = vadd.f32 %v1426, %v1589
    %v1634 = vadd.f32 %v1429, %v1592
    %v1635 = vadd.f32 %v1434, %v1597
    %v1636 = vadd.f32 %v1437, %v1600
    %v1637 = vadd.f32 %v1442, %v1605
    %v1638 = vadd.f32 %v1445, %v1608
    %v1639 = vadd.f32 %v1450, %v1613
    %v1640 = vadd.f32 %v1453, %v1616
    %v1641 = vadd.f32 %v1458, %v1621
    %v1642 = vadd.f32 %v1461, %v1624
    %s1643 = scalar_lea.vmem %s5, 192
    %v1644 = vld [vmem:[%s1643] sm:$0xf]
    %v1645 = vld [vmem:[%s1643 + $0x4] sm:$0xf]
    %v1646 = vld [vmem:[%s1643 + $0x8] sm:$0xf]
    %v1647 = vld [vmem:[%s1643 + $0xc] sm:$0xf]
    %v1648 = vld [vmem:[%s1643 + $0x10] sm:$0xf]
    %v1649 = vld [vmem:[%s1643 + $0x14] sm:$0xf]
    %v1650 = vld [vmem:[%s1643 + $0x18] sm:$0xf]
    %v1651 = vld [vmem:[%s1643 + $0x1c] sm:$0xf]
    %v1652 = vld [vmem:[%s1643 + $0x20] sm:$0xf]
    %v1653 = vld [vmem:[%s1643 + $0x24] sm:$0xf]
    %v1654 = vld [vmem:[%s1643 + $0x28] sm:$0xf]
    %v1655 = vld [vmem:[%s1643 + $0x2c] sm:$0xf]
    %v1656 = vld [vmem:[%s1643 + $0x30] sm:$0xf]
    %v1657 = vld [vmem:[%s1643 + $0x34] sm:$0xf]
    %v1658 = vld [vmem:[%s1643 + $0x38] sm:$0xf]
    %v1659 = vld [vmem:[%s1643 + $0x3c] sm:$0xf]
    %v1676 = vunpack.c.l.b16 %v1644
    %v1677 = vunpack.c.l.b16 %v1645
    %v1678 = vunpack.c.l.b16 %v1646
    %v1679 = vunpack.c.l.b16 %v1647
    %v1680 = vunpack.c.l.b16 %v1648
    %v1681 = vunpack.c.l.b16 %v1649
    %v1682 = vunpack.c.l.b16 %v1650
    %v1683 = vunpack.c.l.b16 %v1651
    %v1684 = vunpack.c.l.b16 %v1652
    %v1685 = vunpack.c.l.b16 %v1653
    %v1686 = vunpack.c.l.b16 %v1654
    %v1687 = vunpack.c.l.b16 %v1655
    %v1688 = vunpack.c.l.b16 %v1656
    %v1689 = vunpack.c.l.b16 %v1657
    %v1690 = vunpack.c.l.b16 %v1658
    %v1691 = vunpack.c.l.b16 %v1659
    %v1692 = vpack.c.b16 %v1677, %v1676
    %v1693 = vpack.c.b16 %v1679, %v1678
    %v1694 = vpack.c.b16 %v1681, %v1680
    %v1695 = vpack.c.b16 %v1683, %v1682
    %v1696 = vpack.c.b16 %v1685, %v1684
    %v1697 = vpack.c.b16 %v1687, %v1686
    %v1698 = vpack.c.b16 %v1689, %v1688
    %v1699 = vpack.c.b16 %v1691, %v1690
    %1708 = vmatprep.subr.bf16.mxu0 0
    %1709 = vmatpush1.bf16.msra.mxu0 %v1699
    %1710 = vmatprep.subr.bf16.mxu0 0
    %1711 = vmatpush1.bf16.msra.mxu0 %v1698
    %1712 = vmatprep.subr.bf16.mxu0 0
    %1713 = vmatpush1.bf16.msra.mxu0 %v1697
    %1714 = vmatprep.subr.bf16.mxu0 0
    %1715 = vmatpush1.bf16.msra.mxu0 %v1696
    %1716 = vmatprep.subr.bf16.mxu0 0
    %1717 = vmatpush1.bf16.msra.mxu0 %v1695
    %1718 = vmatprep.subr.bf16.mxu0 0
    %1719 = vmatpush1.bf16.msra.mxu0 %v1694
    %1720 = vmatprep.subr.bf16.mxu0 0
    %1721 = vmatpush1.bf16.msra.mxu0 %v1693
    %1722 = vmatprep.subr.bf16.mxu0 0
    %1723 = vmatpush1.bf16.msra.mxu0 %v1692
    %1724 = vmatprep.subr.bf16.mxu0 0
    %1725 = vmatpush2.bf16.msra.mxu0 0
    %1726 = vmatprep.subr.bf16.mxu0 0
    %1727 = vmatpush2.bf16.msra.mxu0 0
    %1728 = vmatprep.subr.bf16.mxu0 0
    %1729 = vmatpush2.bf16.msra.mxu0 0
    %1730 = vmatprep.subr.bf16.mxu0 0
    %1731 = vmatpush2.bf16.msra.mxu0 0
    %1732 = vmatprep.subr.bf16.mxu0 0
    %1733 = vmatpush2.bf16.msra.mxu0 0
    %1734 = vmatprep.subr.bf16.mxu0 0
    %1735 = vmatpush2.bf16.msra.mxu0 0
    %1736 = vmatprep.subr.bf16.mxu0 0
    %1737 = vmatpush2.bf16.msra.mxu0 0
    %1738 = vmatprep.subr.bf16.mxu0 0
    %1739 = vmatpush2.bf16.msra.mxu0 0
    %1740 = vmatprep.mubr.bf16.mxu0 0
    %1741 = vmatmul.mubr.bf16.gmra.mxu0 %v1135
    %v1742 = vpop.f32.mrf.mxu0
    %v1743 = vadd.f32 0.0, %v1742
    %v1744 = vpop.f32.mrf.mxu0
    %v1745 = vpop.f32.mrf.mxu0
    %v1746 = vadd.f32 0.0, %v1745
    %v1747 = vpop.f32.mrf.mxu0
    %1748 = vmatprep.mubr.bf16.mxu0 0
    %1749 = vmatmul.mubr.bf16.gmra.mxu0 %v1136
    %v1750 = vpop.f32.mrf.mxu0
    %v1751 = vadd.f32 0.0, %v1750
    %v1752 = vpop.f32.mrf.mxu0
    %v1753 = vpop.f32.mrf.mxu0
    %v1754 = vadd.f32 0.0, %v1753
    %v1755 = vpop.f32.mrf.mxu0
    %1756 = vmatprep.mubr.bf16.mxu0 0
    %1757 = vmatmul.mubr.bf16.gmra.mxu0 %v1137
    %v1758 = vpop.f32.mrf.mxu0
    %v1759 = vadd.f32 0.0, %v1758
    %v1760 = vpop.f32.mrf.mxu0
    %v1761 = vpop.f32.mrf.mxu0
    %v1762 = vadd.f32 0.0, %v1761
    %v1763 = vpop.f32.mrf.mxu0
    %1764 = vmatprep.mubr.bf16.mxu0 0
    %1765 = vmatmul.mubr.bf16.gmra.mxu0 %v1138
    %v1766 = vpop.f32.mrf.mxu0
    %v1767 = vadd.f32 0.0, %v1766
    %v1768 = vpop.f32.mrf.mxu0
    %v1769 = vpop.f32.mrf.mxu0
    %v1770 = vadd.f32 0.0, %v1769
    %v1771 = vpop.f32.mrf.mxu0
    %1772 = vmatprep.mubr.bf16.mxu0 0
    %1773 = vmatmul.mubr.bf16.gmra.mxu0 %v1139
    %v1774 = vpop.f32.mrf.mxu0
    %v1775 = vadd.f32 0.0, %v1774
    %v1776 = vpop.f32.mrf.mxu0
    %v1777 = vpop.f32.mrf.mxu0
    %v1778 = vadd.f32 0.0, %v1777
    %v1779 = vpop.f32.mrf.mxu0
    %1780 = vmatprep.mubr.bf16.mxu0 0
    %1781 = vmatmul.mubr.bf16.gmra.mxu0 %v1156
    %v1782 = vpop.f32.mrf.mxu0
    %v1783 = vadd.f32 0.0, %v1782
    %v1784 = vpop.f32.mrf.mxu0
    %v1785 = vpop.f32.mrf.mxu0
    %v1786 = vadd.f32 0.0, %v1785
    %v1787 = vpop.f32.mrf.mxu0
    %1788 = vmatprep.mubr.bf16.mxu0 0
    %1789 = vmatmul.mubr.bf16.gmra.mxu0 %v1464
    %v1790 = vpop.f32.mrf.mxu0
    %v1791 = vadd.f32 0.0, %v1790
    %v1792 = vpop.f32.mrf.mxu0
    %v1793 = vpop.f32.mrf.mxu0
    %v1794 = vadd.f32 0.0, %v1793
    %v1795 = vpop.f32.mrf.mxu0
    %1796 = vmatprep.mubr.bf16.mxu0 0
    %1797 = vmatmul.mubr.bf16.gmra.mxu0 %v1133
    %v1798 = vpop.f32.mrf.mxu0
    %v1799 = vadd.f32 0.0, %v1798
    %v1800 = vpop.f32.mrf.mxu0
    %v1801 = vpop.f32.mrf.mxu0
    %v1802 = vadd.f32 0.0, %v1801
    %v1803 = vpop.f32.mrf.mxu0
    %1804 = vdwg.mxu0
    %v1805 = vadd.f32 %v1627, %v1743
    %v1806 = vadd.f32 %v1628, %v1746
    %v1807 = vadd.f32 %v1629, %v1751
    %v1808 = vadd.f32 %v1630, %v1754
    %v1809 = vadd.f32 %v1631, %v1759
    %v1810 = vadd.f32 %v1632, %v1762
    %v1811 = vadd.f32 %v1633, %v1767
    %v1812 = vadd.f32 %v1634, %v1770
    %v1813 = vadd.f32 %v1635, %v1775
    %v1814 = vadd.f32 %v1636, %v1778
    %v1815 = vadd.f32 %v1637, %v1783
    %v1816 = vadd.f32 %v1638, %v1786
    %v1817 = vadd.f32 %v1639, %v1791
    %v1818 = vadd.f32 %v1640, %v1794
    %v1819 = vadd.f32 %v1641, %v1799
    %v1820 = vadd.f32 %v1642, %v1802
    %s1821 = scalar_lea.vmem %s5, 256
    %v1822 = vld [vmem:[%s1821] sm:$0xf]
    %v1823 = vld [vmem:[%s1821 + $0x4] sm:$0xf]
    %v1824 = vld [vmem:[%s1821 + $0x8] sm:$0xf]
    %v1825 = vld [vmem:[%s1821 + $0xc] sm:$0xf]
    %v1826 = vld [vmem:[%s1821 + $0x10] sm:$0xf]
    %v1827 = vld [vmem:[%s1821 + $0x14] sm:$0xf]
    %v1828 = vld [vmem:[%s1821 + $0x18] sm:$0xf]
    %v1829 = vld [vmem:[%s1821 + $0x1c] sm:$0xf]
    %v1830 = vld [vmem:[%s1821 + $0x20] sm:$0xf]
    %v1831 = vld [vmem:[%s1821 + $0x24] sm:$0xf]
    %v1832 = vld [vmem:[%s1821 + $0x28] sm:$0xf]
    %v1833 = vld [vmem:[%s1821 + $0x2c] sm:$0xf]
    %v1834 = vld [vmem:[%s1821 + $0x30] sm:$0xf]
    %v1835 = vld [vmem:[%s1821 + $0x34] sm:$0xf]
    %v1836 = vld [vmem:[%s1821 + $0x38] sm:$0xf]
    %v1837 = vld [vmem:[%s1821 + $0x3c] sm:$0xf]
    %v1854 = vunpack.c.l.b16 %v1822
    %v1855 = vunpack.c.l.b16 %v1823
    %v1856 = vunpack.c.l.b16 %v1824
    %v1857 = vunpack.c.l.b16 %v1825
    %v1858 = vunpack.c.l.b16 %v1826
    %v1859 = vunpack.c.l.b16 %v1827
    %v1860 = vunpack.c.l.b16 %v1828
    %v1861 = vunpack.c.l.b16 %v1829
    %v1862 = vunpack.c.l.b16 %v1830
    %v1863 = vunpack.c.l.b16 %v1831
    %v1864 = vunpack.c.l.b16 %v1832
    %v1865 = vunpack.c.l.b16 %v1833
    %v1866 = vunpack.c.l.b16 %v1834
    %v1867 = vunpack.c.l.b16 %v1835
    %v1868 = vunpack.c.l.b16 %v1836
    %v1869 = vunpack.c.l.b16 %v1837
    %v1870 = vpack.c.b16 %v1855, %v1854
    %v1871 = vpack.c.b16 %v1857, %v1856
    %v1872 = vpack.c.b16 %v1859, %v1858
    %v1873 = vpack.c.b16 %v1861, %v1860
    %v1874 = vpack.c.b16 %v1863, %v1862
    %v1875 = vpack.c.b16 %v1865, %v1864
    %v1876 = vpack.c.b16 %v1867, %v1866
    %v1877 = vpack.c.b16 %v1869, %v1868
    %1886 = vmatprep.subr.bf16.mxu0 0
    %1887 = vmatpush1.bf16.msra.mxu0 %v1877
    %1888 = vmatprep.subr.bf16.mxu0 0
    %1889 = vmatpush1.bf16.msra.mxu0 %v1876
    %1890 = vmatprep.subr.bf16.mxu0 0
    %1891 = vmatpush1.bf16.msra.mxu0 %v1875
    %1892 = vmatprep.subr.bf16.mxu0 0
    %1893 = vmatpush1.bf16.msra.mxu0 %v1874
    %1894 = vmatprep.subr.bf16.mxu0 0
    %1895 = vmatpush1.bf16.msra.mxu0 %v1873
    %1896 = vmatprep.subr.bf16.mxu0 0
    %1897 = vmatpush1.bf16.msra.mxu0 %v1872
    %1898 = vmatprep.subr.bf16.mxu0 0
    %1899 = vmatpush1.bf16.msra.mxu0 %v1871
    %1900 = vmatprep.subr.bf16.mxu0 0
    %1901 = vmatpush1.bf16.msra.mxu0 %v1870
    %1902 = vmatprep.subr.bf16.mxu0 0
    %1903 = vmatpush2.bf16.msra.mxu0 0
    %1904 = vmatprep.subr.bf16.mxu0 0
    %1905 = vmatpush2.bf16.msra.mxu0 0
    %1906 = vmatprep.subr.bf16.mxu0 0
    %1907 = vmatpush2.bf16.msra.mxu0 0
    %1908 = vmatprep.subr.bf16.mxu0 0
    %1909 = vmatpush2.bf16.msra.mxu0 0
    %1910 = vmatprep.subr.bf16.mxu0 0
    %1911 = vmatpush2.bf16.msra.mxu0 0
    %1912 = vmatprep.subr.bf16.mxu0 0
    %1913 = vmatpush2.bf16.msra.mxu0 0
    %1914 = vmatprep.subr.bf16.mxu0 0
    %1915 = vmatpush2.bf16.msra.mxu0 0
    %1916 = vmatprep.subr.bf16.mxu0 0
    %1917 = vmatpush2.bf16.msra.mxu0 0
    %1918 = vmatprep.mubr.bf16.mxu0 0
    %1919 = vmatmul.mubr.bf16.gmra.mxu0 %v1136
    %v1920 = vpop.f32.mrf.mxu0
    %v1921 = vadd.f32 0.0, %v1920
    %v1922 = vpop.f32.mrf.mxu0
    %v1923 = vpop.f32.mrf.mxu0
    %v1924 = vadd.f32 0.0, %v1923
    %v1925 = vpop.f32.mrf.mxu0
    %1926 = vmatprep.mubr.bf16.mxu0 0
    %1927 = vmatmul.mubr.bf16.gmra.mxu0 %v1137
    %v1928 = vpop.f32.mrf.mxu0
    %v1929 = vadd.f32 0.0, %v1928
    %v1930 = vpop.f32.mrf.mxu0
    %v1931 = vpop.f32.mrf.mxu0
    %v1932 = vadd.f32 0.0, %v1931
    %v1933 = vpop.f32.mrf.mxu0
    %1934 = vmatprep.mubr.bf16.mxu0 0
    %1935 = vmatmul.mubr.bf16.gmra.mxu0 %v1138
    %v1936 = vpop.f32.mrf.mxu0
    %v1937 = vadd.f32 0.0, %v1936
    %v1938 = vpop.f32.mrf.mxu0
    %v1939 = vpop.f32.mrf.mxu0
    %v1940 = vadd.f32 0.0, %v1939
    %v1941 = vpop.f32.mrf.mxu0
    %1942 = vmatprep.mubr.bf16.mxu0 0
    %1943 = vmatmul.mubr.bf16.gmra.mxu0 %v1139
    %v1944 = vpop.f32.mrf.mxu0
    %v1945 = vadd.f32 0.0, %v1944
    %v1946 = vpop.f32.mrf.mxu0
    %v1947 = vpop.f32.mrf.mxu0
    %v1948 = vadd.f32 0.0, %v1947
    %v1949 = vpop.f32.mrf.mxu0
    %1950 = vmatprep.mubr.bf16.mxu0 0
    %1951 = vmatmul.mubr.bf16.gmra.mxu0 %v1156
    %v1952 = vpop.f32.mrf.mxu0
    %v1953 = vadd.f32 0.0, %v1952
    %v1954 = vpop.f32.mrf.mxu0
    %v1955 = vpop.f32.mrf.mxu0
    %v1956 = vadd.f32 0.0, %v1955
    %v1957 = vpop.f32.mrf.mxu0
    %1958 = vmatprep.mubr.bf16.mxu0 0
    %1959 = vmatmul.mubr.bf16.gmra.mxu0 %v1464
    %v1960 = vpop.f32.mrf.mxu0
    %v1961 = vadd.f32 0.0, %v1960
    %v1962 = vpop.f32.mrf.mxu0
    %v1963 = vpop.f32.mrf.mxu0
    %v1964 = vadd.f32 0.0, %v1963
    %v1965 = vpop.f32.mrf.mxu0
    %1966 = vmatprep.mubr.bf16.mxu0 0
    %1967 = vmatmul.mubr.bf16.gmra.mxu0 %v1133
    %v1968 = vpop.f32.mrf.mxu0
    %v1969 = vadd.f32 0.0, %v1968
    %v1970 = vpop.f32.mrf.mxu0
    %v1971 = vpop.f32.mrf.mxu0
    %v1972 = vadd.f32 0.0, %v1971
    %v1973 = vpop.f32.mrf.mxu0
    %1974 = vmatprep.mubr.bf16.mxu0 0
    %1975 = vmatmul.mubr.bf16.gmra.mxu0 %v1133
    %v1976 = vpop.f32.mrf.mxu0
    %v1977 = vadd.f32 0.0, %v1976
    %v1978 = vpop.f32.mrf.mxu0
    %v1979 = vpop.f32.mrf.mxu0
    %v1980 = vadd.f32 0.0, %v1979
    %v1981 = vpop.f32.mrf.mxu0
    %1982 = vdwg.mxu0
    %v1983 = vadd.f32 %v1805, %v1921
    %v1984 = vadd.f32 %v1806, %v1924
    %v1985 = vadd.f32 %v1807, %v1929
    %v1986 = vadd.f32 %v1808, %v1932
    %v1987 = vadd.f32 %v1809, %v1937
    %v1988 = vadd.f32 %v1810, %v1940
    %v1989 = vadd.f32 %v1811, %v1945
    %v1990 = vadd.f32 %v1812, %v1948
    %v1991 = vadd.f32 %v1813, %v1953
    %v1992 = vadd.f32 %v1814, %v1956
    %v1993 = vadd.f32 %v1815, %v1961
    %v1994 = vadd.f32 %v1816, %v1964
    %v1995 = vadd.f32 %v1817, %v1969
    %v1996 = vadd.f32 %v1818, %v1972
    %v1997 = vadd.f32 %v1819, %v1977
    %v1998 = vadd.f32 %v1820, %v1980
    %v1999 = vld [vmem:[%s6] sm:$0x1]
    %v2001 = vlaneseq
    %v2002 = vshrl.u32 %v2001, 7
    %v2003 = vsub.s32 0, %v2002
    %v2004 = vrot.slane %v1999, %v2003
    %v2006 = vadd.f32 %v1983, %v2004
    %v2007 = vadd.f32 %v1984, %v2004
    %v2008 = vadd.f32 %v1985, %v2004
    %v2009 = vadd.f32 %v1986, %v2004
    %v2010 = vadd.f32 %v1987, %v2004
    %v2011 = vadd.f32 %v1988, %v2004
    %v2012 = vadd.f32 %v1989, %v2004
    %v2013 = vadd.f32 %v1990, %v2004
    %v2014 = vadd.f32 %v1991, %v2004
    %v2015 = vadd.f32 %v1992, %v2004
    %v2016 = vadd.f32 %v1993, %v2004
    %v2017 = vadd.f32 %v1994, %v2004
    %v2018 = vadd.f32 %v1995, %v2004
    %v2019 = vadd.f32 %v1996, %v2004
    %v2020 = vadd.f32 %v1997, %v2004
    %v2021 = vadd.f32 %v1998, %v2004
    %v2022 = vmax.f32 %v2006, 0.0
    %v2023 = vmax.f32 %v2007, 0.0
    %v2024 = vmax.f32 %v2008, 0.0
    %v2025 = vmax.f32 %v2009, 0.0
    %v2026 = vmax.f32 %v2010, 0.0
    %v2027 = vmax.f32 %v2011, 0.0
    %v2028 = vmax.f32 %v2012, 0.0
    %v2029 = vmax.f32 %v2013, 0.0
    %v2030 = vmax.f32 %v2014, 0.0
    %v2031 = vmax.f32 %v2015, 0.0
    %v2032 = vmax.f32 %v2016, 0.0
    %v2033 = vmax.f32 %v2017, 0.0
    %v2034 = vmax.f32 %v2018, 0.0
    %v2035 = vmax.f32 %v2019, 0.0
    %v2036 = vmax.f32 %v2020, 0.0
    %v2037 = vmax.f32 %v2021, 0.0
    %v2038 = vmax.f32 %v2022, %v2024
    %v2039 = vmax.f32 %v2023, %v2025
    %v2040 = vmax.f32 %v2026, %v2028
    %v2041 = vmax.f32 %v2027, %v2029
    %v2042 = vmax.f32 %v2030, %v2032
    %v2043 = vmax.f32 %v2031, %v2033
    %v2044 = vmax.f32 %v2034, %v2036
    %v2045 = vmax.f32 %v2035, %v2037
    %v2046 = vpack.c.bf16 %v2039, %v2038
    %v2047 = vld [vmem:[#allocation2] sm:$0xff]
    %v2048 = vld [vmem:[#allocation2 + $0x8] sm:$0xff]
    %v2049 = vld [vmem:[#allocation2 + $0x10] sm:$0xff]
    %v2050 = vld [vmem:[#allocation2 + $0x18] sm:$0xff]
    %v2051 = vld [vmem:[#allocation2 + $0x20] sm:$0xff]
    %v2052 = vld [vmem:[#allocation2 + $0x28] sm:$0xff]
    %v2053 = vld [vmem:[#allocation2 + $0x30] sm:$0xff]
    %v2054 = vld [vmem:[#allocation2 + $0x38] sm:$0xff]
    %v2055 = vld [vmem:[#allocation2 + $0x40] sm:$0xff]
    %v2056 = vld [vmem:[#allocation2 + $0x48] sm:$0xff]
    %v2057 = vld [vmem:[#allocation2 + $0x50] sm:$0xff]
    %v2058 = vld [vmem:[#allocation2 + $0x58] sm:$0xff]
    %v2059 = vld [vmem:[#allocation2 + $0x60] sm:$0xff]
    %v2060 = vld [vmem:[#allocation2 + $0x68] sm:$0xff]
    %v2061 = vld [vmem:[#allocation2 + $0x70] sm:$0xff]
    %v2062 = vld [vmem:[#allocation2 + $0x78] sm:$0xff]
    %v2063 = vpack.c.bf16 %v2041, %v2040
    %s2064 = scalar_lea.vmem [#allocation2], 128
    %v2065 = vld [vmem:[%s2064] sm:$0xff]
    %v2066 = vld [vmem:[%s2064 + $0x8] sm:$0xff]
    %v2067 = vld [vmem:[%s2064 + $0x10] sm:$0xff]
    %v2068 = vld [vmem:[%s2064 + $0x18] sm:$0xff]
    %v2069 = vld [vmem:[%s2064 + $0x20] sm:$0xff]
    %v2070 = vld [vmem:[%s2064 + $0x28] sm:$0xff]
    %v2071 = vld [vmem:[%s2064 + $0x30] sm:$0xff]
    %v2072 = vld [vmem:[%s2064 + $0x38] sm:$0xff]
    %v2073 = vld [vmem:[%s2064 + $0x40] sm:$0xff]
    %v2074 = vld [vmem:[%s2064 + $0x48] sm:$0xff]
    %v2075 = vld [vmem:[%s2064 + $0x50] sm:$0xff]
    %v2076 = vld [vmem:[%s2064 + $0x58] sm:$0xff]
    %v2077 = vld [vmem:[%s2064 + $0x60] sm:$0xff]
    %v2078 = vld [vmem:[%s2064 + $0x68] sm:$0xff]
    %v2079 = vld [vmem:[%s2064 + $0x70] sm:$0xff]
    %v2080 = vld [vmem:[%s2064 + $0x78] sm:$0xff]
    %v2097 = vunpack.c.l.b16 %v2065
    %v2098 = vunpack.c.h.b16 %v2065
    %v2099 = vunpack.c.l.b16 %v2066
    %v2100 = vunpack.c.h.b16 %v2066
    %v2101 = vunpack.c.l.b16 %v2067
    %v2102 = vunpack.c.h.b16 %v2067
    %v2103 = vunpack.c.l.b16 %v2068
    %v2104 = vunpack.c.h.b16 %v2068
    %v2105 = vunpack.c.l.b16 %v2069
    %v2106 = vunpack.c.h.b16 %v2069
    %v2107 = vunpack.c.l.b16 %v2070
    %v2108 = vunpack.c.h.b16 %v2070
    %v2109 = vunpack.c.l.b16 %v2071
    %v2110 = vunpack.c.h.b16 %v2071
    %v2111 = vunpack.c.l.b16 %v2072
    %v2112 = vunpack.c.h.b16 %v2072
    %v2113 = vunpack.c.l.b16 %v2073
    %v2114 = vunpack.c.h.b16 %v2073
    %v2115 = vunpack.c.l.b16 %v2074
    %v2116 = vunpack.c.h.b16 %v2074
    %v2117 = vunpack.c.l.b16 %v2075
    %v2118 = vunpack.c.h.b16 %v2075
    %v2119 = vunpack.c.l.b16 %v2076
    %v2120 = vunpack.c.h.b16 %v2076
    %v2121 = vunpack.c.l.b16 %v2077
    %v2122 = vunpack.c.h.b16 %v2077
    %v2123 = vunpack.c.l.b16 %v2078
    %v2124 = vunpack.c.h.b16 %v2078
    %v2125 = vunpack.c.l.b16 %v2079
    %v2126 = vunpack.c.h.b16 %v2079
    %v2127 = vunpack.c.l.b16 %v2080
    %v2128 = vunpack.c.h.b16 %v2080
    %v2129 = vpack.c.b16 %v2099, %v2097
    %v2130 = vpack.c.b16 %v2100, %v2098
    %v2131 = vpack.c.b16 %v2103, %v2101
    %v2132 = vpack.c.b16 %v2104, %v2102
    %v2133 = vpack.c.b16 %v2107, %v2105
    %v2134 = vpack.c.b16 %v2108, %v2106
    %v2135 = vpack.c.b16 %v2111, %v2109
    %v2136 = vpack.c.b16 %v2112, %v2110
    %v2137 = vpack.c.b16 %v2115, %v2113
    %v2138 = vpack.c.b16 %v2116, %v2114
    %v2139 = vpack.c.b16 %v2119, %v2117
    %v2140 = vpack.c.b16 %v2120, %v2118
    %v2141 = vpack.c.b16 %v2123, %v2121
    %v2142 = vpack.c.b16 %v2124, %v2122
    %v2143 = vpack.c.b16 %v2127, %v2125
    %v2144 = vpack.c.b16 %v2128, %v2126
    %2161 = vmatprep.subr.bf16.mxu0 %v2144
    %2162 = vmatpush1.bf16.msra.mxu0 %v2143
    %2163 = vmatprep.subr.bf16.mxu0 %v2142
    %2164 = vmatpush1.bf16.msra.mxu0 %v2141
    %2165 = vmatprep.subr.bf16.mxu0 %v2140
    %2166 = vmatpush1.bf16.msra.mxu0 %v2139
    %2167 = vmatprep.subr.bf16.mxu0 %v2138
    %2168 = vmatpush1.bf16.msra.mxu0 %v2137
    %2169 = vmatprep.subr.bf16.mxu0 %v2136
    %2170 = vmatpush1.bf16.msra.mxu0 %v2135
    %2171 = vmatprep.subr.bf16.mxu0 %v2134
    %2172 = vmatpush1.bf16.msra.mxu0 %v2133
    %2173 = vmatprep.subr.bf16.mxu0 %v2132
    %2174 = vmatpush1.bf16.msra.mxu0 %v2131
    %2175 = vmatprep.subr.bf16.mxu0 %v2130
    %2176 = vmatpush1.bf16.msra.mxu0 %v2129
    %2177 = vmatprep.subr.bf16.mxu0 0
    %2178 = vmatpush2.bf16.msra.mxu0 0
    %2179 = vmatprep.subr.bf16.mxu0 0
    %2180 = vmatpush2.bf16.msra.mxu0 0
    %2181 = vmatprep.subr.bf16.mxu0 0
    %2182 = vmatpush2.bf16.msra.mxu0 0
    %2183 = vmatprep.subr.bf16.mxu0 0
    %2184 = vmatpush2.bf16.msra.mxu0 0
    %2185 = vmatprep.subr.bf16.mxu0 0
    %2186 = vmatpush2.bf16.msra.mxu0 0
    %2187 = vmatprep.subr.bf16.mxu0 0
    %2188 = vmatpush2.bf16.msra.mxu0 0
    %2189 = vmatprep.subr.bf16.mxu0 0
    %2190 = vmatpush2.bf16.msra.mxu0 0
    %2191 = vmatprep.subr.bf16.mxu0 0
    %2192 = vmatpush2.bf16.msra.mxu0 0
    %2193 = vmatprep.mubr.bf16.mxu0 0
    %2194 = vmatmul.mubr.bf16.gmra.mxu0 %v2063
    %v2195 = vpop.f32.mrf.mxu0
    %v2196 = vadd.f32 0.0, %v2195
    %v2197 = vpop.f32.mrf.mxu0
    %v2198 = vadd.f32 0.0, %v2197
    %v2199 = vpop.f32.mrf.mxu0
    %v2200 = vadd.f32 0.0, %v2199
    %v2201 = vpop.f32.mrf.mxu0
    %v2202 = vadd.f32 0.0, %v2201
    %2203 = vdwg.mxu0
    %v2220 = vunpack.c.l.b16 %v2047
    %v2221 = vunpack.c.h.b16 %v2047
    %v2222 = vunpack.c.l.b16 %v2048
    %v2223 = vunpack.c.h.b16 %v2048
    %v2224 = vunpack.c.l.b16 %v2049
    %v2225 = vunpack.c.h.b16 %v2049
    %v2226 = vunpack.c.l.b16 %v2050
    %v2227 = vunpack.c.h.b16 %v2050
    %v2228 = vunpack.c.l.b16 %v2051
    %v2229 = vunpack.c.h.b16 %v2051
    %v2230 = vunpack.c.l.b16 %v2052
    %v2231 = vunpack.c.h.b16 %v2052
    %v2232 = vunpack.c.l.b16 %v2053
    %v2233 = vunpack.c.h.b16 %v2053
    %v2234 = vunpack.c.l.b16 %v2054
    %v2235 = vunpack.c.h.b16 %v2054
    %v2236 = vunpack.c.l.b16 %v2055
    %v2237 = vunpack.c.h.b16 %v2055
    %v2238 = vunpack.c.l.b16 %v2056
    %v2239 = vunpack.c.h.b16 %v2056
    %v2240 = vunpack.c.l.b16 %v2057
    %v2241 = vunpack.c.h.b16 %v2057
    %v2242 = vunpack.c.l.b16 %v2058
    %v2243 = vunpack.c.h.b16 %v2058
    %v2244 = vunpack.c.l.b16 %v2059
    %v2245 = vunpack.c.h.b16 %v2059
    %v2246 = vunpack.c.l.b16 %v2060
    %v2247 = vunpack.c.h.b16 %v2060
    %v2248 = vunpack.c.l.b16 %v2061
    %v2249 = vunpack.c.h.b16 %v2061
    %v2250 = vunpack.c.l.b16 %v2062
    %v2251 = vunpack.c.h.b16 %v2062
    %v2252 = vpack.c.b16 %v2222, %v2220
    %v2253 = vpack.c.b16 %v2223, %v2221
    %v2254 = vpack.c.b16 %v2226, %v2224
    %v2255 = vpack.c.b16 %v2227, %v2225
    %v2256 = vpack.c.b16 %v2230, %v2228
    %v2257 = vpack.c.b16 %v2231, %v2229
    %v2258 = vpack.c.b16 %v2234, %v2232
    %v2259 = vpack.c.b16 %v2235, %v2233
    %v2260 = vpack.c.b16 %v2238, %v2236
    %v2261 = vpack.c.b16 %v2239, %v2237
    %v2262 = vpack.c.b16 %v2242, %v2240
    %v2263 = vpack.c.b16 %v2243, %v2241
    %v2264 = vpack.c.b16 %v2246, %v2244
    %v2265 = vpack.c.b16 %v2247, %v2245
    %v2266 = vpack.c.b16 %v2250, %v2248
    %v2267 = vpack.c.b16 %v2251, %v2249
    %2284 = vmatprep.subr.bf16.mxu0 %v2267
    %2285 = vmatpush1.bf16.msra.mxu0 %v2266
    %2286 = vmatprep.subr.bf16.mxu0 %v2265
    %2287 = vmatpush1.bf16.msra.mxu0 %v2264
    %2288 = vmatprep.subr.bf16.mxu0 %v2263
    %2289 = vmatpush1.bf16.msra.mxu0 %v2262
    %2290 = vmatprep.subr.bf16.mxu0 %v2261
    %2291 = vmatpush1.bf16.msra.mxu0 %v2260
    %2292 = vmatprep.subr.bf16.mxu0 %v2259
    %2293 = vmatpush1.bf16.msra.mxu0 %v2258
    %2294 = vmatprep.subr.bf16.mxu0 %v2257
    %2295 = vmatpush1.bf16.msra.mxu0 %v2256
    %2296 = vmatprep.subr.bf16.mxu0 %v2255
    %2297 = vmatpush1.bf16.msra.mxu0 %v2254
    %2298 = vmatprep.subr.bf16.mxu0 %v2253
    %2299 = vmatpush1.bf16.msra.mxu0 %v2252
    %2300 = vmatprep.subr.bf16.mxu0 0
    %2301 = vmatpush2.bf16.msra.mxu0 0
    %2302 = vmatprep.subr.bf16.mxu0 0
    %2303 = vmatpush2.bf16.msra.mxu0 0
    %2304 = vmatprep.subr.bf16.mxu0 0
    %2305 = vmatpush2.bf16.msra.mxu0 0
    %2306 = vmatprep.subr.bf16.mxu0 0
    %2307 = vmatpush2.bf16.msra.mxu0 0
    %2308 = vmatprep.subr.bf16.mxu0 0
    %2309 = vmatpush2.bf16.msra.mxu0 0
    %2310 = vmatprep.subr.bf16.mxu0 0
    %2311 = vmatpush2.bf16.msra.mxu0 0
    %2312 = vmatprep.subr.bf16.mxu0 0
    %2313 = vmatpush2.bf16.msra.mxu0 0
    %2314 = vmatprep.subr.bf16.mxu0 0
    %2315 = vmatpush2.bf16.msra.mxu0 0
    %2316 = vmatprep.mubr.bf16.mxu0 0
    %2317 = vmatmul.mubr.bf16.gmra.mxu0 %v2046
    %v2318 = vpop.f32.mrf.mxu0
    %v2319 = vadd.f32 %v2196, %v2318
    %v2320 = vpop.f32.mrf.mxu0
    %v2321 = vadd.f32 %v2198, %v2320
    %v2322 = vpop.f32.mrf.mxu0
    %v2323 = vadd.f32 %v2200, %v2322
    %v2324 = vpop.f32.mrf.mxu0
    %v2325 = vadd.f32 %v2202, %v2324
    %2326 = vdwg.mxu0
    %v2327 = vpack.c.bf16 %v2043, %v2042
    %s2328 = scalar_lea.vmem [#allocation2], 256
    %v2329 = vld [vmem:[%s2328] sm:$0xff]
    %v2330 = vld [vmem:[%s2328 + $0x8] sm:$0xff]
    %v2331 = vld [vmem:[%s2328 + $0x10] sm:$0xff]
    %v2332 = vld [vmem:[%s2328 + $0x18] sm:$0xff]
    %v2333 = vld [vmem:[%s2328 + $0x20] sm:$0xff]
    %v2334 = vld [vmem:[%s2328 + $0x28] sm:$0xff]
    %v2335 = vld [vmem:[%s2328 + $0x30] sm:$0xff]
    %v2336 = vld [vmem:[%s2328 + $0x38] sm:$0xff]
    %v2337 = vld [vmem:[%s2328 + $0x40] sm:$0xff]
    %v2338 = vld [vmem:[%s2328 + $0x48] sm:$0xff]
    %v2339 = vld [vmem:[%s2328 + $0x50] sm:$0xff]
    %v2340 = vld [vmem:[%s2328 + $0x58] sm:$0xff]
    %v2341 = vld [vmem:[%s2328 + $0x60] sm:$0xff]
    %v2342 = vld [vmem:[%s2328 + $0x68] sm:$0xff]
    %v2343 = vld [vmem:[%s2328 + $0x70] sm:$0xff]
    %v2344 = vld [vmem:[%s2328 + $0x78] sm:$0xff]
    %v2361 = vunpack.c.l.b16 %v2329
    %v2362 = vunpack.c.h.b16 %v2329
    %v2363 = vunpack.c.l.b16 %v2330
    %v2364 = vunpack.c.h.b16 %v2330
    %v2365 = vunpack.c.l.b16 %v2331
    %v2366 = vunpack.c.h.b16 %v2331
    %v2367 = vunpack.c.l.b16 %v2332
    %v2368 = vunpack.c.h.b16 %v2332
    %v2369 = vunpack.c.l.b16 %v2333
    %v2370 = vunpack.c.h.b16 %v2333
    %v2371 = vunpack.c.l.b16 %v2334
    %v2372 = vunpack.c.h.b16 %v2334
    %v2373 = vunpack.c.l.b16 %v2335
    %v2374 = vunpack.c.h.b16 %v2335
    %v2375 = vunpack.c.l.b16 %v2336
    %v2376 = vunpack.c.h.b16 %v2336
    %v2377 = vunpack.c.l.b16 %v2337
    %v2378 = vunpack.c.h.b16 %v2337
    %v2379 = vunpack.c.l.b16 %v2338
    %v2380 = vunpack.c.h.b16 %v2338
    %v2381 = vunpack.c.l.b16 %v2339
    %v2382 = vunpack.c.h.b16 %v2339
    %v2383 = vunpack.c.l.b16 %v2340
    %v2384 = vunpack.c.h.b16 %v2340
    %v2385 = vunpack.c.l.b16 %v2341
    %v2386 = vunpack.c.h.b16 %v2341
    %v2387 = vunpack.c.l.b16 %v2342
    %v2388 = vunpack.c.h.b16 %v2342
    %v2389 = vunpack.c.l.b16 %v2343
    %v2390 = vunpack.c.h.b16 %v2343
    %v2391 = vunpack.c.l.b16 %v2344
    %v2392 = vunpack.c.h.b16 %v2344
    %v2393 = vpack.c.b16 %v2363, %v2361
    %v2394 = vpack.c.b16 %v2364, %v2362
    %v2395 = vpack.c.b16 %v2367, %v2365
    %v2396 = vpack.c.b16 %v2368, %v2366
    %v2397 = vpack.c.b16 %v2371, %v2369
    %v2398 = vpack.c.b16 %v2372, %v2370
    %v2399 = vpack.c.b16 %v2375, %v2373
    %v2400 = vpack.c.b16 %v2376, %v2374
    %v2401 = vpack.c.b16 %v2379, %v2377
    %v2402 = vpack.c.b16 %v2380, %v2378
    %v2403 = vpack.c.b16 %v2383, %v2381
    %v2404 = vpack.c.b16 %v2384, %v2382
    %v2405 = vpack.c.b16 %v2387, %v2385
    %v2406 = vpack.c.b16 %v2388, %v2386
    %v2407 = vpack.c.b16 %v2391, %v2389
    %v2408 = vpack.c.b16 %v2392, %v2390
    %2425 = vmatprep.subr.bf16.mxu0 %v2408
    %2426 = vmatpush1.bf16.msra.mxu0 %v2407
    %2427 = vmatprep.subr.bf16.mxu0 %v2406
    %2428 = vmatpush1.bf16.msra.mxu0 %v2405
    %2429 = vmatprep.subr.bf16.mxu0 %v2404
    %2430 = vmatpush1.bf16.msra.mxu0 %v2403
    %2431 = vmatprep.subr.bf16.mxu0 %v2402
    %2432 = vmatpush1.bf16.msra.mxu0 %v2401
    %2433 = vmatprep.subr.bf16.mxu0 %v2400
    %2434 = vmatpush1.bf16.msra.mxu0 %v2399
    %2435 = vmatprep.subr.bf16.mxu0 %v2398
    %2436 = vmatpush1.bf16.msra.mxu0 %v2397
    %2437 = vmatprep.subr.bf16.mxu0 %v2396
    %2438 = vmatpush1.bf16.msra.mxu0 %v2395
    %2439 = vmatprep.subr.bf16.mxu0 %v2394
    %2440 = vmatpush1.bf16.msra.mxu0 %v2393
    %2441 = vmatprep.subr.bf16.mxu0 0
    %2442 = vmatpush2.bf16.msra.mxu0 0
    %2443 = vmatprep.subr.bf16.mxu0 0
    %2444 = vmatpush2.bf16.msra.mxu0 0
    %2445 = vmatprep.subr.bf16.mxu0 0
    %2446 = vmatpush2.bf16.msra.mxu0 0
    %2447 = vmatprep.subr.bf16.mxu0 0
    %2448 = vmatpush2.bf16.msra.mxu0 0
    %2449 = vmatprep.subr.bf16.mxu0 0
    %2450 = vmatpush2.bf16.msra.mxu0 0
    %2451 = vmatprep.subr.bf16.mxu0 0
    %2452 = vmatpush2.bf16.msra.mxu0 0
    %2453 = vmatprep.subr.bf16.mxu0 0
    %2454 = vmatpush2.bf16.msra.mxu0 0
    %2455 = vmatprep.subr.bf16.mxu0 0
    %2456 = vmatpush2.bf16.msra.mxu0 0
    %2457 = vmatprep.mubr.bf16.mxu0 0
    %2458 = vmatmul.mubr.bf16.gmra.mxu0 %v2327
    %v2459 = vpop.f32.mrf.mxu0
    %v2460 = vadd.f32 0.0, %v2459
    %v2461 = vpop.f32.mrf.mxu0
    %v2462 = vadd.f32 0.0, %v2461
    %v2463 = vpop.f32.mrf.mxu0
    %v2464 = vadd.f32 0.0, %v2463
    %v2465 = vpop.f32.mrf.mxu0
    %v2466 = vadd.f32 0.0, %v2465
    %2467 = vdwg.mxu0
    %v2468 = vadd.f32 %v2319, %v2460
    %v2469 = vadd.f32 %v2321, %v2462
    %v2470 = vadd.f32 %v2323, %v2464
    %v2471 = vadd.f32 %v2325, %v2466
    %v2472 = vpack.c.bf16 %v2045, %v2044
    %s2473 = scalar_lea.vmem [#allocation2], 384
    %v2474 = vld [vmem:[%s2473] sm:$0xff]
    %v2475 = vld [vmem:[%s2473 + $0x8] sm:$0xff]
    %v2476 = vld [vmem:[%s2473 + $0x10] sm:$0xff]
    %v2477 = vld [vmem:[%s2473 + $0x18] sm:$0xff]
    %v2478 = vld [vmem:[%s2473 + $0x20] sm:$0xff]
    %v2479 = vld [vmem:[%s2473 + $0x28] sm:$0xff]
    %v2480 = vld [vmem:[%s2473 + $0x30] sm:$0xff]
    %v2481 = vld [vmem:[%s2473 + $0x38] sm:$0xff]
    %v2482 = vld [vmem:[%s2473 + $0x40] sm:$0xff]
    %v2483 = vld [vmem:[%s2473 + $0x48] sm:$0xff]
    %v2484 = vld [vmem:[%s2473 + $0x50] sm:$0xff]
    %v2485 = vld [vmem:[%s2473 + $0x58] sm:$0xff]
    %v2486 = vld [vmem:[%s2473 + $0x60] sm:$0xff]
    %v2487 = vld [vmem:[%s2473 + $0x68] sm:$0xff]
    %v2488 = vld [vmem:[%s2473 + $0x70] sm:$0xff]
    %v2489 = vld [vmem:[%s2473 + $0x78] sm:$0xff]
    %v2506 = vunpack.c.l.b16 %v2474
    %v2507 = vunpack.c.h.b16 %v2474
    %v2508 = vunpack.c.l.b16 %v2475
    %v2509 = vunpack.c.h.b16 %v2475
    %v2510 = vunpack.c.l.b16 %v2476
    %v2511 = vunpack.c.h.b16 %v2476
    %v2512 = vunpack.c.l.b16 %v2477
    %v2513 = vunpack.c.h.b16 %v2477
    %v2514 = vunpack.c.l.b16 %v2478
    %v2515 = vunpack.c.h.b16 %v2478
    %v2516 = vunpack.c.l.b16 %v2479
    %v2517 = vunpack.c.h.b16 %v2479
    %v2518 = vunpack.c.l.b16 %v2480
    %v2519 = vunpack.c.h.b16 %v2480
    %v2520 = vunpack.c.l.b16 %v2481
    %v2521 = vunpack.c.h.b16 %v2481
    %v2522 = vunpack.c.l.b16 %v2482
    %v2523 = vunpack.c.h.b16 %v2482
    %v2524 = vunpack.c.l.b16 %v2483
    %v2525 = vunpack.c.h.b16 %v2483
    %v2526 = vunpack.c.l.b16 %v2484
    %v2527 = vunpack.c.h.b16 %v2484
    %v2528 = vunpack.c.l.b16 %v2485
    %v2529 = vunpack.c.h.b16 %v2485
    %v2530 = vunpack.c.l.b16 %v2486
    %v2531 = vunpack.c.h.b16 %v2486
    %v2532 = vunpack.c.l.b16 %v2487
    %v2533 = vunpack.c.h.b16 %v2487
    %v2534 = vunpack.c.l.b16 %v2488
    %v2535 = vunpack.c.h.b16 %v2488
    %v2536 = vunpack.c.l.b16 %v2489
    %v2537 = vunpack.c.h.b16 %v2489
    %v2538 = vpack.c.b16 %v2508, %v2506
    %v2539 = vpack.c.b16 %v2509, %v2507
    %v2540 = vpack.c.b16 %v2512, %v2510
    %v2541 = vpack.c.b16 %v2513, %v2511
    %v2542 = vpack.c.b16 %v2516, %v2514
    %v2543 = vpack.c.b16 %v2517, %v2515
    %v2544 = vpack.c.b16 %v2520, %v2518
    %v2545 = vpack.c.b16 %v2521, %v2519
    %v2546 = vpack.c.b16 %v2524, %v2522
    %v2547 = vpack.c.b16 %v2525, %v2523
    %v2548 = vpack.c.b16 %v2528, %v2526
    %v2549 = vpack.c.b16 %v2529, %v2527
    %v2550 = vpack.c.b16 %v2532, %v2530
    %v2551 = vpack.c.b16 %v2533, %v2531
    %v2552 = vpack.c.b16 %v2536, %v2534
    %v2553 = vpack.c.b16 %v2537, %v2535
    %2570 = vmatprep.subr.bf16.mxu0 %v2553
    %2571 = vmatpush1.bf16.msra.mxu0 %v2552
    %2572 = vmatprep.subr.bf16.mxu0 %v2551
    %2573 = vmatpush1.bf16.msra.mxu0 %v2550
    %2574 = vmatprep.subr.bf16.mxu0 %v2549
    %2575 = vmatpush1.bf16.msra.mxu0 %v2548
    %2576 = vmatprep.subr.bf16.mxu0 %v2547
    %2577 = vmatpush1.bf16.msra.mxu0 %v2546
    %2578 = vmatprep.subr.bf16.mxu0 %v2545
    %2579 = vmatpush1.bf16.msra.mxu0 %v2544
    %2580 = vmatprep.subr.bf16.mxu0 %v2543
    %2581 = vmatpush1.bf16.msra.mxu0 %v2542
    %2582 = vmatprep.subr.bf16.mxu0 %v2541
    %2583 = vmatpush1.bf16.msra.mxu0 %v2540
    %2584 = vmatprep.subr.bf16.mxu0 %v2539
    %2585 = vmatpush1.bf16.msra.mxu0 %v2538
    %2586 = vmatprep.subr.bf16.mxu0 0
    %2587 = vmatpush2.bf16.msra.mxu0 0
    %2588 = vmatprep.subr.bf16.mxu0 0
    %2589 = vmatpush2.bf16.msra.mxu0 0
    %2590 = vmatprep.subr.bf16.mxu0 0
    %2591 = vmatpush2.bf16.msra.mxu0 0
    %2592 = vmatprep.subr.bf16.mxu0 0
    %2593 = vmatpush2.bf16.msra.mxu0 0
    %2594 = vmatprep.subr.bf16.mxu0 0
    %2595 = vmatpush2.bf16.msra.mxu0 0
    %2596 = vmatprep.subr.bf16.mxu0 0
    %2597 = vmatpush2.bf16.msra.mxu0 0
    %2598 = vmatprep.subr.bf16.mxu0 0
    %2599 = vmatpush2.bf16.msra.mxu0 0
    %2600 = vmatprep.subr.bf16.mxu0 0
    %2601 = vmatpush2.bf16.msra.mxu0 0
    %2602 = vmatprep.mubr.bf16.mxu0 0
    %2603 = vmatmul.mubr.bf16.gmra.mxu0 %v2472
    %v2604 = vpop.f32.mrf.mxu0
    %v2605 = vadd.f32 0.0, %v2604
    %v2606 = vpop.f32.mrf.mxu0
    %v2607 = vadd.f32 0.0, %v2606
    %v2608 = vpop.f32.mrf.mxu0
    %v2609 = vadd.f32 0.0, %v2608
    %v2610 = vpop.f32.mrf.mxu0
    %v2611 = vadd.f32 0.0, %v2610
    %2612 = vdwg.mxu0
    %v2613 = vadd.f32 %v2468, %v2605
    %v2614 = vadd.f32 %v2469, %v2607
    %v2615 = vadd.f32 %v2470, %v2609
    %v2616 = vadd.f32 %v2471, %v2611
    %v2617 = vld [vmem:[%s8] sm:$0x3]
    %v2619 = vlaneseq
    %v2620 = vshrl.u32 %v2619, 7
    %v2621 = vsub.s32 0, %v2620
    %v2622 = vrot.slane %v2617, %v2621
    %v2623 = vlaneseq
    %v2624 = vshrl.u32 %v2623, 7
    %v2625 = vsub.s32 1, %v2624
    %v2626 = vrot.slane %v2617, %v2625
    %v2629 = vadd.f32 %v2613, %v2622
    %v2630 = vadd.f32 %v2614, %v2626
    %v2631 = vadd.f32 %v2615, %v2622
    %v2632 = vadd.f32 %v2616, %v2626
    %v2633 = vmax.f32 %v2629, 0.0
    %v2634 = vmax.f32 %v2630, 0.0
    %v2635 = vmax.f32 %v2631, 0.0
    %v2636 = vmax.f32 %v2632, 0.0
    %v2637 = vpack.c.bf16 %v2635, %v2633
    %v2638 = vpack.c.bf16 %v2636, %v2634
    %v2639 = vld [vmem:[#allocation5] sm:$0xf]
    %v2640 = vld [vmem:[#allocation5 + $0x4] sm:$0xf]
    %v2641 = vld [vmem:[#allocation5 + $0x8] sm:$0xf]
    %v2642 = vld [vmem:[#allocation5 + $0xc] sm:$0xf]
    %v2643 = vld [vmem:[#allocation5 + $0x10] sm:$0xf]
    %v2644 = vld [vmem:[#allocation5 + $0x14] sm:$0xf]
    %v2645 = vld [vmem:[#allocation5 + $0x18] sm:$0xf]
    %v2646 = vld [vmem:[#allocation5 + $0x1c] sm:$0xf]
    %v2647 = vld [vmem:[#allocation5 + $0x20] sm:$0xf]
    %v2648 = vld [vmem:[#allocation5 + $0x24] sm:$0xf]
    %v2649 = vld [vmem:[#allocation5 + $0x28] sm:$0xf]
    %v2650 = vld [vmem:[#allocation5 + $0x2c] sm:$0xf]
    %v2651 = vld [vmem:[#allocation5 + $0x30] sm:$0xf]
    %v2652 = vld [vmem:[#allocation5 + $0x34] sm:$0xf]
    %v2653 = vld [vmem:[#allocation5 + $0x38] sm:$0xf]
    %v2654 = vld [vmem:[#allocation5 + $0x3c] sm:$0xf]
    %v2655 = vld [vmem:[#allocation5 + $0x40] sm:$0xf]
    %v2656 = vld [vmem:[#allocation5 + $0x44] sm:$0xf]
    %v2657 = vld [vmem:[#allocation5 + $0x48] sm:$0xf]
    %v2658 = vld [vmem:[#allocation5 + $0x4c] sm:$0xf]
    %v2659 = vld [vmem:[#allocation5 + $0x50] sm:$0xf]
    %v2660 = vld [vmem:[#allocation5 + $0x54] sm:$0xf]
    %v2661 = vld [vmem:[#allocation5 + $0x58] sm:$0xf]
    %v2662 = vld [vmem:[#allocation5 + $0x5c] sm:$0xf]
    %v2663 = vld [vmem:[#allocation5 + $0x60] sm:$0xf]
    %v2664 = vld [vmem:[#allocation5 + $0x64] sm:$0xf]
    %v2665 = vld [vmem:[#allocation5 + $0x68] sm:$0xf]
    %v2666 = vld [vmem:[#allocation5 + $0x6c] sm:$0xf]
    %v2667 = vld [vmem:[#allocation5 + $0x70] sm:$0xf]
    %v2668 = vld [vmem:[#allocation5 + $0x74] sm:$0xf]
    %v2669 = vld [vmem:[#allocation5 + $0x78] sm:$0xf]
    %v2670 = vld [vmem:[#allocation5 + $0x7c] sm:$0xf]
    %v2671 = vld [vmem:[%s10] sm:$0x1]
    %v2673 = vlaneseq
    %v2674 = vshrl.u32 %v2673, 7
    %v2675 = vsub.s32 0, %v2674
    %v2676 = vrot.slane %v2671, %v2675
    %v2710 = vunpack.c.l.b16 %v2639
    %v2711 = vunpack.c.l.b16 %v2640
    %v2712 = vunpack.c.l.b16 %v2641
    %v2713 = vunpack.c.l.b16 %v2642
    %v2714 = vunpack.c.l.b16 %v2643
    %v2715 = vunpack.c.l.b16 %v2644
    %v2716 = vunpack.c.l.b16 %v2645
    %v2717 = vunpack.c.l.b16 %v2646
    %v2718 = vunpack.c.l.b16 %v2647
    %v2719 = vunpack.c.l.b16 %v2648
    %v2720 = vunpack.c.l.b16 %v2649
    %v2721 = vunpack.c.l.b16 %v2650
    %v2722 = vunpack.c.l.b16 %v2651
    %v2723 = vunpack.c.l.b16 %v2652
    %v2724 = vunpack.c.l.b16 %v2653
    %v2725 = vunpack.c.l.b16 %v2654
    %v2726 = vunpack.c.l.b16 %v2655
    %v2727 = vunpack.c.l.b16 %v2656
    %v2728 = vunpack.c.l.b16 %v2657
    %v2729 = vunpack.c.l.b16 %v2658
    %v2730 = vunpack.c.l.b16 %v2659
    %v2731 = vunpack.c.l.b16 %v2660
    %v2732 = vunpack.c.l.b16 %v2661
    %v2733 = vunpack.c.l.b16 %v2662
    %v2734 = vunpack.c.l.b16 %v2663
    %v2735 = vunpack.c.l.b16 %v2664
    %v2736 = vunpack.c.l.b16 %v2665
    %v2737 = vunpack.c.l.b16 %v2666
    %v2738 = vunpack.c.l.b16 %v2667
    %v2739 = vunpack.c.l.b16 %v2668
    %v2740 = vunpack.c.l.b16 %v2669
    %v2741 = vunpack.c.l.b16 %v2670
    %v2742 = vpack.c.b16 %v2711, %v2710
    %v2743 = vpack.c.b16 %v2713, %v2712
    %v2744 = vpack.c.b16 %v2715, %v2714
    %v2745 = vpack.c.b16 %v2717, %v2716
    %v2746 = vpack.c.b16 %v2719, %v2718
    %v2747 = vpack.c.b16 %v2721, %v2720
    %v2748 = vpack.c.b16 %v2723, %v2722
    %v2749 = vpack.c.b16 %v2725, %v2724
    %v2750 = vpack.c.b16 %v2727, %v2726
    %v2751 = vpack.c.b16 %v2729, %v2728
    %v2752 = vpack.c.b16 %v2731, %v2730
    %v2753 = vpack.c.b16 %v2733, %v2732
    %v2754 = vpack.c.b16 %v2735, %v2734
    %v2755 = vpack.c.b16 %v2737, %v2736
    %v2756 = vpack.c.b16 %v2739, %v2738
    %v2757 = vpack.c.b16 %v2741, %v2740
    %2774 = vmatprep.subr.bf16.mxu0 0
    %2775 = vmatpush1.bf16.msra.mxu0 %v2749
    %2776 = vmatprep.subr.bf16.mxu0 0
    %2777 = vmatpush1.bf16.msra.mxu0 %v2748
    %2778 = vmatprep.subr.bf16.mxu0 0
    %2779 = vmatpush1.bf16.msra.mxu0 %v2747
    %2780 = vmatprep.subr.bf16.mxu0 0
    %2781 = vmatpush1.bf16.msra.mxu0 %v2746
    %2782 = vmatprep.subr.bf16.mxu0 0
    %2783 = vmatpush1.bf16.msra.mxu0 %v2745
    %2784 = vmatprep.subr.bf16.mxu0 0
    %2785 = vmatpush1.bf16.msra.mxu0 %v2744
    %2786 = vmatprep.subr.bf16.mxu0 0
    %2787 = vmatpush1.bf16.msra.mxu0 %v2743
    %2788 = vmatprep.subr.bf16.mxu0 0
    %2789 = vmatpush1.bf16.msra.mxu0 %v2742
    %2790 = vmatprep.subr.bf16.mxu0 0
    %2791 = vmatpush2.bf16.msra.mxu0 %v2757
    %2792 = vmatprep.subr.bf16.mxu0 0
    %2793 = vmatpush2.bf16.msra.mxu0 %v2756
    %2794 = vmatprep.subr.bf16.mxu0 0
    %2795 = vmatpush2.bf16.msra.mxu0 %v2755
    %2796 = vmatprep.subr.bf16.mxu0 0
    %2797 = vmatpush2.bf16.msra.mxu0 %v2754
    %2798 = vmatprep.subr.bf16.mxu0 0
    %2799 = vmatpush2.bf16.msra.mxu0 %v2753
    %2800 = vmatprep.subr.bf16.mxu0 0
    %2801 = vmatpush2.bf16.msra.mxu0 %v2752
    %2802 = vmatprep.subr.bf16.mxu0 0
    %2803 = vmatpush2.bf16.msra.mxu0 %v2751
    %2804 = vmatprep.subr.bf16.mxu0 0
    %2805 = vmatpush2.bf16.msra.mxu0 %v2750
    %2806 = vmatprep.mubr.bf16.mxu0 %v2638
    %2807 = vmatmul.mubr.bf16.gmra.mxu0 %v2637
    %v2808 = vpop.f32.mrf.mxu0
    %v2809 = vadd.f32 %v2676, %v2808
    %v2810 = vpop.f32.mrf.mxu0
    %v2811 = vpop.f32.mrf.mxu0
    %v2812 = vadd.f32 %v2676, %v2811
    %v2813 = vpop.f32.mrf.mxu0
    %2814 = vdwg.mxu0
    %v2815 = vadd.f32 %v2809, %v2812
    %v2816 = vrot.slane %v2815, 4
    %v2817 = vadd.f32 %v2815, %v2816
    %v2818 = vrot.slane %v2817, 2
    %v2819 = vadd.f32 %v2817, %v2818
    %v2820 = vrot.slane %v2819, 1
    %v2821 = vadd.f32 %v2819, %v2820
    %v2822 = vrcp.pop 16.0
    %v2823 = vmul.f32 %v2821, %v2822
    %v2824 = vsub.f32 %v2809, %v2823
    %v2825 = vsub.f32 %v2812, %v2823
    %v2826 = vmul.f32 %v2824, %v2824
    %v2827 = vmul.f32 %v2825, %v2825
    %v2828 = vadd.f32 %v2826, %v2827
    %v2829 = vrot.slane %v2828, 4
    %v2830 = vadd.f32 %v2828, %v2829
    %v2831 = vrot.slane %v2830, 2
    %v2832 = vadd.f32 %v2830, %v2831
    %v2833 = vrot.slane %v2832, 1
    %v2834 = vadd.f32 %v2832, %v2833
    %v2835 = vmul.f32 %v2834, %v2822
    %v2836 = vadd.f32 %v2835, 1e-05
    %v2837 = vrsqrt.pop %v2836
    %v2838 = vmul.f32 %v2824, %v2837
    %v2839 = vmul.f32 %v2825, %v2837
    %v2840 = vld [vmem:[%s11] sm:$0x1]
    %v2842 = vlaneseq
    %v2843 = vshrl.u32 %v2842, 7
    %v2844 = vsub.s32 0, %v2843
    %v2845 = vrot.slane %v2840, %v2844
    %v2847 = vmul.f32 %v2838, %v2845
    %v2848 = vmul.f32 %v2839, %v2845
    %v2849 = vld [vmem:[%s12] sm:$0x1]
    %v2851 = vlaneseq
    %v2852 = vshrl.u32 %v2851, 7
    %v2853 = vsub.s32 0, %v2852
    %v2854 = vrot.slane %v2849, %v2853
    %v2856 = vadd.f32 %v2847, %v2854
    %v2857 = vadd.f32 %v2848, %v2854
    %v2858 = vpack.c.bf16 %v2857, %v2856
    %v2859 = vld [vmem:[%s13] sm:$0xf]
    %v2860 = vld [vmem:[%s13 + $0x4] sm:$0xf]
    %v2861 = vld [vmem:[%s13 + $0x8] sm:$0xf]
    %v2862 = vld [vmem:[%s13 + $0xc] sm:$0xf]
    %v2863 = vld [vmem:[%s13 + $0x10] sm:$0xf]
    %v2864 = vld [vmem:[%s13 + $0x14] sm:$0xf]
    %v2865 = vld [vmem:[%s13 + $0x18] sm:$0xf]
    %v2866 = vld [vmem:[%s13 + $0x1c] sm:$0xf]
    %v2867 = vld [vmem:[%s13 + $0x20] sm:$0xf]
    %v2868 = vld [vmem:[%s13 + $0x24] sm:$0xf]
    %v2869 = vld [vmem:[%s13 + $0x28] sm:$0xf]
    %v2870 = vld [vmem:[%s13 + $0x2c] sm:$0xf]
    %v2871 = vld [vmem:[%s13 + $0x30] sm:$0xf]
    %v2872 = vld [vmem:[%s13 + $0x34] sm:$0xf]
    %v2873 = vld [vmem:[%s13 + $0x38] sm:$0xf]
    %v2874 = vld [vmem:[%s13 + $0x3c] sm:$0xf]
    %v2875 = vld [vmem:[%s14] sm:$0x1]
    %v2877 = vlaneseq
    %v2878 = vshrl.u32 %v2877, 7
    %v2879 = vsub.s32 0, %v2878
    %v2880 = vrot.slane %v2875, %v2879
    %v2898 = vunpack.c.l.b16 %v2859
    %v2899 = vunpack.c.l.b16 %v2860
    %v2900 = vunpack.c.l.b16 %v2861
    %v2901 = vunpack.c.l.b16 %v2862
    %v2902 = vunpack.c.l.b16 %v2863
    %v2903 = vunpack.c.l.b16 %v2864
    %v2904 = vunpack.c.l.b16 %v2865
    %v2905 = vunpack.c.l.b16 %v2866
    %v2906 = vunpack.c.l.b16 %v2867
    %v2907 = vunpack.c.l.b16 %v2868
    %v2908 = vunpack.c.l.b16 %v2869
    %v2909 = vunpack.c.l.b16 %v2870
    %v2910 = vunpack.c.l.b16 %v2871
    %v2911 = vunpack.c.l.b16 %v2872
    %v2912 = vunpack.c.l.b16 %v2873
    %v2913 = vunpack.c.l.b16 %v2874
    %v2914 = vpack.c.b16 %v2899, %v2898
    %v2915 = vpack.c.b16 %v2901, %v2900
    %v2916 = vpack.c.b16 %v2903, %v2902
    %v2917 = vpack.c.b16 %v2905, %v2904
    %v2918 = vpack.c.b16 %v2907, %v2906
    %v2919 = vpack.c.b16 %v2909, %v2908
    %v2920 = vpack.c.b16 %v2911, %v2910
    %v2921 = vpack.c.b16 %v2913, %v2912
    %2930 = vmatprep.subr.bf16.mxu0 0
    %2931 = vmatpush1.bf16.msra.mxu0 %v2921
    %2932 = vmatprep.subr.bf16.mxu0 0
    %2933 = vmatpush1.bf16.msra.mxu0 %v2920
    %2934 = vmatprep.subr.bf16.mxu0 0
    %2935 = vmatpush1.bf16.msra.mxu0 %v2919
    %2936 = vmatprep.subr.bf16.mxu0 0
    %2937 = vmatpush1.bf16.msra.mxu0 %v2918
    %2938 = vmatprep.subr.bf16.mxu0 0
    %2939 = vmatpush1.bf16.msra.mxu0 %v2917
    %2940 = vmatprep.subr.bf16.mxu0 0
    %2941 = vmatpush1.bf16.msra.mxu0 %v2916
    %2942 = vmatprep.subr.bf16.mxu0 0
    %2943 = vmatpush1.bf16.msra.mxu0 %v2915
    %2944 = vmatprep.subr.bf16.mxu0 0
    %2945 = vmatpush1.bf16.msra.mxu0 %v2914
    %2946 = vmatprep.subr.bf16.mxu0 0
    %2947 = vmatpush2.bf16.msra.mxu0 0
    %2948 = vmatprep.subr.bf16.mxu0 0
    %2949 = vmatpush2.bf16.msra.mxu0 0
    %2950 = vmatprep.subr.bf16.mxu0 0
    %2951 = vmatpush2.bf16.msra.mxu0 0
    %2952 = vmatprep.subr.bf16.mxu0 0
    %2953 = vmatpush2.bf16.msra.mxu0 0
    %2954 = vmatprep.subr.bf16.mxu0 0
    %2955 = vmatpush2.bf16.msra.mxu0 0
    %2956 = vmatprep.subr.bf16.mxu0 0
    %2957 = vmatpush2.bf16.msra.mxu0 0
    %2958 = vmatprep.subr.bf16.mxu0 0
    %2959 = vmatpush2.bf16.msra.mxu0 0
    %2960 = vmatprep.subr.bf16.mxu0 0
    %2961 = vmatpush2.bf16.msra.mxu0 0
    %2962 = vmatprep.mubr.bf16.mxu0 0
    %2963 = vmatmul.mubr.bf16.gmra.mxu0 %v2858
    %v2964 = vpop.f32.mrf.mxu0
    %v2965 = vadd.f32 %v2880, %v2964
    %v2966 = vpop.f32.mrf.mxu0
    %v2967 = vpop.f32.mrf.mxu0
    %v2968 = vadd.f32 %v2880, %v2967
    %v2969 = vpop.f32.mrf.mxu0
    %2970 = vdwg.mxu0
    %v2971 = vmax.f32 %v2965, 0.0
    %v2972 = vmax.f32 %v2968, 0.0
    %v2973 = vpack.c.bf16 %v2972, %v2971
    %v2974 = vld [vmem:[#allocation7] sm:$0xf]
    %v2975 = vld [vmem:[#allocation7 + $0x4] sm:$0xf]
    %v2976 = vld [vmem:[#allocation7 + $0x8] sm:$0xf]
    %v2977 = vld [vmem:[#allocation7 + $0xc] sm:$0xf]
    %v2978 = vld [vmem:[#allocation7 + $0x10] sm:$0xf]
    %v2979 = vld [vmem:[#allocation7 + $0x14] sm:$0xf]
    %v2980 = vld [vmem:[#allocation7 + $0x18] sm:$0xf]
    %v2981 = vld [vmem:[#allocation7 + $0x1c] sm:$0xf]
    %v2982 = vld [vmem:[#allocation7 + $0x20] sm:$0xf]
    %v2983 = vld [vmem:[#allocation7 + $0x24] sm:$0xf]
    %v2984 = vld [vmem:[#allocation7 + $0x28] sm:$0xf]
    %v2985 = vld [vmem:[#allocation7 + $0x2c] sm:$0xf]
    %v2986 = vld [vmem:[#allocation7 + $0x30] sm:$0xf]
    %v2987 = vld [vmem:[#allocation7 + $0x34] sm:$0xf]
    %v2988 = vld [vmem:[#allocation7 + $0x38] sm:$0xf]
    %v2989 = vld [vmem:[#allocation7 + $0x3c] sm:$0xf]
    %v2990 = vld [vmem:[#allocation8] sm:$0x1]
    %v2992 = vlaneseq
    %v2993 = vshrl.u32 %v2992, 7
    %v2994 = vsub.s32 0, %v2993
    %v2995 = vrot.slane %v2990, %v2994
    %v3013 = vunpack.c.l.b16 %v2974
    %v3014 = vunpack.c.l.b16 %v2975
    %v3015 = vunpack.c.l.b16 %v2976
    %v3016 = vunpack.c.l.b16 %v2977
    %v3017 = vunpack.c.l.b16 %v2978
    %v3018 = vunpack.c.l.b16 %v2979
    %v3019 = vunpack.c.l.b16 %v2980
    %v3020 = vunpack.c.l.b16 %v2981
    %v3021 = vunpack.c.l.b16 %v2982
    %v3022 = vunpack.c.l.b16 %v2983
    %v3023 = vunpack.c.l.b16 %v2984
    %v3024 = vunpack.c.l.b16 %v2985
    %v3025 = vunpack.c.l.b16 %v2986
    %v3026 = vunpack.c.l.b16 %v2987
    %v3027 = vunpack.c.l.b16 %v2988
    %v3028 = vunpack.c.l.b16 %v2989
    %v3029 = vpack.c.b16 %v3014, %v3013
    %v3030 = vpack.c.b16 %v3016, %v3015
    %v3031 = vpack.c.b16 %v3018, %v3017
    %v3032 = vpack.c.b16 %v3020, %v3019
    %v3033 = vpack.c.b16 %v3022, %v3021
    %v3034 = vpack.c.b16 %v3024, %v3023
    %v3035 = vpack.c.b16 %v3026, %v3025
    %v3036 = vpack.c.b16 %v3028, %v3027
    %3045 = vmatprep.subr.bf16.mxu0 0
    %3046 = vmatpush1.bf16.msra.mxu0 %v3036
    %3047 = vmatprep.subr.bf16.mxu0 0
    %3048 = vmatpush1.bf16.msra.mxu0 %v3035
    %3049 = vmatprep.subr.bf16.mxu0 0
    %3050 = vmatpush1.bf16.msra.mxu0 %v3034
    %3051 = vmatprep.subr.bf16.mxu0 0
    %3052 = vmatpush1.bf16.msra.mxu0 %v3033
    %3053 = vmatprep.subr.bf16.mxu0 0
    %3054 = vmatpush1.bf16.msra.mxu0 %v3032
    %3055 = vmatprep.subr.bf16.mxu0 0
    %3056 = vmatpush1.bf16.msra.mxu0 %v3031
    %3057 = vmatprep.subr.bf16.mxu0 0
    %3058 = vmatpush1.bf16.msra.mxu0 %v3030
    %3059 = vmatprep.subr.bf16.mxu0 0
    %3060 = vmatpush1.bf16.msra.mxu0 %v3029
    %3061 = vmatprep.subr.bf16.mxu0 0
    %3062 = vmatpush2.bf16.msra.mxu0 0
    %3063 = vmatprep.subr.bf16.mxu0 0
    %3064 = vmatpush2.bf16.msra.mxu0 0
    %3065 = vmatprep.subr.bf16.mxu0 0
    %3066 = vmatpush2.bf16.msra.mxu0 0
    %3067 = vmatprep.subr.bf16.mxu0 0
    %3068 = vmatpush2.bf16.msra.mxu0 0
    %3069 = vmatprep.subr.bf16.mxu0 0
    %3070 = vmatpush2.bf16.msra.mxu0 0
    %3071 = vmatprep.subr.bf16.mxu0 0
    %3072 = vmatpush2.bf16.msra.mxu0 0
    %3073 = vmatprep.subr.bf16.mxu0 0
    %3074 = vmatpush2.bf16.msra.mxu0 0
    %3075 = vmatprep.subr.bf16.mxu0 0
    %3076 = vmatpush2.bf16.msra.mxu0 0
    %3077 = vmatprep.mubr.bf16.mxu0 0
    %3078 = vmatmul.mubr.bf16.gmra.mxu0 %v2973
    %v3079 = vpop.f32.mrf.mxu0
    %v3080 = vadd.f32 %v2995, %v3079
    %v3081 = vpop.f32.mrf.mxu0
    %v3082 = vpop.f32.mrf.mxu0
    %v3083 = vadd.f32 %v2995, %v3082
    %v3084 = vpop.f32.mrf.mxu0
    %3085 = vdwg.mxu0
    %3086 = vst [vmem:[#allocation10] sm:$0xff] %v3080
    %3087 = vst [vmem:[#allocation10 + $0x8] sm:$0xff] %v3083
    // Predicated region
    $region86: #{_fused_forward_impl.1} parent=1 // pred_check
      _
    $region87: #{_fused_forward_impl.1} parent=1 // pred_check_branch
      %3089 = sbr.rel (0) target = $region89
    $region88: #{_fused_forward_impl.1} parent=1 // pred_region
      %s3091 = ssub.s32 256, 256
      %3092 = vsyncadd [#allocation4], %s3091
      %s3093 = sshll.u32 [#allocation10], 4
      %s3094 = int_to_ptr.vmem [resolvable:$true] %s3093
      %3099 = dma.vmem_to_hbm [thread:$0]  %s3094, 256, %s17, [#allocation4], 128, 128, 8
    $region89: #{_fused_forward_impl.1} parent=1 // pred_fallthru
      _
    // Predicated region
    $region90: #{_fused_forward_impl.1} parent=1 // pred_check
      _
    $region91: #{_fused_forward_impl.1} parent=1 // pred_check_branch
      %3101 = sbr.rel (0) target = $region93
    $region92: #{_fused_forward_impl.1} parent=1 // pred_region
      %3102 = dma.done [#allocation4], 256
    $region93: #{_fused_forward_impl.1} parent=1 // pred_fallthru
      _
    %3103 = vsyncpa [#allocation3], 1
    %3104 = vsyncpa [#allocation6], 1
    %3105 = vsyncpa [#allocation9], 1
    %3106 = vsyncpa [#allocation4], 1

</llo_original>
